<compile_context>
chip_gen: v5e
topology: v5e:2x2
jax: 0.10.0
libtpu: 0.0.40
codegen_flags: <defaults>
</compile_context>

<pallas_src>
import math

import jax
import jax.numpy as jnp
from jax import lax
from jax.experimental import pallas as pl
from jax.experimental.pallas import tpu as pltpu


# --------------------------- fused forward kernel --------------------------------
def make_fused_kernel(T, B, H, num_layers):
    scale = 1.0 / math.sqrt(H)  # single head -> head_dim == H

    def kernel(*refs):
        idx = 0
        x_ref = refs[idx]; idx += 1
        enc = [refs[idx + 3 * l: idx + 3 * l + 3] for l in range(num_layers)]
        idx += 3 * num_layers
        dec = [refs[idx + 3 * l: idx + 3 * l + 3] for l in range(num_layers)]
        idx += 3 * num_layers
        w_in_r, b_in_r, wo_r, bo_r = refs[idx:idx + 4]; idx += 4
        (w1_r, b1_r, s1_r, t1_r,
         w2_r, b2_r, s2_r, t2_r,
         wout_r, bout_r) = refs[idx:idx + 10]; idx += 10
        out_ref = refs[idx]; idx += 1
        seq_ref = refs[idx]                       # (T, B, H) VMEM scratch (reused)

        # lane mask selecting the "g" gate region [2H, 3H) of the fused (B, 4H) gates
        lane = lax.broadcasted_iota(jnp.int32, (B, 4 * H), 1)
        g_mask = (lane >= 2 * H) & (lane < 3 * H)

        def lstm_layer(seq_val, wih_r, whh_r, b_r, h0, c0, write_ref):
            # Hoisted input projection: one big matmul covering all timesteps.
            gx = (jnp.einsum('tbd,dg->tbg', seq_val, wih_r[...],
                             preferred_element_type=jnp.float32) + b_r[...])
            whh = whh_r[...]                      # hoisted weight load
            h, c = h0, c0
            for t in range(T):                    # fully unrolled recurrence (T static)
                g = gx[t] + jnp.dot(h, whh, preferred_element_type=jnp.float32)
                # PyTorch gate order i, f, g, o: sigmoid everywhere except tanh on g.
                act = jnp.where(g_mask, jnp.tanh(g), jax.nn.sigmoid(g))
                i_g = act[:, 0 * H:1 * H]
                f_g = act[:, 1 * H:2 * H]
                g_g = act[:, 2 * H:3 * H]
                o_g = act[:, 3 * H:4 * H]
                c = f_g * c + i_g * g_g
                h = o_g * jnp.tanh(c)
                if write_ref is not None:
                    write_ref[t] = h
            return h, c

        zeros = jnp.zeros((B, H), jnp.float32)

        # ---- encoder LSTM stack (zero initial state), time-major --------------------
        seq_val = x_ref[...]                      # (T, B, Din)
        hns, cns = [], []
        for l in range(num_layers):
            wih_r, whh_r, b_r = enc[l]
            hn, cn = lstm_layer(seq_val, wih_r, whh_r, b_r, zeros, zeros, seq_ref)
            hns.append(hn)
            cns.append(cn)
            seq_val = seq_ref[...]                # this layer's full output sequence

        # ---- 1-head self-attention over time (torch: permute -> MHA -> permute) -----
        E = H
        # fused Q/K/V projection: single (T,B,E) x (E,3E) matmul
        qkv = (jnp.einsum('tbe,ef->tbf', seq_val, w_in_r[...],
                          preferred_element_type=jnp.float32) + b_in_r[...])
        wo = wo_r[...]
        bo = bo_r[...]
        for b in range(B):                        # B is tiny & static -> unrolled
            qb = qkv[:, b, 0 * E:1 * E]           # (T, E)
            kb = qkv[:, b, 1 * E:2 * E]
            vb = qkv[:, b, 2 * E:3 * E]
            s = lax.dot_general(qb, kb, (((1,), (1,)), ((), ())),
                                preferred_element_type=jnp.float32) * scale   # (T, T)
            s = s - jnp.max(s, axis=-1, keepdims=True)
            p = jnp.exp(s)
            p = p * pl.reciprocal(jnp.sum(p, axis=-1, keepdims=True), approx=True)
            ctx = jnp.dot(p, vb, preferred_element_type=jnp.float32)          # (T, E)
            ob = jnp.dot(ctx, wo, preferred_element_type=jnp.float32) + bo    # (T, E)
            seq_ref[:, b:b + 1, :] = ob[:, None, :]

        # ---- decoder LSTM stack, initial state = encoder final (hn, cn) per layer ---
        seq_val = seq_ref[...]                    # (T, B, H) attention output
        h_fin = zeros
        for l in range(num_layers):
            wih_r, whh_r, b_r = dec[l]
            last = (l == num_layers - 1)
            h_fin, _ = lstm_layer(seq_val, wih_r, whh_r, b_r, hns[l], cns[l],
                                  None if last else seq_ref)
            if not last:
                seq_val = seq_ref[...]

        # ---- fc1 -> dropout(eval) -> bn1 -> relu -> fc2 -> dropout -> bn2 -> relu ---
        # ---- -> fc_out ; BN folded to scale/shift (eval running stats) --------------
        h = jnp.dot(h_fin, w1_r[...], preferred_element_type=jnp.float32) + b1_r[...]
        h = h * s1_r[...] + t1_r[...]
        h = jnp.maximum(h, 0.0)
        h = jnp.dot(h, w2_r[...], preferred_element_type=jnp.float32) + b2_r[...]
        h = h * s2_r[...] + t2_r[...]
        h = jnp.maximum(h, 0.0)
        out_ref[...] = (jnp.dot(h, wout_r[...], preferred_element_type=jnp.float32)
                        + bout_r[...])

    return kernel


def deep_lstm_forward(x, params, hidden_size, num_layers):
    """x: (B, T, input_size) float32 -> (B, output_size) float32."""
    B, T, _ = x.shape
    H = hidden_size
    O = params['head']['w_out_t'].shape[1]

    x_tm = jnp.transpose(x, (1, 0, 2))            # (T, B, Din), time-major

    args = [x_tm]
    for l in range(num_layers):
        p = params['enc'][l]
        args += [p['wih_t'], p['whh_t'], p['b']]
    for l in range(num_layers):
        p = params['dec'][l]
        args += [p['wih_t'], p['whh_t'], p['b']]
    a = params['attn']
    args += [a['w_in_t'], a['b_in'], a['wo_t'], a['bo']]
    hd = params['head']
    args += [hd['w1_t'], hd['b1'], hd['bn1_scale'], hd['bn1_shift'],
             hd['w2_t'], hd['b2'], hd['bn2_scale'], hd['bn2_shift'],
             hd['w_out_t'], hd['b_out']]

    kernel = make_fused_kernel(T, B, H, num_layers)
    vmem = pl.BlockSpec(memory_space=pltpu.MemorySpace.VMEM)
    return pl.pallas_call(
        kernel,
        out_shape=jax.ShapeDtypeStruct((B, O), jnp.float32),
        in_specs=[vmem] * len(args),
        out_specs=pl.BlockSpec(memory_space=pltpu.MemorySpace.VMEM),
        scratch_shapes=[pltpu.VMEM((T, B, H), jnp.float32)],
    )(*args)


# --------------------------- parameter init / prep -------------------------------
def _uniform(key, shape, k):
    return jax.random.uniform(key, shape, jnp.float32, minval=-k, maxval=k)


def init_params(key, input_size, hidden_size, output_size, num_layers):
    """Raw parameters in PyTorch layout."""
    H = hidden_size
    ki = iter(jax.random.split(key, 64))
    k_lstm = 1.0 / math.sqrt(H)

    def lstm_params(din):
        return dict(
            w_ih=_uniform(next(ki), (4 * H, din), k_lstm),
            w_hh=_uniform(next(ki), (4 * H, H), k_lstm),
            b_ih=_uniform(next(ki), (4 * H,), k_lstm),
            b_hh=_uniform(next(ki), (4 * H,), k_lstm),
        )

    enc = [lstm_params(input_size if l == 0 else H) for l in range(num_layers)]
    dec = [lstm_params(H) for _ in range(num_layers)]

    attn = dict(
        in_proj_weight=_uniform(next(ki), (3 * H, H), math.sqrt(6.0 / (4 * H))),
        in_proj_bias=jnp.zeros((3 * H,), jnp.float32),
        out_proj_weight=_uniform(next(ki), (H, H), 1.0 / math.sqrt(H)),
        out_proj_bias=jnp.zeros((H,), jnp.float32),
    )

    k_lin = 1.0 / math.sqrt(H)
    head_p = dict(
        w1=_uniform(next(ki), (H, H), k_lin), b1=_uniform(next(ki), (H,), k_lin),
        bn1_gamma=jnp.ones((H,), jnp.float32), bn1_beta=jnp.zeros((H,), jnp.float32),
        bn1_mean=jnp.zeros((H,), jnp.float32), bn1_var=jnp.ones((H,), jnp.float32),
        w2=_uniform(next(ki), (H, H), k_lin), b2=_uniform(next(ki), (H,), k_lin),
        bn2_gamma=jnp.ones((H,), jnp.float32), bn2_beta=jnp.zeros((H,), jnp.float32),
        bn2_mean=jnp.zeros((H,), jnp.float32), bn2_var=jnp.ones((H,), jnp.float32),
        w_out=_uniform(next(ki), (output_size, H), k_lin),
        b_out=_uniform(next(ki), (output_size,), k_lin),
    )
    return dict(enc=enc, dec=dec, attn=attn, head=head_p)


def prepare_params(raw, eps=1e-5):
    """One-time prep: transpose weights, fuse b_ih+b_hh, fold eval-mode BatchNorm."""
    def prep_lstm(p):
        return dict(wih_t=jnp.transpose(p['w_ih']),          # (Din, 4H)
                    whh_t=jnp.transpose(p['w_hh']),           # (H, 4H)
                    b=(p['b_ih'] + p['b_hh']).reshape(1, -1)) # (1, 4H)

    def bn_fold(gamma, beta, mean, var):
        scl = gamma * lax.rsqrt(var + eps)
        return scl.reshape(1, -1), (beta - mean * scl).reshape(1, -1)

    a = raw['attn']
    E = a['out_proj_weight'].shape[0]
    hd = raw['head']
    s1, t1 = bn_fold(hd['bn1_gamma'], hd['bn1_beta'], hd['bn1_mean'], hd['bn1_var'])
    s2, t2 = bn_fold(hd['bn2_gamma'], hd['bn2_beta'], hd['bn2_mean'], hd['bn2_var'])

    return dict(
        enc=[prep_lstm(p) for p in raw['enc']],
        dec=[prep_lstm(p) for p in raw['dec']],
        attn=dict(w_in_t=jnp.transpose(a['in_proj_weight']),   # (E, 3E): [q|k|v]
                  b_in=a['in_proj_bias'].reshape(1, 3 * E),
                  wo_t=jnp.transpose(a['out_proj_weight']),
                  bo=a['out_proj_bias'].reshape(1, E)),
        head=dict(w1_t=jnp.transpose(hd['w1']), b1=hd['b1'].reshape(1, -1),
                  bn1_scale=s1, bn1_shift=t1,
                  w2_t=jnp.transpose(hd['w2']), b2=hd['b2'].reshape(1, -1),
                  bn2_scale=s2, bn2_shift=t2,
                  w_out_t=jnp.transpose(hd['w_out']),
                  b_out=hd['b_out'].reshape(1, -1)),
    )


if __name__ == "__main__":
    input_size, hidden_size, output_size, num_layers = 16, 32, 8, 2
    B, T = 2, 8

    key = jax.random.PRNGKey(0)
    k_x, k_p = jax.random.split(key)
    x = jax.random.normal(k_x, (B, T, input_size), jnp.float32)
    raw = init_params(k_p, input_size, hidden_size, output_size, num_layers)
    params = prepare_params(raw)   # one-time weight prep, not on the per-call path

    fwd = jax.jit(lambda xx, pp: deep_lstm_forward(xx, pp, hidden_size, num_layers))
    out = jax.block_until_ready(fwd(x, params))

    assert out.shape == (B, output_size), out.shape
    assert bool(jnp.all(jnp.isfinite(out)))
    print("KERNEL_OK")
</pallas_src>

<mosaic_0001>
module attributes {stable_mosaic.version = 11 : i64} {
  func.func @kernel(%arg0: memref<8x2x16xf32, #tpu.memory_space<vmem>>, %arg1: memref<16x128xf32, #tpu.memory_space<vmem>>, %arg2: memref<32x128xf32, #tpu.memory_space<vmem>>, %arg3: memref<1x128xf32, #tpu.memory_space<vmem>>, %arg4: memref<32x128xf32, #tpu.memory_space<vmem>>, %arg5: memref<32x128xf32, #tpu.memory_space<vmem>>, %arg6: memref<1x128xf32, #tpu.memory_space<vmem>>, %arg7: memref<32x128xf32, #tpu.memory_space<vmem>>, %arg8: memref<32x128xf32, #tpu.memory_space<vmem>>, %arg9: memref<1x128xf32, #tpu.memory_space<vmem>>, %arg10: memref<32x128xf32, #tpu.memory_space<vmem>>, %arg11: memref<32x128xf32, #tpu.memory_space<vmem>>, %arg12: memref<1x128xf32, #tpu.memory_space<vmem>>, %arg13: memref<32x96xf32, #tpu.memory_space<vmem>>, %arg14: memref<1x96xf32, #tpu.memory_space<vmem>>, %arg15: memref<32x32xf32, #tpu.memory_space<vmem>>, %arg16: memref<1x32xf32, #tpu.memory_space<vmem>>, %arg17: memref<32x32xf32, #tpu.memory_space<vmem>>, %arg18: memref<1x32xf32, #tpu.memory_space<vmem>>, %arg19: memref<1x32xf32, #tpu.memory_space<vmem>>, %arg20: memref<1x32xf32, #tpu.memory_space<vmem>>, %arg21: memref<32x32xf32, #tpu.memory_space<vmem>>, %arg22: memref<1x32xf32, #tpu.memory_space<vmem>>, %arg23: memref<1x32xf32, #tpu.memory_space<vmem>>, %arg24: memref<1x32xf32, #tpu.memory_space<vmem>>, %arg25: memref<32x8xf32, #tpu.memory_space<vmem>>, %arg26: memref<1x8xf32, #tpu.memory_space<vmem>>, %arg27: memref<2x8xf32, #tpu.memory_space<vmem>>, %arg28: memref<8x2x32xf32, #tpu.memory_space<vmem>>) attributes {dimension_semantics = [], scalar_prefetch = 0 : i64, scratch_operands = 1 : i64, tpu.core_type = #tpu.core_type<tc>} {
    %0 = tpu.iota {dimensions = array<i32: 1>} : vector<2x128xi32>
    %c64_i32 = arith.constant 64 : i32
    %1 = vector.broadcast %c64_i32 : i32 to vector<2x128xi32>
    %2 = arith.cmpi sge, %0, %1 : vector<2x128xi32>
    %c96_i32 = arith.constant 96 : i32
    %3 = vector.broadcast %c96_i32 : i32 to vector<2x128xi32>
    %4 = arith.cmpi slt, %0, %3 : vector<2x128xi32>
    %5 = arith.andi %2, %4 : vector<2x128xi1>
    %cst = arith.constant 0.000000e+00 : f32
    %6 = vector.broadcast %cst : f32 to vector<2x32xf32>
    %c0 = arith.constant 0 : index
    %c0_0 = arith.constant 0 : index
    %c0_1 = arith.constant 0 : index
    %7 = vector.load %arg0[%c0, %c0_0, %c0_1] : memref<8x2x16xf32, #tpu.memory_space<vmem>>, vector<8x2x16xf32>
    %c0_2 = arith.constant 0 : index
    %c0_3 = arith.constant 0 : index
    %8 = vector.load %arg1[%c0_2, %c0_3] : memref<16x128xf32, #tpu.memory_space<vmem>>, vector<16x128xf32>
    "tpu.trace_start"() <{level = 10 : i32, message = "tbd,dg->tbg"}> : () -> ()
    %cst_4 = arith.constant dense<0.000000e+00> : vector<8x2x128xf32>
    %9 = tpu.matmul %7, %8, %cst_4 {dimension_numbers = #tpu.dot_dimension_numbers<[2], [0], [0, 1], [1], [0, 0, 0, 1, 1, 1], [], []>} : vector<8x2x16xf32>, vector<16x128xf32>, vector<8x2x128xf32> -> vector<8x2x128xf32>
    "tpu.trace_stop"() : () -> ()
    %c0_5 = arith.constant 0 : index
    %c0_6 = arith.constant 0 : index
    %10 = vector.load %arg3[%c0_5, %c0_6] : memref<1x128xf32, #tpu.memory_space<vmem>>, vector<1x128xf32>
    %11 = vector.shape_cast %10 : vector<1x128xf32> to vector<1x1x128xf32>
    %12 = vector.broadcast %11 : vector<1x1x128xf32> to vector<8x2x128xf32>
    %13 = arith.addf %9, %12 : vector<8x2x128xf32>
    %c0_7 = arith.constant 0 : index
    %c0_8 = arith.constant 0 : index
    %14 = vector.load %arg2[%c0_7, %c0_8] : memref<32x128xf32, #tpu.memory_space<vmem>>, vector<32x128xf32>
    %15 = vector.extract_strided_slice %13 {offsets = [0, 0, 0], sizes = [1, 2, 128], strides = [1, 1, 1]} : vector<8x2x128xf32> to vector<1x2x128xf32>
    %16 = vector.shape_cast %15 : vector<1x2x128xf32> to vector<2x128xf32>
    %cst_9 = arith.constant dense<0.000000e+00> : vector<2x128xf32>
    %17 = tpu.matmul %6, %14, %cst_9 {dimension_numbers = #tpu.dot_dimension_numbers<[1], [0], [0], [1], [0, 0, 1, 1], [], []>} : vector<2x32xf32>, vector<32x128xf32>, vector<2x128xf32> -> vector<2x128xf32>
    %18 = arith.addf %16, %17 : vector<2x128xf32>
    %19 = math.tanh %18 : vector<2x128xf32>
    %20 = arith.negf %18 : vector<2x128xf32>
    %21 = math.exp %20 : vector<2x128xf32>
    %cst_10 = arith.constant 1.000000e+00 : f32
    %22 = vector.broadcast %cst_10 : f32 to vector<2x128xf32>
    %23 = arith.addf %22, %21 : vector<2x128xf32>
    %24 = arith.divf %22, %23 : vector<2x128xf32>
    %25 = arith.select %5, %19, %24 : vector<2x128xi1>, vector<2x128xf32>
    %26 = vector.extract_strided_slice %25 {offsets = [0, 0], sizes = [2, 32], strides = [1, 1]} : vector<2x128xf32> to vector<2x32xf32>
    %27 = vector.extract_strided_slice %25 {offsets = [0, 32], sizes = [2, 32], strides = [1, 1]} : vector<2x128xf32> to vector<2x32xf32>
    %28 = vector.extract_strided_slice %25 {offsets = [0, 64], sizes = [2, 32], strides = [1, 1]} : vector<2x128xf32> to vector<2x32xf32>
    %29 = vector.extract_strided_slice %25 {offsets = [0, 96], sizes = [2, 32], strides = [1, 1]} : vector<2x128xf32> to vector<2x32xf32>
    %30 = arith.mulf %27, %6 : vector<2x32xf32>
    %31 = arith.mulf %26, %28 : vector<2x32xf32>
    %32 = arith.addf %30, %31 : vector<2x32xf32>
    %33 = math.tanh %32 : vector<2x32xf32>
    %34 = arith.mulf %29, %33 : vector<2x32xf32>
    %c0_11 = arith.constant 0 : index
    %c0_12 = arith.constant 0 : index
    %c0_13 = arith.constant 0 : index
    %35 = vector.load %arg28[%c0_11, %c0_12, %c0_13] : memref<8x2x32xf32, #tpu.memory_space<vmem>>, vector<1x2x32xf32>
    %36 = vector.shape_cast %35 : vector<1x2x32xf32> to vector<2x32xf32>
    %37 = vector.shape_cast %34 : vector<2x32xf32> to vector<1x2x32xf32>
    tpu.vector_store %arg28[%c0_11, %c0_12, %c0_13], %37 {strides = array<i32>} : memref<8x2x32xf32, #tpu.memory_space<vmem>>, vector<1x2x32xf32>,
    %38 = vector.extract_strided_slice %13 {offsets = [1, 0, 0], sizes = [1, 2, 128], strides = [1, 1, 1]} : vector<8x2x128xf32> to vector<1x2x128xf32>
    %39 = vector.shape_cast %38 : vector<1x2x128xf32> to vector<2x128xf32>
    %cst_14 = arith.constant dense<0.000000e+00> : vector<2x128xf32>
    %40 = tpu.matmul %34, %14, %cst_14 {dimension_numbers = #tpu.dot_dimension_numbers<[1], [0], [0], [1], [0, 0, 1, 1], [], []>} : vector<2x32xf32>, vector<32x128xf32>, vector<2x128xf32> -> vector<2x128xf32>
    %41 = arith.addf %39, %40 : vector<2x128xf32>
    %42 = math.tanh %41 : vector<2x128xf32>
    %43 = arith.negf %41 : vector<2x128xf32>
    %44 = math.exp %43 : vector<2x128xf32>
    %cst_15 = arith.constant 1.000000e+00 : f32
    %45 = vector.broadcast %cst_15 : f32 to vector<2x128xf32>
    %46 = arith.addf %45, %44 : vector<2x128xf32>
    %47 = arith.divf %45, %46 : vector<2x128xf32>
    %48 = arith.select %5, %42, %47 : vector<2x128xi1>, vector<2x128xf32>
    %49 = vector.extract_strided_slice %48 {offsets = [0, 0], sizes = [2, 32], strides = [1, 1]} : vector<2x128xf32> to vector<2x32xf32>
    %50 = vector.extract_strided_slice %48 {offsets = [0, 32], sizes = [2, 32], strides = [1, 1]} : vector<2x128xf32> to vector<2x32xf32>
    %51 = vector.extract_strided_slice %48 {offsets = [0, 64], sizes = [2, 32], strides = [1, 1]} : vector<2x128xf32> to vector<2x32xf32>
    %52 = vector.extract_strided_slice %48 {offsets = [0, 96], sizes = [2, 32], strides = [1, 1]} : vector<2x128xf32> to vector<2x32xf32>
    %53 = arith.mulf %50, %32 : vector<2x32xf32>
    %54 = arith.mulf %49, %51 : vector<2x32xf32>
    %55 = arith.addf %53, %54 : vector<2x32xf32>
    %56 = math.tanh %55 : vector<2x32xf32>
    %57 = arith.mulf %52, %56 : vector<2x32xf32>
    %c1 = arith.constant 1 : index
    %c0_16 = arith.constant 0 : index
    %c0_17 = arith.constant 0 : index
    %58 = vector.load %arg28[%c1, %c0_16, %c0_17] : memref<8x2x32xf32, #tpu.memory_space<vmem>>, vector<1x2x32xf32>
    %59 = vector.shape_cast %58 : vector<1x2x32xf32> to vector<2x32xf32>
    %60 = vector.shape_cast %57 : vector<2x32xf32> to vector<1x2x32xf32>
    tpu.vector_store %arg28[%c1, %c0_16, %c0_17], %60 {strides = array<i32>} : memref<8x2x32xf32, #tpu.memory_space<vmem>>, vector<1x2x32xf32>,
    %61 = vector.extract_strided_slice %13 {offsets = [2, 0, 0], sizes = [1, 2, 128], strides = [1, 1, 1]} : vector<8x2x128xf32> to vector<1x2x128xf32>
    %62 = vector.shape_cast %61 : vector<1x2x128xf32> to vector<2x128xf32>
    %cst_18 = arith.constant dense<0.000000e+00> : vector<2x128xf32>
    %63 = tpu.matmul %57, %14, %cst_18 {dimension_numbers = #tpu.dot_dimension_numbers<[1], [0], [0], [1], [0, 0, 1, 1], [], []>} : vector<2x32xf32>, vector<32x128xf32>, vector<2x128xf32> -> vector<2x128xf32>
    %64 = arith.addf %62, %63 : vector<2x128xf32>
    %65 = math.tanh %64 : vector<2x128xf32>
    %66 = arith.negf %64 : vector<2x128xf32>
    %67 = math.exp %66 : vector<2x128xf32>
    %cst_19 = arith.constant 1.000000e+00 : f32
    %68 = vector.broadcast %cst_19 : f32 to vector<2x128xf32>
    %69 = arith.addf %68, %67 : vector<2x128xf32>
    %70 = arith.divf %68, %69 : vector<2x128xf32>
    %71 = arith.select %5, %65, %70 : vector<2x128xi1>, vector<2x128xf32>
    %72 = vector.extract_strided_slice %71 {offsets = [0, 0], sizes = [2, 32], strides = [1, 1]} : vector<2x128xf32> to vector<2x32xf32>
    %73 = vector.extract_strided_slice %71 {offsets = [0, 32], sizes = [2, 32], strides = [1, 1]} : vector<2x128xf32> to vector<2x32xf32>
    %74 = vector.extract_strided_slice %71 {offsets = [0, 64], sizes = [2, 32], strides = [1, 1]} : vector<2x128xf32> to vector<2x32xf32>
    %75 = vector.extract_strided_slice %71 {offsets = [0, 96], sizes = [2, 32], strides = [1, 1]} : vector<2x128xf32> to vector<2x32xf32>
    %76 = arith.mulf %73, %55 : vector<2x32xf32>
    %77 = arith.mulf %72, %74 : vector<2x32xf32>
    %78 = arith.addf %76, %77 : vector<2x32xf32>
    %79 = math.tanh %78 : vector<2x32xf32>
    %80 = arith.mulf %75, %79 : vector<2x32xf32>
    %c2 = arith.constant 2 : index
    %c0_20 = arith.constant 0 : index
    %c0_21 = arith.constant 0 : index
    %81 = vector.load %arg28[%c2, %c0_20, %c0_21] : memref<8x2x32xf32, #tpu.memory_space<vmem>>, vector<1x2x32xf32>
    %82 = vector.shape_cast %81 : vector<1x2x32xf32> to vector<2x32xf32>
    %83 = vector.shape_cast %80 : vector<2x32xf32> to vector<1x2x32xf32>
    tpu.vector_store %arg28[%c2, %c0_20, %c0_21], %83 {strides = array<i32>} : memref<8x2x32xf32, #tpu.memory_space<vmem>>, vector<1x2x32xf32>,
    %84 = vector.extract_strided_slice %13 {offsets = [3, 0, 0], sizes = [1, 2, 128], strides = [1, 1, 1]} : vector<8x2x128xf32> to vector<1x2x128xf32>
    %85 = vector.shape_cast %84 : vector<1x2x128xf32> to vector<2x128xf32>
    %cst_22 = arith.constant dense<0.000000e+00> : vector<2x128xf32>
    %86 = tpu.matmul %80, %14, %cst_22 {dimension_numbers = #tpu.dot_dimension_numbers<[1], [0], [0], [1], [0, 0, 1, 1], [], []>} : vector<2x32xf32>, vector<32x128xf32>, vector<2x128xf32> -> vector<2x128xf32>
    %87 = arith.addf %85, %86 : vector<2x128xf32>
    %88 = math.tanh %87 : vector<2x128xf32>
    %89 = arith.negf %87 : vector<2x128xf32>
    %90 = math.exp %89 : vector<2x128xf32>
    %cst_23 = arith.constant 1.000000e+00 : f32
    %91 = vector.broadcast %cst_23 : f32 to vector<2x128xf32>
    %92 = arith.addf %91, %90 : vector<2x128xf32>
    %93 = arith.divf %91, %92 : vector<2x128xf32>
    %94 = arith.select %5, %88, %93 : vector<2x128xi1>, vector<2x128xf32>
    %95 = vector.extract_strided_slice %94 {offsets = [0, 0], sizes = [2, 32], strides = [1, 1]} : vector<2x128xf32> to vector<2x32xf32>
    %96 = vector.extract_strided_slice %94 {offsets = [0, 32], sizes = [2, 32], strides = [1, 1]} : vector<2x128xf32> to vector<2x32xf32>
    %97 = vector.extract_strided_slice %94 {offsets = [0, 64], sizes = [2, 32], strides = [1, 1]} : vector<2x128xf32> to vector<2x32xf32>
    %98 = vector.extract_strided_slice %94 {offsets = [0, 96], sizes = [2, 32], strides = [1, 1]} : vector<2x128xf32> to vector<2x32xf32>
    %99 = arith.mulf %96, %78 : vector<2x32xf32>
    %100 = arith.mulf %95, %97 : vector<2x32xf32>
    %101 = arith.addf %99, %100 : vector<2x32xf32>
    %102 = math.tanh %101 : vector<2x32xf32>
    %103 = arith.mulf %98, %102 : vector<2x32xf32>
    %c3 = arith.constant 3 : index
    %c0_24 = arith.constant 0 : index
    %c0_25 = arith.constant 0 : index
    %104 = vector.load %arg28[%c3, %c0_24, %c0_25] : memref<8x2x32xf32, #tpu.memory_space<vmem>>, vector<1x2x32xf32>
    %105 = vector.shape_cast %104 : vector<1x2x32xf32> to vector<2x32xf32>
    %106 = vector.shape_cast %103 : vector<2x32xf32> to vector<1x2x32xf32>
    tpu.vector_store %arg28[%c3, %c0_24, %c0_25], %106 {strides = array<i32>} : memref<8x2x32xf32, #tpu.memory_space<vmem>>, vector<1x2x32xf32>,
    %107 = vector.extract_strided_slice %13 {offsets = [4, 0, 0], sizes = [1, 2, 128], strides = [1, 1, 1]} : vector<8x2x128xf32> to vector<1x2x128xf32>
    %108 = vector.shape_cast %107 : vector<1x2x128xf32> to vector<2x128xf32>
    %cst_26 = arith.constant dense<0.000000e+00> : vector<2x128xf32>
    %109 = tpu.matmul %103, %14, %cst_26 {dimension_numbers = #tpu.dot_dimension_numbers<[1], [0], [0], [1], [0, 0, 1, 1], [], []>} : vector<2x32xf32>, vector<32x128xf32>, vector<2x128xf32> -> vector<2x128xf32>
    %110 = arith.addf %108, %109 : vector<2x128xf32>
    %111 = math.tanh %110 : vector<2x128xf32>
    %112 = arith.negf %110 : vector<2x128xf32>
    %113 = math.exp %112 : vector<2x128xf32>
    %cst_27 = arith.constant 1.000000e+00 : f32
    %114 = vector.broadcast %cst_27 : f32 to vector<2x128xf32>
    %115 = arith.addf %114, %113 : vector<2x128xf32>
    %116 = arith.divf %114, %115 : vector<2x128xf32>
    %117 = arith.select %5, %111, %116 : vector<2x128xi1>, vector<2x128xf32>
    %118 = vector.extract_strided_slice %117 {offsets = [0, 0], sizes = [2, 32], strides = [1, 1]} : vector<2x128xf32> to vector<2x32xf32>
    %119 = vector.extract_strided_slice %117 {offsets = [0, 32], sizes = [2, 32], strides = [1, 1]} : vector<2x128xf32> to vector<2x32xf32>
    %120 = vector.extract_strided_slice %117 {offsets = [0, 64], sizes = [2, 32], strides = [1, 1]} : vector<2x128xf32> to vector<2x32xf32>
    %121 = vector.extract_strided_slice %117 {offsets = [0, 96], sizes = [2, 32], strides = [1, 1]} : vector<2x128xf32> to vector<2x32xf32>
    %122 = arith.mulf %119, %101 : vector<2x32xf32>
    %123 = arith.mulf %118, %120 : vector<2x32xf32>
    %124 = arith.addf %122, %123 : vector<2x32xf32>
    %125 = math.tanh %124 : vector<2x32xf32>
    %126 = arith.mulf %121, %125 : vector<2x32xf32>
    %c4 = arith.constant 4 : index
    %c0_28 = arith.constant 0 : index
    %c0_29 = arith.constant 0 : index
    %127 = vector.load %arg28[%c4, %c0_28, %c0_29] : memref<8x2x32xf32, #tpu.memory_space<vmem>>, vector<1x2x32xf32>
    %128 = vector.shape_cast %127 : vector<1x2x32xf32> to vector<2x32xf32>
    %129 = vector.shape_cast %126 : vector<2x32xf32> to vector<1x2x32xf32>
    tpu.vector_store %arg28[%c4, %c0_28, %c0_29], %129 {strides = array<i32>} : memref<8x2x32xf32, #tpu.memory_space<vmem>>, vector<1x2x32xf32>,
    %130 = vector.extract_strided_slice %13 {offsets = [5, 0, 0], sizes = [1, 2, 128], strides = [1, 1, 1]} : vector<8x2x128xf32> to vector<1x2x128xf32>
    %131 = vector.shape_cast %130 : vector<1x2x128xf32> to vector<2x128xf32>
    %cst_30 = arith.constant dense<0.000000e+00> : vector<2x128xf32>
    %132 = tpu.matmul %126, %14, %cst_30 {dimension_numbers = #tpu.dot_dimension_numbers<[1], [0], [0], [1], [0, 0, 1, 1], [], []>} : vector<2x32xf32>, vector<32x128xf32>, vector<2x128xf32> -> vector<2x128xf32>
    %133 = arith.addf %131, %132 : vector<2x128xf32>
    %134 = math.tanh %133 : vector<2x128xf32>
    %135 = arith.negf %133 : vector<2x128xf32>
    %136 = math.exp %135 : vector<2x128xf32>
    %cst_31 = arith.constant 1.000000e+00 : f32
    %137 = vector.broadcast %cst_31 : f32 to vector<2x128xf32>
    %138 = arith.addf %137, %136 : vector<2x128xf32>
    %139 = arith.divf %137, %138 : vector<2x128xf32>
    %140 = arith.select %5, %134, %139 : vector<2x128xi1>, vector<2x128xf32>
    %141 = vector.extract_strided_slice %140 {offsets = [0, 0], sizes = [2, 32], strides = [1, 1]} : vector<2x128xf32> to vector<2x32xf32>
    %142 = vector.extract_strided_slice %140 {offsets = [0, 32], sizes = [2, 32], strides = [1, 1]} : vector<2x128xf32> to vector<2x32xf32>
    %143 = vector.extract_strided_slice %140 {offsets = [0, 64], sizes = [2, 32], strides = [1, 1]} : vector<2x128xf32> to vector<2x32xf32>
    %144 = vector.extract_strided_slice %140 {offsets = [0, 96], sizes = [2, 32], strides = [1, 1]} : vector<2x128xf32> to vector<2x32xf32>
    %145 = arith.mulf %142, %124 : vector<2x32xf32>
    %146 = arith.mulf %141, %143 : vector<2x32xf32>
    %147 = arith.addf %145, %146 : vector<2x32xf32>
    %148 = math.tanh %147 : vector<2x32xf32>
    %149 = arith.mulf %144, %148 : vector<2x32xf32>
    %c5 = arith.constant 5 : index
    %c0_32 = arith.constant 0 : index
    %c0_33 = arith.constant 0 : index
    %150 = vector.load %arg28[%c5, %c0_32, %c0_33] : memref<8x2x32xf32, #tpu.memory_space<vmem>>, vector<1x2x32xf32>
    %151 = vector.shape_cast %150 : vector<1x2x32xf32> to vector<2x32xf32>
    %152 = vector.shape_cast %149 : vector<2x32xf32> to vector<1x2x32xf32>
    tpu.vector_store %arg28[%c5, %c0_32, %c0_33], %152 {strides = array<i32>} : memref<8x2x32xf32, #tpu.memory_space<vmem>>, vector<1x2x32xf32>,
    %153 = vector.extract_strided_slice %13 {offsets = [6, 0, 0], sizes = [1, 2, 128], strides = [1, 1, 1]} : vector<8x2x128xf32> to vector<1x2x128xf32>
    %154 = vector.shape_cast %153 : vector<1x2x128xf32> to vector<2x128xf32>
    %cst_34 = arith.constant dense<0.000000e+00> : vector<2x128xf32>
    %155 = tpu.matmul %149, %14, %cst_34 {dimension_numbers = #tpu.dot_dimension_numbers<[1], [0], [0], [1], [0, 0, 1, 1], [], []>} : vector<2x32xf32>, vector<32x128xf32>, vector<2x128xf32> -> vector<2x128xf32>
    %156 = arith.addf %154, %155 : vector<2x128xf32>
    %157 = math.tanh %156 : vector<2x128xf32>
    %158 = arith.negf %156 : vector<2x128xf32>
    %159 = math.exp %158 : vector<2x128xf32>
    %cst_35 = arith.constant 1.000000e+00 : f32
    %160 = vector.broadcast %cst_35 : f32 to vector<2x128xf32>
    %161 = arith.addf %160, %159 : vector<2x128xf32>
    %162 = arith.divf %160, %161 : vector<2x128xf32>
    %163 = arith.select %5, %157, %162 : vector<2x128xi1>, vector<2x128xf32>
    %164 = vector.extract_strided_slice %163 {offsets = [0, 0], sizes = [2, 32], strides = [1, 1]} : vector<2x128xf32> to vector<2x32xf32>
    %165 = vector.extract_strided_slice %163 {offsets = [0, 32], sizes = [2, 32], strides = [1, 1]} : vector<2x128xf32> to vector<2x32xf32>
    %166 = vector.extract_strided_slice %163 {offsets = [0, 64], sizes = [2, 32], strides = [1, 1]} : vector<2x128xf32> to vector<2x32xf32>
    %167 = vector.extract_strided_slice %163 {offsets = [0, 96], sizes = [2, 32], strides = [1, 1]} : vector<2x128xf32> to vector<2x32xf32>
    %168 = arith.mulf %165, %147 : vector<2x32xf32>
    %169 = arith.mulf %164, %166 : vector<2x32xf32>
    %170 = arith.addf %168, %169 : vector<2x32xf32>
    %171 = math.tanh %170 : vector<2x32xf32>
    %172 = arith.mulf %167, %171 : vector<2x32xf32>
    %c6 = arith.constant 6 : index
    %c0_36 = arith.constant 0 : index
    %c0_37 = arith.constant 0 : index
    %173 = vector.load %arg28[%c6, %c0_36, %c0_37] : memref<8x2x32xf32, #tpu.memory_space<vmem>>, vector<1x2x32xf32>
    %174 = vector.shape_cast %173 : vector<1x2x32xf32> to vector<2x32xf32>
    %175 = vector.shape_cast %172 : vector<2x32xf32> to vector<1x2x32xf32>
    tpu.vector_store %arg28[%c6, %c0_36, %c0_37], %175 {strides = array<i32>} : memref<8x2x32xf32, #tpu.memory_space<vmem>>, vector<1x2x32xf32>,
    %176 = vector.extract_strided_slice %13 {offsets = [7, 0, 0], sizes = [1, 2, 128], strides = [1, 1, 1]} : vector<8x2x128xf32> to vector<1x2x128xf32>
    %177 = vector.shape_cast %176 : vector<1x2x128xf32> to vector<2x128xf32>
    %cst_38 = arith.constant dense<0.000000e+00> : vector<2x128xf32>
    %178 = tpu.matmul %172, %14, %cst_38 {dimension_numbers = #tpu.dot_dimension_numbers<[1], [0], [0], [1], [0, 0, 1, 1], [], []>} : vector<2x32xf32>, vector<32x128xf32>, vector<2x128xf32> -> vector<2x128xf32>
    %179 = arith.addf %177, %178 : vector<2x128xf32>
    %180 = math.tanh %179 : vector<2x128xf32>
    %181 = arith.negf %179 : vector<2x128xf32>
    %182 = math.exp %181 : vector<2x128xf32>
    %cst_39 = arith.constant 1.000000e+00 : f32
    %183 = vector.broadcast %cst_39 : f32 to vector<2x128xf32>
    %184 = arith.addf %183, %182 : vector<2x128xf32>
    %185 = arith.divf %183, %184 : vector<2x128xf32>
    %186 = arith.select %5, %180, %185 : vector<2x128xi1>, vector<2x128xf32>
    %187 = vector.extract_strided_slice %186 {offsets = [0, 0], sizes = [2, 32], strides = [1, 1]} : vector<2x128xf32> to vector<2x32xf32>
    %188 = vector.extract_strided_slice %186 {offsets = [0, 32], sizes = [2, 32], strides = [1, 1]} : vector<2x128xf32> to vector<2x32xf32>
    %189 = vector.extract_strided_slice %186 {offsets = [0, 64], sizes = [2, 32], strides = [1, 1]} : vector<2x128xf32> to vector<2x32xf32>
    %190 = vector.extract_strided_slice %186 {offsets = [0, 96], sizes = [2, 32], strides = [1, 1]} : vector<2x128xf32> to vector<2x32xf32>
    %191 = arith.mulf %188, %170 : vector<2x32xf32>
    %192 = arith.mulf %187, %189 : vector<2x32xf32>
    %193 = arith.addf %191, %192 : vector<2x32xf32>
    %194 = math.tanh %193 : vector<2x32xf32>
    %195 = arith.mulf %190, %194 : vector<2x32xf32>
    %c7 = arith.constant 7 : index
    %c0_40 = arith.constant 0 : index
    %c0_41 = arith.constant 0 : index
    %196 = vector.load %arg28[%c7, %c0_40, %c0_41] : memref<8x2x32xf32, #tpu.memory_space<vmem>>, vector<1x2x32xf32>
    %197 = vector.shape_cast %196 : vector<1x2x32xf32> to vector<2x32xf32>
    %198 = vector.shape_cast %195 : vector<2x32xf32> to vector<1x2x32xf32>
    tpu.vector_store %arg28[%c7, %c0_40, %c0_41], %198 {strides = array<i32>} : memref<8x2x32xf32, #tpu.memory_space<vmem>>, vector<1x2x32xf32>,
    %c0_42 = arith.constant 0 : index
    %c0_43 = arith.constant 0 : index
    %c0_44 = arith.constant 0 : index
    %199 = vector.load %arg28[%c0_42, %c0_43, %c0_44] : memref<8x2x32xf32, #tpu.memory_space<vmem>>, vector<8x2x32xf32>
    %c0_45 = arith.constant 0 : index
    %c0_46 = arith.constant 0 : index
    %200 = vector.load %arg4[%c0_45, %c0_46] : memref<32x128xf32, #tpu.memory_space<vmem>>, vector<32x128xf32>
    "tpu.trace_start"() <{level = 10 : i32, message = "tbd,dg->tbg"}> : () -> ()
    %cst_47 = arith.constant dense<0.000000e+00> : vector<8x2x128xf32>
    %201 = tpu.matmul %199, %200, %cst_47 {dimension_numbers = #tpu.dot_dimension_numbers<[2], [0], [0, 1], [1], [0, 0, 0, 1, 1, 1], [], []>} : vector<8x2x32xf32>, vector<32x128xf32>, vector<8x2x128xf32> -> vector<8x2x128xf32>
    "tpu.trace_stop"() : () -> ()
    %c0_48 = arith.constant 0 : index
    %c0_49 = arith.constant 0 : index
    %202 = vector.load %arg6[%c0_48, %c0_49] : memref<1x128xf32, #tpu.memory_space<vmem>>, vector<1x128xf32>
    %203 = vector.shape_cast %202 : vector<1x128xf32> to vector<1x1x128xf32>
    %204 = vector.broadcast %203 : vector<1x1x128xf32> to vector<8x2x128xf32>
    %205 = arith.addf %201, %204 : vector<8x2x128xf32>
    %c0_50 = arith.constant 0 : index
    %c0_51 = arith.constant 0 : index
    %206 = vector.load %arg5[%c0_50, %c0_51] : memref<32x128xf32, #tpu.memory_space<vmem>>, vector<32x128xf32>
    %207 = vector.extract_strided_slice %205 {offsets = [0, 0, 0], sizes = [1, 2, 128], strides = [1, 1, 1]} : vector<8x2x128xf32> to vector<1x2x128xf32>
    %208 = vector.shape_cast %207 : vector<1x2x128xf32> to vector<2x128xf32>
    %cst_52 = arith.constant dense<0.000000e+00> : vector<2x128xf32>
    %209 = tpu.matmul %6, %206, %cst_52 {dimension_numbers = #tpu.dot_dimension_numbers<[1], [0], [0], [1], [0, 0, 1, 1], [], []>} : vector<2x32xf32>, vector<32x128xf32>, vector<2x128xf32> -> vector<2x128xf32>
    %210 = arith.addf %208, %209 : vector<2x128xf32>
    %211 = math.tanh %210 : vector<2x128xf32>
    %212 = arith.negf %210 : vector<2x128xf32>
    %213 = math.exp %212 : vector<2x128xf32>
    %cst_53 = arith.constant 1.000000e+00 : f32
    %214 = vector.broadcast %cst_53 : f32 to vector<2x128xf32>
    %215 = arith.addf %214, %213 : vector<2x128xf32>
    %216 = arith.divf %214, %215 : vector<2x128xf32>
    %217 = arith.select %5, %211, %216 : vector<2x128xi1>, vector<2x128xf32>
    %218 = vector.extract_strided_slice %217 {offsets = [0, 0], sizes = [2, 32], strides = [1, 1]} : vector<2x128xf32> to vector<2x32xf32>
    %219 = vector.extract_strided_slice %217 {offsets = [0, 32], sizes = [2, 32], strides = [1, 1]} : vector<2x128xf32> to vector<2x32xf32>
    %220 = vector.extract_strided_slice %217 {offsets = [0, 64], sizes = [2, 32], strides = [1, 1]} : vector<2x128xf32> to vector<2x32xf32>
    %221 = vector.extract_strided_slice %217 {offsets = [0, 96], sizes = [2, 32], strides = [1, 1]} : vector<2x128xf32> to vector<2x32xf32>
    %222 = arith.mulf %219, %6 : vector<2x32xf32>
    %223 = arith.mulf %218, %220 : vector<2x32xf32>
    %224 = arith.addf %222, %223 : vector<2x32xf32>
    %225 = math.tanh %224 : vector<2x32xf32>
    %226 = arith.mulf %221, %225 : vector<2x32xf32>
    %c0_54 = arith.constant 0 : index
    %c0_55 = arith.constant 0 : index
    %c0_56 = arith.constant 0 : index
    %227 = vector.load %arg28[%c0_54, %c0_55, %c0_56] : memref<8x2x32xf32, #tpu.memory_space<vmem>>, vector<1x2x32xf32>
    %228 = vector.shape_cast %227 : vector<1x2x32xf32> to vector<2x32xf32>
    %229 = vector.shape_cast %226 : vector<2x32xf32> to vector<1x2x32xf32>
    tpu.vector_store %arg28[%c0_54, %c0_55, %c0_56], %229 {strides = array<i32>} : memref<8x2x32xf32, #tpu.memory_space<vmem>>, vector<1x2x32xf32>,
    %230 = vector.extract_strided_slice %205 {offsets = [1, 0, 0], sizes = [1, 2, 128], strides = [1, 1, 1]} : vector<8x2x128xf32> to vector<1x2x128xf32>
    %231 = vector.shape_cast %230 : vector<1x2x128xf32> to vector<2x128xf32>
    %cst_57 = arith.constant dense<0.000000e+00> : vector<2x128xf32>
    %232 = tpu.matmul %226, %206, %cst_57 {dimension_numbers = #tpu.dot_dimension_numbers<[1], [0], [0], [1], [0, 0, 1, 1], [], []>} : vector<2x32xf32>, vector<32x128xf32>, vector<2x128xf32> -> vector<2x128xf32>
    %233 = arith.addf %231, %232 : vector<2x128xf32>
    %234 = math.tanh %233 : vector<2x128xf32>
    %235 = arith.negf %233 : vector<2x128xf32>
    %236 = math.exp %235 : vector<2x128xf32>
    %cst_58 = arith.constant 1.000000e+00 : f32
    %237 = vector.broadcast %cst_58 : f32 to vector<2x128xf32>
    %238 = arith.addf %237, %236 : vector<2x128xf32>
    %239 = arith.divf %237, %238 : vector<2x128xf32>
    %240 = arith.select %5, %234, %239 : vector<2x128xi1>, vector<2x128xf32>
    %241 = vector.extract_strided_slice %240 {offsets = [0, 0], sizes = [2, 32], strides = [1, 1]} : vector<2x128xf32> to vector<2x32xf32>
    %242 = vector.extract_strided_slice %240 {offsets = [0, 32], sizes = [2, 32], strides = [1, 1]} : vector<2x128xf32> to vector<2x32xf32>
    %243 = vector.extract_strided_slice %240 {offsets = [0, 64], sizes = [2, 32], strides = [1, 1]} : vector<2x128xf32> to vector<2x32xf32>
    %244 = vector.extract_strided_slice %240 {offsets = [0, 96], sizes = [2, 32], strides = [1, 1]} : vector<2x128xf32> to vector<2x32xf32>
    %245 = arith.mulf %242, %224 : vector<2x32xf32>
    %246 = arith.mulf %241, %243 : vector<2x32xf32>
    %247 = arith.addf %245, %246 : vector<2x32xf32>
    %248 = math.tanh %247 : vector<2x32xf32>
    %249 = arith.mulf %244, %248 : vector<2x32xf32>
    %c1_59 = arith.constant 1 : index
    %c0_60 = arith.constant 0 : index
    %c0_61 = arith.constant 0 : index
    %250 = vector.load %arg28[%c1_59, %c0_60, %c0_61] : memref<8x2x32xf32, #tpu.memory_space<vmem>>, vector<1x2x32xf32>
    %251 = vector.shape_cast %250 : vector<1x2x32xf32> to vector<2x32xf32>
    %252 = vector.shape_cast %249 : vector<2x32xf32> to vector<1x2x32xf32>
    tpu.vector_store %arg28[%c1_59, %c0_60, %c0_61], %252 {strides = array<i32>} : memref<8x2x32xf32, #tpu.memory_space<vmem>>, vector<1x2x32xf32>,
    %253 = vector.extract_strided_slice %205 {offsets = [2, 0, 0], sizes = [1, 2, 128], strides = [1, 1, 1]} : vector<8x2x128xf32> to vector<1x2x128xf32>
    %254 = vector.shape_cast %253 : vector<1x2x128xf32> to vector<2x128xf32>
    %cst_62 = arith.constant dense<0.000000e+00> : vector<2x128xf32>
    %255 = tpu.matmul %249, %206, %cst_62 {dimension_numbers = #tpu.dot_dimension_numbers<[1], [0], [0], [1], [0, 0, 1, 1], [], []>} : vector<2x32xf32>, vector<32x128xf32>, vector<2x128xf32> -> vector<2x128xf32>
    %256 = arith.addf %254, %255 : vector<2x128xf32>
    %257 = math.tanh %256 : vector<2x128xf32>
    %258 = arith.negf %256 : vector<2x128xf32>
    %259 = math.exp %258 : vector<2x128xf32>
    %cst_63 = arith.constant 1.000000e+00 : f32
    %260 = vector.broadcast %cst_63 : f32 to vector<2x128xf32>
    %261 = arith.addf %260, %259 : vector<2x128xf32>
    %262 = arith.divf %260, %261 : vector<2x128xf32>
    %263 = arith.select %5, %257, %262 : vector<2x128xi1>, vector<2x128xf32>
    %264 = vector.extract_strided_slice %263 {offsets = [0, 0], sizes = [2, 32], strides = [1, 1]} : vector<2x128xf32> to vector<2x32xf32>
    %265 = vector.extract_strided_slice %263 {offsets = [0, 32], sizes = [2, 32], strides = [1, 1]} : vector<2x128xf32> to vector<2x32xf32>
    %266 = vector.extract_strided_slice %263 {offsets = [0, 64], sizes = [2, 32], strides = [1, 1]} : vector<2x128xf32> to vector<2x32xf32>
    %267 = vector.extract_strided_slice %263 {offsets = [0, 96], sizes = [2, 32], strides = [1, 1]} : vector<2x128xf32> to vector<2x32xf32>
    %268 = arith.mulf %265, %247 : vector<2x32xf32>
    %269 = arith.mulf %264, %266 : vector<2x32xf32>
    %270 = arith.addf %268, %269 : vector<2x32xf32>
    %271 = math.tanh %270 : vector<2x32xf32>
    %272 = arith.mulf %267, %271 : vector<2x32xf32>
    %c2_64 = arith.constant 2 : index
    %c0_65 = arith.constant 0 : index
    %c0_66 = arith.constant 0 : index
    %273 = vector.load %arg28[%c2_64, %c0_65, %c0_66] : memref<8x2x32xf32, #tpu.memory_space<vmem>>, vector<1x2x32xf32>
    %274 = vector.shape_cast %273 : vector<1x2x32xf32> to vector<2x32xf32>
    %275 = vector.shape_cast %272 : vector<2x32xf32> to vector<1x2x32xf32>
    tpu.vector_store %arg28[%c2_64, %c0_65, %c0_66], %275 {strides = array<i32>} : memref<8x2x32xf32, #tpu.memory_space<vmem>>, vector<1x2x32xf32>,
    %276 = vector.extract_strided_slice %205 {offsets = [3, 0, 0], sizes = [1, 2, 128], strides = [1, 1, 1]} : vector<8x2x128xf32> to vector<1x2x128xf32>
    %277 = vector.shape_cast %276 : vector<1x2x128xf32> to vector<2x128xf32>
    %cst_67 = arith.constant dense<0.000000e+00> : vector<2x128xf32>
    %278 = tpu.matmul %272, %206, %cst_67 {dimension_numbers = #tpu.dot_dimension_numbers<[1], [0], [0], [1], [0, 0, 1, 1], [], []>} : vector<2x32xf32>, vector<32x128xf32>, vector<2x128xf32> -> vector<2x128xf32>
    %279 = arith.addf %277, %278 : vector<2x128xf32>
    %280 = math.tanh %279 : vector<2x128xf32>
    %281 = arith.negf %279 : vector<2x128xf32>
    %282 = math.exp %281 : vector<2x128xf32>
    %cst_68 = arith.constant 1.000000e+00 : f32
    %283 = vector.broadcast %cst_68 : f32 to vector<2x128xf32>
    %284 = arith.addf %283, %282 : vector<2x128xf32>
    %285 = arith.divf %283, %284 : vector<2x128xf32>
    %286 = arith.select %5, %280, %285 : vector<2x128xi1>, vector<2x128xf32>
    %287 = vector.extract_strided_slice %286 {offsets = [0, 0], sizes = [2, 32], strides = [1, 1]} : vector<2x128xf32> to vector<2x32xf32>
    %288 = vector.extract_strided_slice %286 {offsets = [0, 32], sizes = [2, 32], strides = [1, 1]} : vector<2x128xf32> to vector<2x32xf32>
    %289 = vector.extract_strided_slice %286 {offsets = [0, 64], sizes = [2, 32], strides = [1, 1]} : vector<2x128xf32> to vector<2x32xf32>
    %290 = vector.extract_strided_slice %286 {offsets = [0, 96], sizes = [2, 32], strides = [1, 1]} : vector<2x128xf32> to vector<2x32xf32>
    %291 = arith.mulf %288, %270 : vector<2x32xf32>
    %292 = arith.mulf %287, %289 : vector<2x32xf32>
    %293 = arith.addf %291, %292 : vector<2x32xf32>
    %294 = math.tanh %293 : vector<2x32xf32>
    %295 = arith.mulf %290, %294 : vector<2x32xf32>
    %c3_69 = arith.constant 3 : index
    %c0_70 = arith.constant 0 : index
    %c0_71 = arith.constant 0 : index
    %296 = vector.load %arg28[%c3_69, %c0_70, %c0_71] : memref<8x2x32xf32, #tpu.memory_space<vmem>>, vector<1x2x32xf32>
    %297 = vector.shape_cast %296 : vector<1x2x32xf32> to vector<2x32xf32>
    %298 = vector.shape_cast %295 : vector<2x32xf32> to vector<1x2x32xf32>
    tpu.vector_store %arg28[%c3_69, %c0_70, %c0_71], %298 {strides = array<i32>} : memref<8x2x32xf32, #tpu.memory_space<vmem>>, vector<1x2x32xf32>,
    %299 = vector.extract_strided_slice %205 {offsets = [4, 0, 0], sizes = [1, 2, 128], strides = [1, 1, 1]} : vector<8x2x128xf32> to vector<1x2x128xf32>
    %300 = vector.shape_cast %299 : vector<1x2x128xf32> to vector<2x128xf32>
    %cst_72 = arith.constant dense<0.000000e+00> : vector<2x128xf32>
    %301 = tpu.matmul %295, %206, %cst_72 {dimension_numbers = #tpu.dot_dimension_numbers<[1], [0], [0], [1], [0, 0, 1, 1], [], []>} : vector<2x32xf32>, vector<32x128xf32>, vector<2x128xf32> -> vector<2x128xf32>
    %302 = arith.addf %300, %301 : vector<2x128xf32>
    %303 = math.tanh %302 : vector<2x128xf32>
    %304 = arith.negf %302 : vector<2x128xf32>
    %305 = math.exp %304 : vector<2x128xf32>
    %cst_73 = arith.constant 1.000000e+00 : f32
    %306 = vector.broadcast %cst_73 : f32 to vector<2x128xf32>
    %307 = arith.addf %306, %305 : vector<2x128xf32>
    %308 = arith.divf %306, %307 : vector<2x128xf32>
    %309 = arith.select %5, %303, %308 : vector<2x128xi1>, vector<2x128xf32>
    %310 = vector.extract_strided_slice %309 {offsets = [0, 0], sizes = [2, 32], strides = [1, 1]} : vector<2x128xf32> to vector<2x32xf32>
    %311 = vector.extract_strided_slice %309 {offsets = [0, 32], sizes = [2, 32], strides = [1, 1]} : vector<2x128xf32> to vector<2x32xf32>
    %312 = vector.extract_strided_slice %309 {offsets = [0, 64], sizes = [2, 32], strides = [1, 1]} : vector<2x128xf32> to vector<2x32xf32>
    %313 = vector.extract_strided_slice %309 {offsets = [0, 96], sizes = [2, 32], strides = [1, 1]} : vector<2x128xf32> to vector<2x32xf32>
    %314 = arith.mulf %311, %293 : vector<2x32xf32>
    %315 = arith.mulf %310, %312 : vector<2x32xf32>
    %316 = arith.addf %314, %315 : vector<2x32xf32>
    %317 = math.tanh %316 : vector<2x32xf32>
    %318 = arith.mulf %313, %317 : vector<2x32xf32>
    %c4_74 = arith.constant 4 : index
    %c0_75 = arith.constant 0 : index
    %c0_76 = arith.constant 0 : index
    %319 = vector.load %arg28[%c4_74, %c0_75, %c0_76] : memref<8x2x32xf32, #tpu.memory_space<vmem>>, vector<1x2x32xf32>
    %320 = vector.shape_cast %319 : vector<1x2x32xf32> to vector<2x32xf32>
    %321 = vector.shape_cast %318 : vector<2x32xf32> to vector<1x2x32xf32>
    tpu.vector_store %arg28[%c4_74, %c0_75, %c0_76], %321 {strides = array<i32>} : memref<8x2x32xf32, #tpu.memory_space<vmem>>, vector<1x2x32xf32>,
    %322 = vector.extract_strided_slice %205 {offsets = [5, 0, 0], sizes = [1, 2, 128], strides = [1, 1, 1]} : vector<8x2x128xf32> to vector<1x2x128xf32>
    %323 = vector.shape_cast %322 : vector<1x2x128xf32> to vector<2x128xf32>
    %cst_77 = arith.constant dense<0.000000e+00> : vector<2x128xf32>
    %324 = tpu.matmul %318, %206, %cst_77 {dimension_numbers = #tpu.dot_dimension_numbers<[1], [0], [0], [1], [0, 0, 1, 1], [], []>} : vector<2x32xf32>, vector<32x128xf32>, vector<2x128xf32> -> vector<2x128xf32>
    %325 = arith.addf %323, %324 : vector<2x128xf32>
    %326 = math.tanh %325 : vector<2x128xf32>
    %327 = arith.negf %325 : vector<2x128xf32>
    %328 = math.exp %327 : vector<2x128xf32>
    %cst_78 = arith.constant 1.000000e+00 : f32
    %329 = vector.broadcast %cst_78 : f32 to vector<2x128xf32>
    %330 = arith.addf %329, %328 : vector<2x128xf32>
    %331 = arith.divf %329, %330 : vector<2x128xf32>
    %332 = arith.select %5, %326, %331 : vector<2x128xi1>, vector<2x128xf32>
    %333 = vector.extract_strided_slice %332 {offsets = [0, 0], sizes = [2, 32], strides = [1, 1]} : vector<2x128xf32> to vector<2x32xf32>
    %334 = vector.extract_strided_slice %332 {offsets = [0, 32], sizes = [2, 32], strides = [1, 1]} : vector<2x128xf32> to vector<2x32xf32>
    %335 = vector.extract_strided_slice %332 {offsets = [0, 64], sizes = [2, 32], strides = [1, 1]} : vector<2x128xf32> to vector<2x32xf32>
    %336 = vector.extract_strided_slice %332 {offsets = [0, 96], sizes = [2, 32], strides = [1, 1]} : vector<2x128xf32> to vector<2x32xf32>
    %337 = arith.mulf %334, %316 : vector<2x32xf32>
    %338 = arith.mulf %333, %335 : vector<2x32xf32>
    %339 = arith.addf %337, %338 : vector<2x32xf32>
    %340 = math.tanh %339 : vector<2x32xf32>
    %341 = arith.mulf %336, %340 : vector<2x32xf32>
    %c5_79 = arith.constant 5 : index
    %c0_80 = arith.constant 0 : index
    %c0_81 = arith.constant 0 : index
    %342 = vector.load %arg28[%c5_79, %c0_80, %c0_81] : memref<8x2x32xf32, #tpu.memory_space<vmem>>, vector<1x2x32xf32>
    %343 = vector.shape_cast %342 : vector<1x2x32xf32> to vector<2x32xf32>
    %344 = vector.shape_cast %341 : vector<2x32xf32> to vector<1x2x32xf32>
    tpu.vector_store %arg28[%c5_79, %c0_80, %c0_81], %344 {strides = array<i32>} : memref<8x2x32xf32, #tpu.memory_space<vmem>>, vector<1x2x32xf32>,
    %345 = vector.extract_strided_slice %205 {offsets = [6, 0, 0], sizes = [1, 2, 128], strides = [1, 1, 1]} : vector<8x2x128xf32> to vector<1x2x128xf32>
    %346 = vector.shape_cast %345 : vector<1x2x128xf32> to vector<2x128xf32>
    %cst_82 = arith.constant dense<0.000000e+00> : vector<2x128xf32>
    %347 = tpu.matmul %341, %206, %cst_82 {dimension_numbers = #tpu.dot_dimension_numbers<[1], [0], [0], [1], [0, 0, 1, 1], [], []>} : vector<2x32xf32>, vector<32x128xf32>, vector<2x128xf32> -> vector<2x128xf32>
    %348 = arith.addf %346, %347 : vector<2x128xf32>
    %349 = math.tanh %348 : vector<2x128xf32>
    %350 = arith.negf %348 : vector<2x128xf32>
    %351 = math.exp %350 : vector<2x128xf32>
    %cst_83 = arith.constant 1.000000e+00 : f32
    %352 = vector.broadcast %cst_83 : f32 to vector<2x128xf32>
    %353 = arith.addf %352, %351 : vector<2x128xf32>
    %354 = arith.divf %352, %353 : vector<2x128xf32>
    %355 = arith.select %5, %349, %354 : vector<2x128xi1>, vector<2x128xf32>
    %356 = vector.extract_strided_slice %355 {offsets = [0, 0], sizes = [2, 32], strides = [1, 1]} : vector<2x128xf32> to vector<2x32xf32>
    %357 = vector.extract_strided_slice %355 {offsets = [0, 32], sizes = [2, 32], strides = [1, 1]} : vector<2x128xf32> to vector<2x32xf32>
    %358 = vector.extract_strided_slice %355 {offsets = [0, 64], sizes = [2, 32], strides = [1, 1]} : vector<2x128xf32> to vector<2x32xf32>
    %359 = vector.extract_strided_slice %355 {offsets = [0, 96], sizes = [2, 32], strides = [1, 1]} : vector<2x128xf32> to vector<2x32xf32>
    %360 = arith.mulf %357, %339 : vector<2x32xf32>
    %361 = arith.mulf %356, %358 : vector<2x32xf32>
    %362 = arith.addf %360, %361 : vector<2x32xf32>
    %363 = math.tanh %362 : vector<2x32xf32>
    %364 = arith.mulf %359, %363 : vector<2x32xf32>
    %c6_84 = arith.constant 6 : index
    %c0_85 = arith.constant 0 : index
    %c0_86 = arith.constant 0 : index
    %365 = vector.load %arg28[%c6_84, %c0_85, %c0_86] : memref<8x2x32xf32, #tpu.memory_space<vmem>>, vector<1x2x32xf32>
    %366 = vector.shape_cast %365 : vector<1x2x32xf32> to vector<2x32xf32>
    %367 = vector.shape_cast %364 : vector<2x32xf32> to vector<1x2x32xf32>
    tpu.vector_store %arg28[%c6_84, %c0_85, %c0_86], %367 {strides = array<i32>} : memref<8x2x32xf32, #tpu.memory_space<vmem>>, vector<1x2x32xf32>,
    %368 = vector.extract_strided_slice %205 {offsets = [7, 0, 0], sizes = [1, 2, 128], strides = [1, 1, 1]} : vector<8x2x128xf32> to vector<1x2x128xf32>
    %369 = vector.shape_cast %368 : vector<1x2x128xf32> to vector<2x128xf32>
    %cst_87 = arith.constant dense<0.000000e+00> : vector<2x128xf32>
    %370 = tpu.matmul %364, %206, %cst_87 {dimension_numbers = #tpu.dot_dimension_numbers<[1], [0], [0], [1], [0, 0, 1, 1], [], []>} : vector<2x32xf32>, vector<32x128xf32>, vector<2x128xf32> -> vector<2x128xf32>
    %371 = arith.addf %369, %370 : vector<2x128xf32>
    %372 = math.tanh %371 : vector<2x128xf32>
    %373 = arith.negf %371 : vector<2x128xf32>
    %374 = math.exp %373 : vector<2x128xf32>
    %cst_88 = arith.constant 1.000000e+00 : f32
    %375 = vector.broadcast %cst_88 : f32 to vector<2x128xf32>
    %376 = arith.addf %375, %374 : vector<2x128xf32>
    %377 = arith.divf %375, %376 : vector<2x128xf32>
    %378 = arith.select %5, %372, %377 : vector<2x128xi1>, vector<2x128xf32>
    %379 = vector.extract_strided_slice %378 {offsets = [0, 0], sizes = [2, 32], strides = [1, 1]} : vector<2x128xf32> to vector<2x32xf32>
    %380 = vector.extract_strided_slice %378 {offsets = [0, 32], sizes = [2, 32], strides = [1, 1]} : vector<2x128xf32> to vector<2x32xf32>
    %381 = vector.extract_strided_slice %378 {offsets = [0, 64], sizes = [2, 32], strides = [1, 1]} : vector<2x128xf32> to vector<2x32xf32>
    %382 = vector.extract_strided_slice %378 {offsets = [0, 96], sizes = [2, 32], strides = [1, 1]} : vector<2x128xf32> to vector<2x32xf32>
    %383 = arith.mulf %380, %362 : vector<2x32xf32>
    %384 = arith.mulf %379, %381 : vector<2x32xf32>
    %385 = arith.addf %383, %384 : vector<2x32xf32>
    %386 = math.tanh %385 : vector<2x32xf32>
    %387 = arith.mulf %382, %386 : vector<2x32xf32>
    %c7_89 = arith.constant 7 : index
    %c0_90 = arith.constant 0 : index
    %c0_91 = arith.constant 0 : index
    %388 = vector.load %arg28[%c7_89, %c0_90, %c0_91] : memref<8x2x32xf32, #tpu.memory_space<vmem>>, vector<1x2x32xf32>
    %389 = vector.shape_cast %388 : vector<1x2x32xf32> to vector<2x32xf32>
    %390 = vector.shape_cast %387 : vector<2x32xf32> to vector<1x2x32xf32>
    tpu.vector_store %arg28[%c7_89, %c0_90, %c0_91], %390 {strides = array<i32>} : memref<8x2x32xf32, #tpu.memory_space<vmem>>, vector<1x2x32xf32>,
    %c0_92 = arith.constant 0 : index
    %c0_93 = arith.constant 0 : index
    %c0_94 = arith.constant 0 : index
    %391 = vector.load %arg28[%c0_92, %c0_93, %c0_94] : memref<8x2x32xf32, #tpu.memory_space<vmem>>, vector<8x2x32xf32>
    %c0_95 = arith.constant 0 : index
    %c0_96 = arith.constant 0 : index
    %392 = vector.load %arg13[%c0_95, %c0_96] : memref<32x96xf32, #tpu.memory_space<vmem>>, vector<32x96xf32>
    "tpu.trace_start"() <{level = 10 : i32, message = "tbe,ef->tbf"}> : () -> ()
    %cst_97 = arith.constant dense<0.000000e+00> : vector<8x2x96xf32>
    %393 = tpu.matmul %391, %392, %cst_97 {dimension_numbers = #tpu.dot_dimension_numbers<[2], [0], [0, 1], [1], [0, 0, 0, 1, 1, 1], [], []>} : vector<8x2x32xf32>, vector<32x96xf32>, vector<8x2x96xf32> -> vector<8x2x96xf32>
    "tpu.trace_stop"() : () -> ()
    %c0_98 = arith.constant 0 : index
    %c0_99 = arith.constant 0 : index
    %394 = vector.load %arg14[%c0_98, %c0_99] : memref<1x96xf32, #tpu.memory_space<vmem>>, vector<1x96xf32>
    %395 = vector.shape_cast %394 : vector<1x96xf32> to vector<1x1x96xf32>
    %396 = vector.broadcast %395 : vector<1x1x96xf32> to vector<8x2x96xf32>
    %397 = arith.addf %393, %396 : vector<8x2x96xf32>
    %c0_100 = arith.constant 0 : index
    %c0_101 = arith.constant 0 : index
    %398 = vector.load %arg15[%c0_100, %c0_101] : memref<32x32xf32, #tpu.memory_space<vmem>>, vector<32x32xf32>
    %c0_102 = arith.constant 0 : index
    %c0_103 = arith.constant 0 : index
    %399 = vector.load %arg16[%c0_102, %c0_103] : memref<1x32xf32, #tpu.memory_space<vmem>>, vector<1x32xf32>
    %400 = vector.extract_strided_slice %397 {offsets = [0, 0, 0], sizes = [8, 1, 32], strides = [1, 1, 1]} : vector<8x2x96xf32> to vector<8x1x32xf32>
    %401 = vector.shape_cast %400 : vector<8x1x32xf32> to vector<8x32xf32>
    %402 = vector.extract_strided_slice %397 {offsets = [0, 0, 32], sizes = [8, 1, 32], strides = [1, 1, 1]} : vector<8x2x96xf32> to vector<8x1x32xf32>
    %403 = vector.shape_cast %402 : vector<8x1x32xf32> to vector<8x32xf32>
    %404 = vector.extract_strided_slice %397 {offsets = [0, 0, 64], sizes = [8, 1, 32], strides = [1, 1, 1]} : vector<8x2x96xf32> to vector<8x1x32xf32>
    %405 = vector.shape_cast %404 : vector<8x1x32xf32> to vector<8x32xf32>
    %cst_104 = arith.constant dense<0.000000e+00> : vector<8x8xf32>
    %406 = tpu.matmul %401, %403, %cst_104 {dimension_numbers = #tpu.dot_dimension_numbers<[1], [1], [0], [0], [0, 0, 1, 0], [], []>} : vector<8x32xf32>, vector<8x32xf32>, vector<8x8xf32> -> vector<8x8xf32>
    %cst_105 = arith.constant 0.176776692 : f32
    %407 = vector.broadcast %cst_105 : f32 to vector<8x8xf32>
    %408 = arith.mulf %406, %407 : vector<8x8xf32>
    %cst_106 = arith.constant dense<0xFF800000> : vector<8xf32>
    %409 = vector.multi_reduction <maximumf>, %408, %cst_106 [1] : vector<8x8xf32> to vector<8xf32>
    %410 = vector.shape_cast %409 : vector<8xf32> to vector<8x1xf32>
    %411 = vector.broadcast %410 : vector<8x1xf32> to vector<8x8xf32>
    %412 = arith.subf %408, %411 : vector<8x8xf32>
    %413 = math.exp %412 : vector<8x8xf32>
    %cst_107 = arith.constant dense<0.000000e+00> : vector<8xf32>
    %414 = vector.multi_reduction <add>, %413, %cst_107 [1] : vector<8x8xf32> to vector<8xf32>
    %415 = vector.shape_cast %414 : vector<8xf32> to vector<8x1xf32>
    %416 = tpu.reciprocal %415 {approx = true} : vector<8x1xf32> -> vector<8x1xf32>
    %417 = vector.broadcast %416 : vector<8x1xf32> to vector<8x8xf32>
    %418 = arith.mulf %413, %417 : vector<8x8xf32>
    %cst_108 = arith.constant dense<0.000000e+00> : vector<8x32xf32>
    %419 = tpu.matmul %418, %405, %cst_108 {dimension_numbers = #tpu.dot_dimension_numbers<[1], [0], [0], [1], [0, 0, 1, 1], [], []>} : vector<8x8xf32>, vector<8x32xf32>, vector<8x32xf32> -> vector<8x32xf32>
    %cst_109 = arith.constant dense<0.000000e+00> : vector<8x32xf32>
    %420 = tpu.matmul %419, %398, %cst_109 {dimension_numbers = #tpu.dot_dimension_numbers<[1], [0], [0], [1], [0, 0, 1, 1], [], []>} : vector<8x32xf32>, vector<32x32xf32>, vector<8x32xf32> -> vector<8x32xf32>
    %421 = vector.broadcast %399 : vector<1x32xf32> to vector<8x32xf32>
    %422 = arith.addf %420, %421 : vector<8x32xf32>
    %423 = vector.shape_cast %422 : vector<8x32xf32> to vector<8x1x32xf32>
    %c0_110 = arith.constant 0 : index
    %c0_111 = arith.constant 0 : index
    %c0_112 = arith.constant 0 : index
    %424 = vector.load %arg28[%c0_110, %c0_111, %c0_112] : memref<8x2x32xf32, #tpu.memory_space<vmem>>, vector<8x1x32xf32>
    tpu.vector_store %arg28[%c0_110, %c0_111, %c0_112], %423 {strides = array<i32>} : memref<8x2x32xf32, #tpu.memory_space<vmem>>, vector<8x1x32xf32>,
    %425 = vector.extract_strided_slice %397 {offsets = [0, 1, 0], sizes = [8, 1, 32], strides = [1, 1, 1]} : vector<8x2x96xf32> to vector<8x1x32xf32>
    %426 = vector.shape_cast %425 : vector<8x1x32xf32> to vector<8x32xf32>
    %427 = vector.extract_strided_slice %397 {offsets = [0, 1, 32], sizes = [8, 1, 32], strides = [1, 1, 1]} : vector<8x2x96xf32> to vector<8x1x32xf32>
    %428 = vector.shape_cast %427 : vector<8x1x32xf32> to vector<8x32xf32>
    %429 = vector.extract_strided_slice %397 {offsets = [0, 1, 64], sizes = [8, 1, 32], strides = [1, 1, 1]} : vector<8x2x96xf32> to vector<8x1x32xf32>
    %430 = vector.shape_cast %429 : vector<8x1x32xf32> to vector<8x32xf32>
    %cst_113 = arith.constant dense<0.000000e+00> : vector<8x8xf32>
    %431 = tpu.matmul %426, %428, %cst_113 {dimension_numbers = #tpu.dot_dimension_numbers<[1], [1], [0], [0], [0, 0, 1, 0], [], []>} : vector<8x32xf32>, vector<8x32xf32>, vector<8x8xf32> -> vector<8x8xf32>
    %cst_114 = arith.constant 0.176776692 : f32
    %432 = vector.broadcast %cst_114 : f32 to vector<8x8xf32>
    %433 = arith.mulf %431, %432 : vector<8x8xf32>
    %cst_115 = arith.constant dense<0xFF800000> : vector<8xf32>
    %434 = vector.multi_reduction <maximumf>, %433, %cst_115 [1] : vector<8x8xf32> to vector<8xf32>
    %435 = vector.shape_cast %434 : vector<8xf32> to vector<8x1xf32>
    %436 = vector.broadcast %435 : vector<8x1xf32> to vector<8x8xf32>
    %437 = arith.subf %433, %436 : vector<8x8xf32>
    %438 = math.exp %437 : vector<8x8xf32>
    %cst_116 = arith.constant dense<0.000000e+00> : vector<8xf32>
    %439 = vector.multi_reduction <add>, %438, %cst_116 [1] : vector<8x8xf32> to vector<8xf32>
    %440 = vector.shape_cast %439 : vector<8xf32> to vector<8x1xf32>
    %441 = tpu.reciprocal %440 {approx = true} : vector<8x1xf32> -> vector<8x1xf32>
    %442 = vector.broadcast %441 : vector<8x1xf32> to vector<8x8xf32>
    %443 = arith.mulf %438, %442 : vector<8x8xf32>
    %cst_117 = arith.constant dense<0.000000e+00> : vector<8x32xf32>
    %444 = tpu.matmul %443, %430, %cst_117 {dimension_numbers = #tpu.dot_dimension_numbers<[1], [0], [0], [1], [0, 0, 1, 1], [], []>} : vector<8x8xf32>, vector<8x32xf32>, vector<8x32xf32> -> vector<8x32xf32>
    %cst_118 = arith.constant dense<0.000000e+00> : vector<8x32xf32>
    %445 = tpu.matmul %444, %398, %cst_118 {dimension_numbers = #tpu.dot_dimension_numbers<[1], [0], [0], [1], [0, 0, 1, 1], [], []>} : vector<8x32xf32>, vector<32x32xf32>, vector<8x32xf32> -> vector<8x32xf32>
    %446 = vector.broadcast %399 : vector<1x32xf32> to vector<8x32xf32>
    %447 = arith.addf %445, %446 : vector<8x32xf32>
    %448 = vector.shape_cast %447 : vector<8x32xf32> to vector<8x1x32xf32>
    %c0_119 = arith.constant 0 : index
    %c1_120 = arith.constant 1 : index
    %c0_121 = arith.constant 0 : index
    %449 = vector.load %arg28[%c0_119, %c1_120, %c0_121] : memref<8x2x32xf32, #tpu.memory_space<vmem>>, vector<8x1x32xf32>
    tpu.vector_store %arg28[%c0_119, %c1_120, %c0_121], %448 {strides = array<i32>} : memref<8x2x32xf32, #tpu.memory_space<vmem>>, vector<8x1x32xf32>,
    %c0_122 = arith.constant 0 : index
    %c0_123 = arith.constant 0 : index
    %c0_124 = arith.constant 0 : index
    %450 = vector.load %arg28[%c0_122, %c0_123, %c0_124] : memref<8x2x32xf32, #tpu.memory_space<vmem>>, vector<8x2x32xf32>
    %c0_125 = arith.constant 0 : index
    %c0_126 = arith.constant 0 : index
    %451 = vector.load %arg7[%c0_125, %c0_126] : memref<32x128xf32, #tpu.memory_space<vmem>>, vector<32x128xf32>
    "tpu.trace_start"() <{level = 10 : i32, message = "tbd,dg->tbg"}> : () -> ()
    %cst_127 = arith.constant dense<0.000000e+00> : vector<8x2x128xf32>
    %452 = tpu.matmul %450, %451, %cst_127 {dimension_numbers = #tpu.dot_dimension_numbers<[2], [0], [0, 1], [1], [0, 0, 0, 1, 1, 1], [], []>} : vector<8x2x32xf32>, vector<32x128xf32>, vector<8x2x128xf32> -> vector<8x2x128xf32>
    "tpu.trace_stop"() : () -> ()
    %c0_128 = arith.constant 0 : index
    %c0_129 = arith.constant 0 : index
    %453 = vector.load %arg9[%c0_128, %c0_129] : memref<1x128xf32, #tpu.memory_space<vmem>>, vector<1x128xf32>
    %454 = vector.shape_cast %453 : vector<1x128xf32> to vector<1x1x128xf32>
    %455 = vector.broadcast %454 : vector<1x1x128xf32> to vector<8x2x128xf32>
    %456 = arith.addf %452, %455 : vector<8x2x128xf32>
    %c0_130 = arith.constant 0 : index
    %c0_131 = arith.constant 0 : index
    %457 = vector.load %arg8[%c0_130, %c0_131] : memref<32x128xf32, #tpu.memory_space<vmem>>, vector<32x128xf32>
    %458 = vector.extract_strided_slice %456 {offsets = [0, 0, 0], sizes = [1, 2, 128], strides = [1, 1, 1]} : vector<8x2x128xf32> to vector<1x2x128xf32>
    %459 = vector.shape_cast %458 : vector<1x2x128xf32> to vector<2x128xf32>
    %cst_132 = arith.constant dense<0.000000e+00> : vector<2x128xf32>
    %460 = tpu.matmul %195, %457, %cst_132 {dimension_numbers = #tpu.dot_dimension_numbers<[1], [0], [0], [1], [0, 0, 1, 1], [], []>} : vector<2x32xf32>, vector<32x128xf32>, vector<2x128xf32> -> vector<2x128xf32>
    %461 = arith.addf %459, %460 : vector<2x128xf32>
    %462 = math.tanh %461 : vector<2x128xf32>
    %463 = arith.negf %461 : vector<2x128xf32>
    %464 = math.exp %463 : vector<2x128xf32>
    %cst_133 = arith.constant 1.000000e+00 : f32
    %465 = vector.broadcast %cst_133 : f32 to vector<2x128xf32>
    %466 = arith.addf %465, %464 : vector<2x128xf32>
    %467 = arith.divf %465, %466 : vector<2x128xf32>
    %468 = arith.select %5, %462, %467 : vector<2x128xi1>, vector<2x128xf32>
    %469 = vector.extract_strided_slice %468 {offsets = [0, 0], sizes = [2, 32], strides = [1, 1]} : vector<2x128xf32> to vector<2x32xf32>
    %470 = vector.extract_strided_slice %468 {offsets = [0, 32], sizes = [2, 32], strides = [1, 1]} : vector<2x128xf32> to vector<2x32xf32>
    %471 = vector.extract_strided_slice %468 {offsets = [0, 64], sizes = [2, 32], strides = [1, 1]} : vector<2x128xf32> to vector<2x32xf32>
    %472 = vector.extract_strided_slice %468 {offsets = [0, 96], sizes = [2, 32], strides = [1, 1]} : vector<2x128xf32> to vector<2x32xf32>
    %473 = arith.mulf %470, %193 : vector<2x32xf32>
    %474 = arith.mulf %469, %471 : vector<2x32xf32>
    %475 = arith.addf %473, %474 : vector<2x32xf32>
    %476 = math.tanh %475 : vector<2x32xf32>
    %477 = arith.mulf %472, %476 : vector<2x32xf32>
    %c0_134 = arith.constant 0 : index
    %c0_135 = arith.constant 0 : index
    %c0_136 = arith.constant 0 : index
    %478 = vector.load %arg28[%c0_134, %c0_135, %c0_136] : memref<8x2x32xf32, #tpu.memory_space<vmem>>, vector<1x2x32xf32>
    %479 = vector.shape_cast %478 : vector<1x2x32xf32> to vector<2x32xf32>
    %480 = vector.shape_cast %477 : vector<2x32xf32> to vector<1x2x32xf32>
    tpu.vector_store %arg28[%c0_134, %c0_135, %c0_136], %480 {strides = array<i32>} : memref<8x2x32xf32, #tpu.memory_space<vmem>>, vector<1x2x32xf32>,
    %481 = vector.extract_strided_slice %456 {offsets = [1, 0, 0], sizes = [1, 2, 128], strides = [1, 1, 1]} : vector<8x2x128xf32> to vector<1x2x128xf32>
    %482 = vector.shape_cast %481 : vector<1x2x128xf32> to vector<2x128xf32>
    %cst_137 = arith.constant dense<0.000000e+00> : vector<2x128xf32>
    %483 = tpu.matmul %477, %457, %cst_137 {dimension_numbers = #tpu.dot_dimension_numbers<[1], [0], [0], [1], [0, 0, 1, 1], [], []>} : vector<2x32xf32>, vector<32x128xf32>, vector<2x128xf32> -> vector<2x128xf32>
    %484 = arith.addf %482, %483 : vector<2x128xf32>
    %485 = math.tanh %484 : vector<2x128xf32>
    %486 = arith.negf %484 : vector<2x128xf32>
    %487 = math.exp %486 : vector<2x128xf32>
    %cst_138 = arith.constant 1.000000e+00 : f32
    %488 = vector.broadcast %cst_138 : f32 to vector<2x128xf32>
    %489 = arith.addf %488, %487 : vector<2x128xf32>
    %490 = arith.divf %488, %489 : vector<2x128xf32>
    %491 = arith.select %5, %485, %490 : vector<2x128xi1>, vector<2x128xf32>
    %492 = vector.extract_strided_slice %491 {offsets = [0, 0], sizes = [2, 32], strides = [1, 1]} : vector<2x128xf32> to vector<2x32xf32>
    %493 = vector.extract_strided_slice %491 {offsets = [0, 32], sizes = [2, 32], strides = [1, 1]} : vector<2x128xf32> to vector<2x32xf32>
    %494 = vector.extract_strided_slice %491 {offsets = [0, 64], sizes = [2, 32], strides = [1, 1]} : vector<2x128xf32> to vector<2x32xf32>
    %495 = vector.extract_strided_slice %491 {offsets = [0, 96], sizes = [2, 32], strides = [1, 1]} : vector<2x128xf32> to vector<2x32xf32>
    %496 = arith.mulf %493, %475 : vector<2x32xf32>
    %497 = arith.mulf %492, %494 : vector<2x32xf32>
    %498 = arith.addf %496, %497 : vector<2x32xf32>
    %499 = math.tanh %498 : vector<2x32xf32>
    %500 = arith.mulf %495, %499 : vector<2x32xf32>
    %c1_139 = arith.constant 1 : index
    %c0_140 = arith.constant 0 : index
    %c0_141 = arith.constant 0 : index
    %501 = vector.load %arg28[%c1_139, %c0_140, %c0_141] : memref<8x2x32xf32, #tpu.memory_space<vmem>>, vector<1x2x32xf32>
    %502 = vector.shape_cast %501 : vector<1x2x32xf32> to vector<2x32xf32>
    %503 = vector.shape_cast %500 : vector<2x32xf32> to vector<1x2x32xf32>
    tpu.vector_store %arg28[%c1_139, %c0_140, %c0_141], %503 {strides = array<i32>} : memref<8x2x32xf32, #tpu.memory_space<vmem>>, vector<1x2x32xf32>,
    %504 = vector.extract_strided_slice %456 {offsets = [2, 0, 0], sizes = [1, 2, 128], strides = [1, 1, 1]} : vector<8x2x128xf32> to vector<1x2x128xf32>
    %505 = vector.shape_cast %504 : vector<1x2x128xf32> to vector<2x128xf32>
    %cst_142 = arith.constant dense<0.000000e+00> : vector<2x128xf32>
    %506 = tpu.matmul %500, %457, %cst_142 {dimension_numbers = #tpu.dot_dimension_numbers<[1], [0], [0], [1], [0, 0, 1, 1], [], []>} : vector<2x32xf32>, vector<32x128xf32>, vector<2x128xf32> -> vector<2x128xf32>
    %507 = arith.addf %505, %506 : vector<2x128xf32>
    %508 = math.tanh %507 : vector<2x128xf32>
    %509 = arith.negf %507 : vector<2x128xf32>
    %510 = math.exp %509 : vector<2x128xf32>
    %cst_143 = arith.constant 1.000000e+00 : f32
    %511 = vector.broadcast %cst_143 : f32 to vector<2x128xf32>
    %512 = arith.addf %511, %510 : vector<2x128xf32>
    %513 = arith.divf %511, %512 : vector<2x128xf32>
    %514 = arith.select %5, %508, %513 : vector<2x128xi1>, vector<2x128xf32>
    %515 = vector.extract_strided_slice %514 {offsets = [0, 0], sizes = [2, 32], strides = [1, 1]} : vector<2x128xf32> to vector<2x32xf32>
    %516 = vector.extract_strided_slice %514 {offsets = [0, 32], sizes = [2, 32], strides = [1, 1]} : vector<2x128xf32> to vector<2x32xf32>
    %517 = vector.extract_strided_slice %514 {offsets = [0, 64], sizes = [2, 32], strides = [1, 1]} : vector<2x128xf32> to vector<2x32xf32>
    %518 = vector.extract_strided_slice %514 {offsets = [0, 96], sizes = [2, 32], strides = [1, 1]} : vector<2x128xf32> to vector<2x32xf32>
    %519 = arith.mulf %516, %498 : vector<2x32xf32>
    %520 = arith.mulf %515, %517 : vector<2x32xf32>
    %521 = arith.addf %519, %520 : vector<2x32xf32>
    %522 = math.tanh %521 : vector<2x32xf32>
    %523 = arith.mulf %518, %522 : vector<2x32xf32>
    %c2_144 = arith.constant 2 : index
    %c0_145 = arith.constant 0 : index
    %c0_146 = arith.constant 0 : index
    %524 = vector.load %arg28[%c2_144, %c0_145, %c0_146] : memref<8x2x32xf32, #tpu.memory_space<vmem>>, vector<1x2x32xf32>
    %525 = vector.shape_cast %524 : vector<1x2x32xf32> to vector<2x32xf32>
    %526 = vector.shape_cast %523 : vector<2x32xf32> to vector<1x2x32xf32>
    tpu.vector_store %arg28[%c2_144, %c0_145, %c0_146], %526 {strides = array<i32>} : memref<8x2x32xf32, #tpu.memory_space<vmem>>, vector<1x2x32xf32>,
    %527 = vector.extract_strided_slice %456 {offsets = [3, 0, 0], sizes = [1, 2, 128], strides = [1, 1, 1]} : vector<8x2x128xf32> to vector<1x2x128xf32>
    %528 = vector.shape_cast %527 : vector<1x2x128xf32> to vector<2x128xf32>
    %cst_147 = arith.constant dense<0.000000e+00> : vector<2x128xf32>
    %529 = tpu.matmul %523, %457, %cst_147 {dimension_numbers = #tpu.dot_dimension_numbers<[1], [0], [0], [1], [0, 0, 1, 1], [], []>} : vector<2x32xf32>, vector<32x128xf32>, vector<2x128xf32> -> vector<2x128xf32>
    %530 = arith.addf %528, %529 : vector<2x128xf32>
    %531 = math.tanh %530 : vector<2x128xf32>
    %532 = arith.negf %530 : vector<2x128xf32>
    %533 = math.exp %532 : vector<2x128xf32>
    %cst_148 = arith.constant 1.000000e+00 : f32
    %534 = vector.broadcast %cst_148 : f32 to vector<2x128xf32>
    %535 = arith.addf %534, %533 : vector<2x128xf32>
    %536 = arith.divf %534, %535 : vector<2x128xf32>
    %537 = arith.select %5, %531, %536 : vector<2x128xi1>, vector<2x128xf32>
    %538 = vector.extract_strided_slice %537 {offsets = [0, 0], sizes = [2, 32], strides = [1, 1]} : vector<2x128xf32> to vector<2x32xf32>
    %539 = vector.extract_strided_slice %537 {offsets = [0, 32], sizes = [2, 32], strides = [1, 1]} : vector<2x128xf32> to vector<2x32xf32>
    %540 = vector.extract_strided_slice %537 {offsets = [0, 64], sizes = [2, 32], strides = [1, 1]} : vector<2x128xf32> to vector<2x32xf32>
    %541 = vector.extract_strided_slice %537 {offsets = [0, 96], sizes = [2, 32], strides = [1, 1]} : vector<2x128xf32> to vector<2x32xf32>
    %542 = arith.mulf %539, %521 : vector<2x32xf32>
    %543 = arith.mulf %538, %540 : vector<2x32xf32>
    %544 = arith.addf %542, %543 : vector<2x32xf32>
    %545 = math.tanh %544 : vector<2x32xf32>
    %546 = arith.mulf %541, %545 : vector<2x32xf32>
    %c3_149 = arith.constant 3 : index
    %c0_150 = arith.constant 0 : index
    %c0_151 = arith.constant 0 : index
    %547 = vector.load %arg28[%c3_149, %c0_150, %c0_151] : memref<8x2x32xf32, #tpu.memory_space<vmem>>, vector<1x2x32xf32>
    %548 = vector.shape_cast %547 : vector<1x2x32xf32> to vector<2x32xf32>
    %549 = vector.shape_cast %546 : vector<2x32xf32> to vector<1x2x32xf32>
    tpu.vector_store %arg28[%c3_149, %c0_150, %c0_151], %549 {strides = array<i32>} : memref<8x2x32xf32, #tpu.memory_space<vmem>>, vector<1x2x32xf32>,
    %550 = vector.extract_strided_slice %456 {offsets = [4, 0, 0], sizes = [1, 2, 128], strides = [1, 1, 1]} : vector<8x2x128xf32> to vector<1x2x128xf32>
    %551 = vector.shape_cast %550 : vector<1x2x128xf32> to vector<2x128xf32>
    %cst_152 = arith.constant dense<0.000000e+00> : vector<2x128xf32>
    %552 = tpu.matmul %546, %457, %cst_152 {dimension_numbers = #tpu.dot_dimension_numbers<[1], [0], [0], [1], [0, 0, 1, 1], [], []>} : vector<2x32xf32>, vector<32x128xf32>, vector<2x128xf32> -> vector<2x128xf32>
    %553 = arith.addf %551, %552 : vector<2x128xf32>
    %554 = math.tanh %553 : vector<2x128xf32>
    %555 = arith.negf %553 : vector<2x128xf32>
    %556 = math.exp %555 : vector<2x128xf32>
    %cst_153 = arith.constant 1.000000e+00 : f32
    %557 = vector.broadcast %cst_153 : f32 to vector<2x128xf32>
    %558 = arith.addf %557, %556 : vector<2x128xf32>
    %559 = arith.divf %557, %558 : vector<2x128xf32>
    %560 = arith.select %5, %554, %559 : vector<2x128xi1>, vector<2x128xf32>
    %561 = vector.extract_strided_slice %560 {offsets = [0, 0], sizes = [2, 32], strides = [1, 1]} : vector<2x128xf32> to vector<2x32xf32>
    %562 = vector.extract_strided_slice %560 {offsets = [0, 32], sizes = [2, 32], strides = [1, 1]} : vector<2x128xf32> to vector<2x32xf32>
    %563 = vector.extract_strided_slice %560 {offsets = [0, 64], sizes = [2, 32], strides = [1, 1]} : vector<2x128xf32> to vector<2x32xf32>
    %564 = vector.extract_strided_slice %560 {offsets = [0, 96], sizes = [2, 32], strides = [1, 1]} : vector<2x128xf32> to vector<2x32xf32>
    %565 = arith.mulf %562, %544 : vector<2x32xf32>
    %566 = arith.mulf %561, %563 : vector<2x32xf32>
    %567 = arith.addf %565, %566 : vector<2x32xf32>
    %568 = math.tanh %567 : vector<2x32xf32>
    %569 = arith.mulf %564, %568 : vector<2x32xf32>
    %c4_154 = arith.constant 4 : index
    %c0_155 = arith.constant 0 : index
    %c0_156 = arith.constant 0 : index
    %570 = vector.load %arg28[%c4_154, %c0_155, %c0_156] : memref<8x2x32xf32, #tpu.memory_space<vmem>>, vector<1x2x32xf32>
    %571 = vector.shape_cast %570 : vector<1x2x32xf32> to vector<2x32xf32>
    %572 = vector.shape_cast %569 : vector<2x32xf32> to vector<1x2x32xf32>
    tpu.vector_store %arg28[%c4_154, %c0_155, %c0_156], %572 {strides = array<i32>} : memref<8x2x32xf32, #tpu.memory_space<vmem>>, vector<1x2x32xf32>,
    %573 = vector.extract_strided_slice %456 {offsets = [5, 0, 0], sizes = [1, 2, 128], strides = [1, 1, 1]} : vector<8x2x128xf32> to vector<1x2x128xf32>
    %574 = vector.shape_cast %573 : vector<1x2x128xf32> to vector<2x128xf32>
    %cst_157 = arith.constant dense<0.000000e+00> : vector<2x128xf32>
    %575 = tpu.matmul %569, %457, %cst_157 {dimension_numbers = #tpu.dot_dimension_numbers<[1], [0], [0], [1], [0, 0, 1, 1], [], []>} : vector<2x32xf32>, vector<32x128xf32>, vector<2x128xf32> -> vector<2x128xf32>
    %576 = arith.addf %574, %575 : vector<2x128xf32>
    %577 = math.tanh %576 : vector<2x128xf32>
    %578 = arith.negf %576 : vector<2x128xf32>
    %579 = math.exp %578 : vector<2x128xf32>
    %cst_158 = arith.constant 1.000000e+00 : f32
    %580 = vector.broadcast %cst_158 : f32 to vector<2x128xf32>
    %581 = arith.addf %580, %579 : vector<2x128xf32>
    %582 = arith.divf %580, %581 : vector<2x128xf32>
    %583 = arith.select %5, %577, %582 : vector<2x128xi1>, vector<2x128xf32>
    %584 = vector.extract_strided_slice %583 {offsets = [0, 0], sizes = [2, 32], strides = [1, 1]} : vector<2x128xf32> to vector<2x32xf32>
    %585 = vector.extract_strided_slice %583 {offsets = [0, 32], sizes = [2, 32], strides = [1, 1]} : vector<2x128xf32> to vector<2x32xf32>
    %586 = vector.extract_strided_slice %583 {offsets = [0, 64], sizes = [2, 32], strides = [1, 1]} : vector<2x128xf32> to vector<2x32xf32>
    %587 = vector.extract_strided_slice %583 {offsets = [0, 96], sizes = [2, 32], strides = [1, 1]} : vector<2x128xf32> to vector<2x32xf32>
    %588 = arith.mulf %585, %567 : vector<2x32xf32>
    %589 = arith.mulf %584, %586 : vector<2x32xf32>
    %590 = arith.addf %588, %589 : vector<2x32xf32>
    %591 = math.tanh %590 : vector<2x32xf32>
    %592 = arith.mulf %587, %591 : vector<2x32xf32>
    %c5_159 = arith.constant 5 : index
    %c0_160 = arith.constant 0 : index
    %c0_161 = arith.constant 0 : index
    %593 = vector.load %arg28[%c5_159, %c0_160, %c0_161] : memref<8x2x32xf32, #tpu.memory_space<vmem>>, vector<1x2x32xf32>
    %594 = vector.shape_cast %593 : vector<1x2x32xf32> to vector<2x32xf32>
    %595 = vector.shape_cast %592 : vector<2x32xf32> to vector<1x2x32xf32>
    tpu.vector_store %arg28[%c5_159, %c0_160, %c0_161], %595 {strides = array<i32>} : memref<8x2x32xf32, #tpu.memory_space<vmem>>, vector<1x2x32xf32>,
    %596 = vector.extract_strided_slice %456 {offsets = [6, 0, 0], sizes = [1, 2, 128], strides = [1, 1, 1]} : vector<8x2x128xf32> to vector<1x2x128xf32>
    %597 = vector.shape_cast %596 : vector<1x2x128xf32> to vector<2x128xf32>
    %cst_162 = arith.constant dense<0.000000e+00> : vector<2x128xf32>
    %598 = tpu.matmul %592, %457, %cst_162 {dimension_numbers = #tpu.dot_dimension_numbers<[1], [0], [0], [1], [0, 0, 1, 1], [], []>} : vector<2x32xf32>, vector<32x128xf32>, vector<2x128xf32> -> vector<2x128xf32>
    %599 = arith.addf %597, %598 : vector<2x128xf32>
    %600 = math.tanh %599 : vector<2x128xf32>
    %601 = arith.negf %599 : vector<2x128xf32>
    %602 = math.exp %601 : vector<2x128xf32>
    %cst_163 = arith.constant 1.000000e+00 : f32
    %603 = vector.broadcast %cst_163 : f32 to vector<2x128xf32>
    %604 = arith.addf %603, %602 : vector<2x128xf32>
    %605 = arith.divf %603, %604 : vector<2x128xf32>
    %606 = arith.select %5, %600, %605 : vector<2x128xi1>, vector<2x128xf32>
    %607 = vector.extract_strided_slice %606 {offsets = [0, 0], sizes = [2, 32], strides = [1, 1]} : vector<2x128xf32> to vector<2x32xf32>
    %608 = vector.extract_strided_slice %606 {offsets = [0, 32], sizes = [2, 32], strides = [1, 1]} : vector<2x128xf32> to vector<2x32xf32>
    %609 = vector.extract_strided_slice %606 {offsets = [0, 64], sizes = [2, 32], strides = [1, 1]} : vector<2x128xf32> to vector<2x32xf32>
    %610 = vector.extract_strided_slice %606 {offsets = [0, 96], sizes = [2, 32], strides = [1, 1]} : vector<2x128xf32> to vector<2x32xf32>
    %611 = arith.mulf %608, %590 : vector<2x32xf32>
    %612 = arith.mulf %607, %609 : vector<2x32xf32>
    %613 = arith.addf %611, %612 : vector<2x32xf32>
    %614 = math.tanh %613 : vector<2x32xf32>
    %615 = arith.mulf %610, %614 : vector<2x32xf32>
    %c6_164 = arith.constant 6 : index
    %c0_165 = arith.constant 0 : index
    %c0_166 = arith.constant 0 : index
    %616 = vector.load %arg28[%c6_164, %c0_165, %c0_166] : memref<8x2x32xf32, #tpu.memory_space<vmem>>, vector<1x2x32xf32>
    %617 = vector.shape_cast %616 : vector<1x2x32xf32> to vector<2x32xf32>
    %618 = vector.shape_cast %615 : vector<2x32xf32> to vector<1x2x32xf32>
    tpu.vector_store %arg28[%c6_164, %c0_165, %c0_166], %618 {strides = array<i32>} : memref<8x2x32xf32, #tpu.memory_space<vmem>>, vector<1x2x32xf32>,
    %619 = vector.extract_strided_slice %456 {offsets = [7, 0, 0], sizes = [1, 2, 128], strides = [1, 1, 1]} : vector<8x2x128xf32> to vector<1x2x128xf32>
    %620 = vector.shape_cast %619 : vector<1x2x128xf32> to vector<2x128xf32>
    %cst_167 = arith.constant dense<0.000000e+00> : vector<2x128xf32>
    %621 = tpu.matmul %615, %457, %cst_167 {dimension_numbers = #tpu.dot_dimension_numbers<[1], [0], [0], [1], [0, 0, 1, 1], [], []>} : vector<2x32xf32>, vector<32x128xf32>, vector<2x128xf32> -> vector<2x128xf32>
    %622 = arith.addf %620, %621 : vector<2x128xf32>
    %623 = math.tanh %622 : vector<2x128xf32>
    %624 = arith.negf %622 : vector<2x128xf32>
    %625 = math.exp %624 : vector<2x128xf32>
    %cst_168 = arith.constant 1.000000e+00 : f32
    %626 = vector.broadcast %cst_168 : f32 to vector<2x128xf32>
    %627 = arith.addf %626, %625 : vector<2x128xf32>
    %628 = arith.divf %626, %627 : vector<2x128xf32>
    %629 = arith.select %5, %623, %628 : vector<2x128xi1>, vector<2x128xf32>
    %630 = vector.extract_strided_slice %629 {offsets = [0, 0], sizes = [2, 32], strides = [1, 1]} : vector<2x128xf32> to vector<2x32xf32>
    %631 = vector.extract_strided_slice %629 {offsets = [0, 32], sizes = [2, 32], strides = [1, 1]} : vector<2x128xf32> to vector<2x32xf32>
    %632 = vector.extract_strided_slice %629 {offsets = [0, 64], sizes = [2, 32], strides = [1, 1]} : vector<2x128xf32> to vector<2x32xf32>
    %633 = vector.extract_strided_slice %629 {offsets = [0, 96], sizes = [2, 32], strides = [1, 1]} : vector<2x128xf32> to vector<2x32xf32>
    %634 = arith.mulf %631, %613 : vector<2x32xf32>
    %635 = arith.mulf %630, %632 : vector<2x32xf32>
    %636 = arith.addf %634, %635 : vector<2x32xf32>
    %637 = math.tanh %636 : vector<2x32xf32>
    %638 = arith.mulf %633, %637 : vector<2x32xf32>
    %c7_169 = arith.constant 7 : index
    %c0_170 = arith.constant 0 : index
    %c0_171 = arith.constant 0 : index
    %639 = vector.load %arg28[%c7_169, %c0_170, %c0_171] : memref<8x2x32xf32, #tpu.memory_space<vmem>>, vector<1x2x32xf32>
    %640 = vector.shape_cast %639 : vector<1x2x32xf32> to vector<2x32xf32>
    %641 = vector.shape_cast %638 : vector<2x32xf32> to vector<1x2x32xf32>
    tpu.vector_store %arg28[%c7_169, %c0_170, %c0_171], %641 {strides = array<i32>} : memref<8x2x32xf32, #tpu.memory_space<vmem>>, vector<1x2x32xf32>,
    %c0_172 = arith.constant 0 : index
    %c0_173 = arith.constant 0 : index
    %c0_174 = arith.constant 0 : index
    %642 = vector.load %arg28[%c0_172, %c0_173, %c0_174] : memref<8x2x32xf32, #tpu.memory_space<vmem>>, vector<8x2x32xf32>
    %c0_175 = arith.constant 0 : index
    %c0_176 = arith.constant 0 : index
    %643 = vector.load %arg10[%c0_175, %c0_176] : memref<32x128xf32, #tpu.memory_space<vmem>>, vector<32x128xf32>
    "tpu.trace_start"() <{level = 10 : i32, message = "tbd,dg->tbg"}> : () -> ()
    %cst_177 = arith.constant dense<0.000000e+00> : vector<8x2x128xf32>
    %644 = tpu.matmul %642, %643, %cst_177 {dimension_numbers = #tpu.dot_dimension_numbers<[2], [0], [0, 1], [1], [0, 0, 0, 1, 1, 1], [], []>} : vector<8x2x32xf32>, vector<32x128xf32>, vector<8x2x128xf32> -> vector<8x2x128xf32>
    "tpu.trace_stop"() : () -> ()
    %c0_178 = arith.constant 0 : index
    %c0_179 = arith.constant 0 : index
    %645 = vector.load %arg12[%c0_178, %c0_179] : memref<1x128xf32, #tpu.memory_space<vmem>>, vector<1x128xf32>
    %646 = vector.shape_cast %645 : vector<1x128xf32> to vector<1x1x128xf32>
    %647 = vector.broadcast %646 : vector<1x1x128xf32> to vector<8x2x128xf32>
    %648 = arith.addf %644, %647 : vector<8x2x128xf32>
    %c0_180 = arith.constant 0 : index
    %c0_181 = arith.constant 0 : index
    %649 = vector.load %arg11[%c0_180, %c0_181] : memref<32x128xf32, #tpu.memory_space<vmem>>, vector<32x128xf32>
    %650 = vector.extract_strided_slice %648 {offsets = [0, 0, 0], sizes = [1, 2, 128], strides = [1, 1, 1]} : vector<8x2x128xf32> to vector<1x2x128xf32>
    %651 = vector.shape_cast %650 : vector<1x2x128xf32> to vector<2x128xf32>
    %cst_182 = arith.constant dense<0.000000e+00> : vector<2x128xf32>
    %652 = tpu.matmul %387, %649, %cst_182 {dimension_numbers = #tpu.dot_dimension_numbers<[1], [0], [0], [1], [0, 0, 1, 1], [], []>} : vector<2x32xf32>, vector<32x128xf32>, vector<2x128xf32> -> vector<2x128xf32>
    %653 = arith.addf %651, %652 : vector<2x128xf32>
    %654 = math.tanh %653 : vector<2x128xf32>
    %655 = arith.negf %653 : vector<2x128xf32>
    %656 = math.exp %655 : vector<2x128xf32>
    %cst_183 = arith.constant 1.000000e+00 : f32
    %657 = vector.broadcast %cst_183 : f32 to vector<2x128xf32>
    %658 = arith.addf %657, %656 : vector<2x128xf32>
    %659 = arith.divf %657, %658 : vector<2x128xf32>
    %660 = arith.select %5, %654, %659 : vector<2x128xi1>, vector<2x128xf32>
    %661 = vector.extract_strided_slice %660 {offsets = [0, 0], sizes = [2, 32], strides = [1, 1]} : vector<2x128xf32> to vector<2x32xf32>
    %662 = vector.extract_strided_slice %660 {offsets = [0, 32], sizes = [2, 32], strides = [1, 1]} : vector<2x128xf32> to vector<2x32xf32>
    %663 = vector.extract_strided_slice %660 {offsets = [0, 64], sizes = [2, 32], strides = [1, 1]} : vector<2x128xf32> to vector<2x32xf32>
    %664 = vector.extract_strided_slice %660 {offsets = [0, 96], sizes = [2, 32], strides = [1, 1]} : vector<2x128xf32> to vector<2x32xf32>
    %665 = arith.mulf %662, %385 : vector<2x32xf32>
    %666 = arith.mulf %661, %663 : vector<2x32xf32>
    %667 = arith.addf %665, %666 : vector<2x32xf32>
    %668 = math.tanh %667 : vector<2x32xf32>
    %669 = arith.mulf %664, %668 : vector<2x32xf32>
    %670 = vector.extract_strided_slice %648 {offsets = [1, 0, 0], sizes = [1, 2, 128], strides = [1, 1, 1]} : vector<8x2x128xf32> to vector<1x2x128xf32>
    %671 = vector.shape_cast %670 : vector<1x2x128xf32> to vector<2x128xf32>
    %cst_184 = arith.constant dense<0.000000e+00> : vector<2x128xf32>
    %672 = tpu.matmul %669, %649, %cst_184 {dimension_numbers = #tpu.dot_dimension_numbers<[1], [0], [0], [1], [0, 0, 1, 1], [], []>} : vector<2x32xf32>, vector<32x128xf32>, vector<2x128xf32> -> vector<2x128xf32>
    %673 = arith.addf %671, %672 : vector<2x128xf32>
    %674 = math.tanh %673 : vector<2x128xf32>
    %675 = arith.negf %673 : vector<2x128xf32>
    %676 = math.exp %675 : vector<2x128xf32>
    %cst_185 = arith.constant 1.000000e+00 : f32
    %677 = vector.broadcast %cst_185 : f32 to vector<2x128xf32>
    %678 = arith.addf %677, %676 : vector<2x128xf32>
    %679 = arith.divf %677, %678 : vector<2x128xf32>
    %680 = arith.select %5, %674, %679 : vector<2x128xi1>, vector<2x128xf32>
    %681 = vector.extract_strided_slice %680 {offsets = [0, 0], sizes = [2, 32], strides = [1, 1]} : vector<2x128xf32> to vector<2x32xf32>
    %682 = vector.extract_strided_slice %680 {offsets = [0, 32], sizes = [2, 32], strides = [1, 1]} : vector<2x128xf32> to vector<2x32xf32>
    %683 = vector.extract_strided_slice %680 {offsets = [0, 64], sizes = [2, 32], strides = [1, 1]} : vector<2x128xf32> to vector<2x32xf32>
    %684 = vector.extract_strided_slice %680 {offsets = [0, 96], sizes = [2, 32], strides = [1, 1]} : vector<2x128xf32> to vector<2x32xf32>
    %685 = arith.mulf %682, %667 : vector<2x32xf32>
    %686 = arith.mulf %681, %683 : vector<2x32xf32>
    %687 = arith.addf %685, %686 : vector<2x32xf32>
    %688 = math.tanh %687 : vector<2x32xf32>
    %689 = arith.mulf %684, %688 : vector<2x32xf32>
    %690 = vector.extract_strided_slice %648 {offsets = [2, 0, 0], sizes = [1, 2, 128], strides = [1, 1, 1]} : vector<8x2x128xf32> to vector<1x2x128xf32>
    %691 = vector.shape_cast %690 : vector<1x2x128xf32> to vector<2x128xf32>
    %cst_186 = arith.constant dense<0.000000e+00> : vector<2x128xf32>
    %692 = tpu.matmul %689, %649, %cst_186 {dimension_numbers = #tpu.dot_dimension_numbers<[1], [0], [0], [1], [0, 0, 1, 1], [], []>} : vector<2x32xf32>, vector<32x128xf32>, vector<2x128xf32> -> vector<2x128xf32>
    %693 = arith.addf %691, %692 : vector<2x128xf32>
    %694 = math.tanh %693 : vector<2x128xf32>
    %695 = arith.negf %693 : vector<2x128xf32>
    %696 = math.exp %695 : vector<2x128xf32>
    %cst_187 = arith.constant 1.000000e+00 : f32
    %697 = vector.broadcast %cst_187 : f32 to vector<2x128xf32>
    %698 = arith.addf %697, %696 : vector<2x128xf32>
    %699 = arith.divf %697, %698 : vector<2x128xf32>
    %700 = arith.select %5, %694, %699 : vector<2x128xi1>, vector<2x128xf32>
    %701 = vector.extract_strided_slice %700 {offsets = [0, 0], sizes = [2, 32], strides = [1, 1]} : vector<2x128xf32> to vector<2x32xf32>
    %702 = vector.extract_strided_slice %700 {offsets = [0, 32], sizes = [2, 32], strides = [1, 1]} : vector<2x128xf32> to vector<2x32xf32>
    %703 = vector.extract_strided_slice %700 {offsets = [0, 64], sizes = [2, 32], strides = [1, 1]} : vector<2x128xf32> to vector<2x32xf32>
    %704 = vector.extract_strided_slice %700 {offsets = [0, 96], sizes = [2, 32], strides = [1, 1]} : vector<2x128xf32> to vector<2x32xf32>
    %705 = arith.mulf %702, %687 : vector<2x32xf32>
    %706 = arith.mulf %701, %703 : vector<2x32xf32>
    %707 = arith.addf %705, %706 : vector<2x32xf32>
    %708 = math.tanh %707 : vector<2x32xf32>
    %709 = arith.mulf %704, %708 : vector<2x32xf32>
    %710 = vector.extract_strided_slice %648 {offsets = [3, 0, 0], sizes = [1, 2, 128], strides = [1, 1, 1]} : vector<8x2x128xf32> to vector<1x2x128xf32>
    %711 = vector.shape_cast %710 : vector<1x2x128xf32> to vector<2x128xf32>
    %cst_188 = arith.constant dense<0.000000e+00> : vector<2x128xf32>
    %712 = tpu.matmul %709, %649, %cst_188 {dimension_numbers = #tpu.dot_dimension_numbers<[1], [0], [0], [1], [0, 0, 1, 1], [], []>} : vector<2x32xf32>, vector<32x128xf32>, vector<2x128xf32> -> vector<2x128xf32>
    %713 = arith.addf %711, %712 : vector<2x128xf32>
    %714 = math.tanh %713 : vector<2x128xf32>
    %715 = arith.negf %713 : vector<2x128xf32>
    %716 = math.exp %715 : vector<2x128xf32>
    %cst_189 = arith.constant 1.000000e+00 : f32
    %717 = vector.broadcast %cst_189 : f32 to vector<2x128xf32>
    %718 = arith.addf %717, %716 : vector<2x128xf32>
    %719 = arith.divf %717, %718 : vector<2x128xf32>
    %720 = arith.select %5, %714, %719 : vector<2x128xi1>, vector<2x128xf32>
    %721 = vector.extract_strided_slice %720 {offsets = [0, 0], sizes = [2, 32], strides = [1, 1]} : vector<2x128xf32> to vector<2x32xf32>
    %722 = vector.extract_strided_slice %720 {offsets = [0, 32], sizes = [2, 32], strides = [1, 1]} : vector<2x128xf32> to vector<2x32xf32>
    %723 = vector.extract_strided_slice %720 {offsets = [0, 64], sizes = [2, 32], strides = [1, 1]} : vector<2x128xf32> to vector<2x32xf32>
    %724 = vector.extract_strided_slice %720 {offsets = [0, 96], sizes = [2, 32], strides = [1, 1]} : vector<2x128xf32> to vector<2x32xf32>
    %725 = arith.mulf %722, %707 : vector<2x32xf32>
    %726 = arith.mulf %721, %723 : vector<2x32xf32>
    %727 = arith.addf %725, %726 : vector<2x32xf32>
    %728 = math.tanh %727 : vector<2x32xf32>
    %729 = arith.mulf %724, %728 : vector<2x32xf32>
    %730 = vector.extract_strided_slice %648 {offsets = [4, 0, 0], sizes = [1, 2, 128], strides = [1, 1, 1]} : vector<8x2x128xf32> to vector<1x2x128xf32>
    %731 = vector.shape_cast %730 : vector<1x2x128xf32> to vector<2x128xf32>
    %cst_190 = arith.constant dense<0.000000e+00> : vector<2x128xf32>
    %732 = tpu.matmul %729, %649, %cst_190 {dimension_numbers = #tpu.dot_dimension_numbers<[1], [0], [0], [1], [0, 0, 1, 1], [], []>} : vector<2x32xf32>, vector<32x128xf32>, vector<2x128xf32> -> vector<2x128xf32>
    %733 = arith.addf %731, %732 : vector<2x128xf32>
    %734 = math.tanh %733 : vector<2x128xf32>
    %735 = arith.negf %733 : vector<2x128xf32>
    %736 = math.exp %735 : vector<2x128xf32>
    %cst_191 = arith.constant 1.000000e+00 : f32
    %737 = vector.broadcast %cst_191 : f32 to vector<2x128xf32>
    %738 = arith.addf %737, %736 : vector<2x128xf32>
    %739 = arith.divf %737, %738 : vector<2x128xf32>
    %740 = arith.select %5, %734, %739 : vector<2x128xi1>, vector<2x128xf32>
    %741 = vector.extract_strided_slice %740 {offsets = [0, 0], sizes = [2, 32], strides = [1, 1]} : vector<2x128xf32> to vector<2x32xf32>
    %742 = vector.extract_strided_slice %740 {offsets = [0, 32], sizes = [2, 32], strides = [1, 1]} : vector<2x128xf32> to vector<2x32xf32>
    %743 = vector.extract_strided_slice %740 {offsets = [0, 64], sizes = [2, 32], strides = [1, 1]} : vector<2x128xf32> to vector<2x32xf32>
    %744 = vector.extract_strided_slice %740 {offsets = [0, 96], sizes = [2, 32], strides = [1, 1]} : vector<2x128xf32> to vector<2x32xf32>
    %745 = arith.mulf %742, %727 : vector<2x32xf32>
    %746 = arith.mulf %741, %743 : vector<2x32xf32>
    %747 = arith.addf %745, %746 : vector<2x32xf32>
    %748 = math.tanh %747 : vector<2x32xf32>
    %749 = arith.mulf %744, %748 : vector<2x32xf32>
    %750 = vector.extract_strided_slice %648 {offsets = [5, 0, 0], sizes = [1, 2, 128], strides = [1, 1, 1]} : vector<8x2x128xf32> to vector<1x2x128xf32>
    %751 = vector.shape_cast %750 : vector<1x2x128xf32> to vector<2x128xf32>
    %cst_192 = arith.constant dense<0.000000e+00> : vector<2x128xf32>
    %752 = tpu.matmul %749, %649, %cst_192 {dimension_numbers = #tpu.dot_dimension_numbers<[1], [0], [0], [1], [0, 0, 1, 1], [], []>} : vector<2x32xf32>, vector<32x128xf32>, vector<2x128xf32> -> vector<2x128xf32>
    %753 = arith.addf %751, %752 : vector<2x128xf32>
    %754 = math.tanh %753 : vector<2x128xf32>
    %755 = arith.negf %753 : vector<2x128xf32>
    %756 = math.exp %755 : vector<2x128xf32>
    %cst_193 = arith.constant 1.000000e+00 : f32
    %757 = vector.broadcast %cst_193 : f32 to vector<2x128xf32>
    %758 = arith.addf %757, %756 : vector<2x128xf32>
    %759 = arith.divf %757, %758 : vector<2x128xf32>
    %760 = arith.select %5, %754, %759 : vector<2x128xi1>, vector<2x128xf32>
    %761 = vector.extract_strided_slice %760 {offsets = [0, 0], sizes = [2, 32], strides = [1, 1]} : vector<2x128xf32> to vector<2x32xf32>
    %762 = vector.extract_strided_slice %760 {offsets = [0, 32], sizes = [2, 32], strides = [1, 1]} : vector<2x128xf32> to vector<2x32xf32>
    %763 = vector.extract_strided_slice %760 {offsets = [0, 64], sizes = [2, 32], strides = [1, 1]} : vector<2x128xf32> to vector<2x32xf32>
    %764 = vector.extract_strided_slice %760 {offsets = [0, 96], sizes = [2, 32], strides = [1, 1]} : vector<2x128xf32> to vector<2x32xf32>
    %765 = arith.mulf %762, %747 : vector<2x32xf32>
    %766 = arith.mulf %761, %763 : vector<2x32xf32>
    %767 = arith.addf %765, %766 : vector<2x32xf32>
    %768 = math.tanh %767 : vector<2x32xf32>
    %769 = arith.mulf %764, %768 : vector<2x32xf32>
    %770 = vector.extract_strided_slice %648 {offsets = [6, 0, 0], sizes = [1, 2, 128], strides = [1, 1, 1]} : vector<8x2x128xf32> to vector<1x2x128xf32>
    %771 = vector.shape_cast %770 : vector<1x2x128xf32> to vector<2x128xf32>
    %cst_194 = arith.constant dense<0.000000e+00> : vector<2x128xf32>
    %772 = tpu.matmul %769, %649, %cst_194 {dimension_numbers = #tpu.dot_dimension_numbers<[1], [0], [0], [1], [0, 0, 1, 1], [], []>} : vector<2x32xf32>, vector<32x128xf32>, vector<2x128xf32> -> vector<2x128xf32>
    %773 = arith.addf %771, %772 : vector<2x128xf32>
    %774 = math.tanh %773 : vector<2x128xf32>
    %775 = arith.negf %773 : vector<2x128xf32>
    %776 = math.exp %775 : vector<2x128xf32>
    %cst_195 = arith.constant 1.000000e+00 : f32
    %777 = vector.broadcast %cst_195 : f32 to vector<2x128xf32>
    %778 = arith.addf %777, %776 : vector<2x128xf32>
    %779 = arith.divf %777, %778 : vector<2x128xf32>
    %780 = arith.select %5, %774, %779 : vector<2x128xi1>, vector<2x128xf32>
    %781 = vector.extract_strided_slice %780 {offsets = [0, 0], sizes = [2, 32], strides = [1, 1]} : vector<2x128xf32> to vector<2x32xf32>
    %782 = vector.extract_strided_slice %780 {offsets = [0, 32], sizes = [2, 32], strides = [1, 1]} : vector<2x128xf32> to vector<2x32xf32>
    %783 = vector.extract_strided_slice %780 {offsets = [0, 64], sizes = [2, 32], strides = [1, 1]} : vector<2x128xf32> to vector<2x32xf32>
    %784 = vector.extract_strided_slice %780 {offsets = [0, 96], sizes = [2, 32], strides = [1, 1]} : vector<2x128xf32> to vector<2x32xf32>
    %785 = arith.mulf %782, %767 : vector<2x32xf32>
    %786 = arith.mulf %781, %783 : vector<2x32xf32>
    %787 = arith.addf %785, %786 : vector<2x32xf32>
    %788 = math.tanh %787 : vector<2x32xf32>
    %789 = arith.mulf %784, %788 : vector<2x32xf32>
    %790 = vector.extract_strided_slice %648 {offsets = [7, 0, 0], sizes = [1, 2, 128], strides = [1, 1, 1]} : vector<8x2x128xf32> to vector<1x2x128xf32>
    %791 = vector.shape_cast %790 : vector<1x2x128xf32> to vector<2x128xf32>
    %cst_196 = arith.constant dense<0.000000e+00> : vector<2x128xf32>
    %792 = tpu.matmul %789, %649, %cst_196 {dimension_numbers = #tpu.dot_dimension_numbers<[1], [0], [0], [1], [0, 0, 1, 1], [], []>} : vector<2x32xf32>, vector<32x128xf32>, vector<2x128xf32> -> vector<2x128xf32>
    %793 = arith.addf %791, %792 : vector<2x128xf32>
    %794 = math.tanh %793 : vector<2x128xf32>
    %795 = arith.negf %793 : vector<2x128xf32>
    %796 = math.exp %795 : vector<2x128xf32>
    %cst_197 = arith.constant 1.000000e+00 : f32
    %797 = vector.broadcast %cst_197 : f32 to vector<2x128xf32>
    %798 = arith.addf %797, %796 : vector<2x128xf32>
    %799 = arith.divf %797, %798 : vector<2x128xf32>
    %800 = arith.select %5, %794, %799 : vector<2x128xi1>, vector<2x128xf32>
    %801 = vector.extract_strided_slice %800 {offsets = [0, 0], sizes = [2, 32], strides = [1, 1]} : vector<2x128xf32> to vector<2x32xf32>
    %802 = vector.extract_strided_slice %800 {offsets = [0, 32], sizes = [2, 32], strides = [1, 1]} : vector<2x128xf32> to vector<2x32xf32>
    %803 = vector.extract_strided_slice %800 {offsets = [0, 64], sizes = [2, 32], strides = [1, 1]} : vector<2x128xf32> to vector<2x32xf32>
    %804 = vector.extract_strided_slice %800 {offsets = [0, 96], sizes = [2, 32], strides = [1, 1]} : vector<2x128xf32> to vector<2x32xf32>
    %805 = arith.mulf %802, %787 : vector<2x32xf32>
    %806 = arith.mulf %801, %803 : vector<2x32xf32>
    %807 = arith.addf %805, %806 : vector<2x32xf32>
    %808 = math.tanh %807 : vector<2x32xf32>
    %809 = arith.mulf %804, %808 : vector<2x32xf32>
    %c0_198 = arith.constant 0 : index
    %c0_199 = arith.constant 0 : index
    %810 = vector.load %arg17[%c0_198, %c0_199] : memref<32x32xf32, #tpu.memory_space<vmem>>, vector<32x32xf32>
    %cst_200 = arith.constant dense<0.000000e+00> : vector<2x32xf32>
    %811 = tpu.matmul %809, %810, %cst_200 {dimension_numbers = #tpu.dot_dimension_numbers<[1], [0], [0], [1], [0, 0, 1, 1], [], []>} : vector<2x32xf32>, vector<32x32xf32>, vector<2x32xf32> -> vector<2x32xf32>
    %c0_201 = arith.constant 0 : index
    %c0_202 = arith.constant 0 : index
    %812 = vector.load %arg18[%c0_201, %c0_202] : memref<1x32xf32, #tpu.memory_space<vmem>>, vector<1x32xf32>
    %813 = vector.broadcast %812 : vector<1x32xf32> to vector<2x32xf32>
    %814 = arith.addf %811, %813 : vector<2x32xf32>
    %c0_203 = arith.constant 0 : index
    %c0_204 = arith.constant 0 : index
    %815 = vector.load %arg19[%c0_203, %c0_204] : memref<1x32xf32, #tpu.memory_space<vmem>>, vector<1x32xf32>
    %816 = vector.broadcast %815 : vector<1x32xf32> to vector<2x32xf32>
    %817 = arith.mulf %814, %816 : vector<2x32xf32>
    %c0_205 = arith.constant 0 : index
    %c0_206 = arith.constant 0 : index
    %818 = vector.load %arg20[%c0_205, %c0_206] : memref<1x32xf32, #tpu.memory_space<vmem>>, vector<1x32xf32>
    %819 = vector.broadcast %818 : vector<1x32xf32> to vector<2x32xf32>
    %820 = arith.addf %817, %819 : vector<2x32xf32>
    %cst_207 = arith.constant 0.000000e+00 : f32
    %821 = vector.broadcast %cst_207 : f32 to vector<2x32xf32>
    %822 = arith.maximumf %820, %821 : vector<2x32xf32>
    %c0_208 = arith.constant 0 : index
    %c0_209 = arith.constant 0 : index
    %823 = vector.load %arg21[%c0_208, %c0_209] : memref<32x32xf32, #tpu.memory_space<vmem>>, vector<32x32xf32>
    %cst_210 = arith.constant dense<0.000000e+00> : vector<2x32xf32>
    %824 = tpu.matmul %822, %823, %cst_210 {dimension_numbers = #tpu.dot_dimension_numbers<[1], [0], [0], [1], [0, 0, 1, 1], [], []>} : vector<2x32xf32>, vector<32x32xf32>, vector<2x32xf32> -> vector<2x32xf32>
    %c0_211 = arith.constant 0 : index
    %c0_212 = arith.constant 0 : index
    %825 = vector.load %arg22[%c0_211, %c0_212] : memref<1x32xf32, #tpu.memory_space<vmem>>, vector<1x32xf32>
    %826 = vector.broadcast %825 : vector<1x32xf32> to vector<2x32xf32>
    %827 = arith.addf %824, %826 : vector<2x32xf32>
    %c0_213 = arith.constant 0 : index
    %c0_214 = arith.constant 0 : index
    %828 = vector.load %arg23[%c0_213, %c0_214] : memref<1x32xf32, #tpu.memory_space<vmem>>, vector<1x32xf32>
    %829 = vector.broadcast %828 : vector<1x32xf32> to vector<2x32xf32>
    %830 = arith.mulf %827, %829 : vector<2x32xf32>
    %c0_215 = arith.constant 0 : index
    %c0_216 = arith.constant 0 : index
    %831 = vector.load %arg24[%c0_215, %c0_216] : memref<1x32xf32, #tpu.memory_space<vmem>>, vector<1x32xf32>
    %832 = vector.broadcast %831 : vector<1x32xf32> to vector<2x32xf32>
    %833 = arith.addf %830, %832 : vector<2x32xf32>
    %cst_217 = arith.constant 0.000000e+00 : f32
    %834 = vector.broadcast %cst_217 : f32 to vector<2x32xf32>
    %835 = arith.maximumf %833, %834 : vector<2x32xf32>
    %c0_218 = arith.constant 0 : index
    %c0_219 = arith.constant 0 : index
    %836 = vector.load %arg25[%c0_218, %c0_219] : memref<32x8xf32, #tpu.memory_space<vmem>>, vector<32x8xf32>
    %cst_220 = arith.constant dense<0.000000e+00> : vector<2x8xf32>
    %837 = tpu.matmul %835, %836, %cst_220 {dimension_numbers = #tpu.dot_dimension_numbers<[1], [0], [0], [1], [0, 0, 1, 1], [], []>} : vector<2x32xf32>, vector<32x8xf32>, vector<2x8xf32> -> vector<2x8xf32>
    %c0_221 = arith.constant 0 : index
    %c0_222 = arith.constant 0 : index
    %838 = vector.load %arg26[%c0_221, %c0_222] : memref<1x8xf32, #tpu.memory_space<vmem>>, vector<1x8xf32>
    %839 = vector.broadcast %838 : vector<1x8xf32> to vector<2x8xf32>
    %840 = arith.addf %837, %839 : vector<2x8xf32>
    %c0_223 = arith.constant 0 : index
    %c0_224 = arith.constant 0 : index
    %841 = vector.load %arg27[%c0_223, %c0_224] : memref<2x8xf32, #tpu.memory_space<vmem>>, vector<2x8xf32>
    tpu.vector_store %arg27[%c0_223, %c0_224], %840 {strides = array<i32>} : memref<2x8xf32, #tpu.memory_space<vmem>>, vector<2x8xf32>,
    return
  }
}

</mosaic_0001>

<llo_original>
// kernel: _lambda_.1
$region0: #{_lambda_.1}
  #allocation0 [shape = 'u32[]', space=smem, size = 0x4, offset = 0x4, fixed_abs, tag = 'smem constant byte address 0x4 - core index']
  #allocation1 [shape = 'u32[72,128]{1,0:T(1,128)}', space=vmem, size = 0x9000, scoped, tag = 'internal scratch']
  #allocation2 [shape = 'f32[8,2,32]{2,1,0:T(2,128)}', space=vmem, size = 0x2000, scoped, tag = 'scratch operand']
  %s0 = inlined_call_operand.vmem [shape: f32[8,2,16], index: 0, kind: input, shape index: {}]
  %s1 = inlined_call_operand.hbm [shape: f32[16,128], index: 1, kind: input, shape index: {}]
  %s2 = inlined_call_operand.vmem [shape: f32[32,128], index: 2, kind: input, shape index: {}]
  %s3 = inlined_call_operand.vmem [shape: f32[1,128], index: 3, kind: input, shape index: {}]
  %s4 = inlined_call_operand.vmem [shape: f32[32,128], index: 4, kind: input, shape index: {}]
  %s5 = inlined_call_operand.hbm [shape: f32[32,128], index: 5, kind: input, shape index: {}]
  %s6 = inlined_call_operand.vmem [shape: f32[1,128], index: 6, kind: input, shape index: {}]
  %s7 = inlined_call_operand.hbm [shape: f32[32,128], index: 7, kind: input, shape index: {}]
  %s8 = inlined_call_operand.hbm [shape: f32[32,128], index: 8, kind: input, shape index: {}]
  %s9 = inlined_call_operand.vmem [shape: f32[1,128], index: 9, kind: input, shape index: {}]
  %s10 = inlined_call_operand.hbm [shape: f32[32,128], index: 10, kind: input, shape index: {}]
  %s11 = inlined_call_operand.hbm [shape: f32[32,128], index: 11, kind: input, shape index: {}]
  %s12 = inlined_call_operand.vmem [shape: f32[1,128], index: 12, kind: input, shape index: {}]
  %s13 = inlined_call_operand.hbm [shape: f32[32,96], index: 13, kind: input, shape index: {}]
  %s14 = inlined_call_operand.hbm [shape: f32[1,96], index: 14, kind: input, shape index: {}]
  %s15 = inlined_call_operand.hbm [shape: f32[32,32], index: 15, kind: input, shape index: {}]
  %s16 = inlined_call_operand.hbm [shape: f32[1,32], index: 16, kind: input, shape index: {}]
  %s17 = inlined_call_operand.hbm [shape: f32[32,32], index: 17, kind: input, shape index: {}]
  %s18 = inlined_call_operand.vmem [shape: f32[1,32], index: 18, kind: input, shape index: {}]
  %s19 = inlined_call_operand.vmem [shape: f32[1,32], index: 19, kind: input, shape index: {}]
  %s20 = inlined_call_operand.vmem [shape: f32[1,32], index: 20, kind: input, shape index: {}]
  %s21 = inlined_call_operand.hbm [shape: f32[32,32], index: 21, kind: input, shape index: {}]
  %s22 = inlined_call_operand.vmem [shape: f32[1,32], index: 22, kind: input, shape index: {}]
  %s23 = inlined_call_operand.vmem [shape: f32[1,32], index: 23, kind: input, shape index: {}]
  %s24 = inlined_call_operand.vmem [shape: f32[1,32], index: 24, kind: input, shape index: {}]
  %s25 = inlined_call_operand.vmem [shape: f32[32,8], index: 25, kind: input, shape index: {}]
  %s26 = inlined_call_operand.vmem [shape: f32[1,8], index: 26, kind: input, shape index: {}]
  %s27 = inlined_call_operand.hbm [shape: f32[2,8], index: 27, kind: output, shape index: {}]
  %s28 = sld [smem:[#allocation0]]
  $region166: #{_lambda_.1} parent=0
    _
  %s30 = ssub.s32 1, %s28
  %s31 = scalar_select 0, %s30, %s28
  $region1: #{_lambda_.1} parent=0
    #allocation3 [shape = 'u8[8192]{0}', space=vmem, size = 0x2000, scoped, tag = 'input window, operand 1, single buffered']
    #allocation4 [shape = 's32[1]{0}', space=sflag, size = 0x4, scoped, tag = 'scoped memory for _lambda_.1']
    #allocation5 [shape = 's32[1]{0}', space=sflag, size = 0x4, scoped, tag = 'scoped memory for _lambda_.1']
    #allocation6 [shape = 'u8[16384]{0}', space=vmem, size = 0x4000, scoped, tag = 'input window, operand 5, single buffered']
    #allocation7 [shape = 's32[1]{0}', space=sflag, size = 0x4, scoped, tag = 'scoped memory for _lambda_.1']
    #allocation8 [shape = 'u8[16384]{0}', space=vmem, size = 0x4000, scoped, tag = 'input window, operand 7, single buffered']
    #allocation9 [shape = 'u8[16384]{0}', space=vmem, size = 0x4000, scoped, tag = 'input window, operand 8, single buffered']
    #allocation10 [shape = 's32[1]{0}', space=sflag, size = 0x4, scoped, tag = 'scoped memory for _lambda_.1']
    #allocation11 [shape = 'u8[16384]{0}', space=vmem, size = 0x4000, scoped, tag = 'input window, operand 10, single buffered']
    #allocation12 [shape = 'u8[16384]{0}', space=vmem, size = 0x4000, scoped, tag = 'input window, operand 11, single buffered']
    #allocation13 [shape = 's32[1]{0}', space=sflag, size = 0x4, scoped, tag = 'scoped memory for _lambda_.1']
    #allocation14 [shape = 'u8[16384]{0}', space=vmem, size = 0x4000, scoped, tag = 'input window, operand 13, single buffered']
    #allocation15 [shape = 'u8[512]{0}', space=vmem, size = 0x400, scoped, tag = 'input window, operand 14, single buffered']
    #allocation16 [shape = 's32[1]{0}', space=sflag, size = 0x4, scoped, tag = 'scoped memory for _lambda_.1']
    #allocation17 [shape = 'u8[16384]{0}', space=vmem, size = 0x4000, scoped, tag = 'input window, operand 15, single buffered']
    #allocation18 [shape = 'u8[512]{0}', space=vmem, size = 0x400, scoped, tag = 'input window, operand 16, single buffered']
    #allocation19 [shape = 's32[1]{0}', space=sflag, size = 0x4, scoped, tag = 'scoped memory for _lambda_.1']
    #allocation20 [shape = 'u8[16384]{0}', space=vmem, size = 0x4000, scoped, tag = 'input window, operand 17, single buffered']
    #allocation21 [shape = 'u8[16384]{0}', space=vmem, size = 0x4000, scoped, tag = 'input window, operand 21, single buffered']
    #allocation22 [shape = 's32[1]{0}', space=sflag, size = 0x4, scoped, tag = 'scoped memory for _lambda_.1']
    #allocation23 [shape = 'u8[1024]{0}', space=vmem, size = 0x400, scoped, tag = 'output window, operand 0, single buffered']
    %32 = vsyncpa [#allocation4], 0
    %33 = vsyncpa [#allocation7], 0
    %34 = vsyncpa [#allocation10], 0
    %35 = vsyncpa [#allocation13], 0
    %36 = vsyncpa [#allocation16], 0
    %37 = vsyncpa [#allocation19], 0
    %38 = vsyncpa [#allocation22], 0
    %39 = vsyncpa [#allocation5], 0
    // Predicated region
    $region2: #{_lambda_.1} parent=1 // pred_check
      _
    $region3: #{_lambda_.1} parent=1 // pred_check_branch
      %41 = sbr.rel (0) target = $region5
    $region4: #{_lambda_.1} parent=1 // pred_region
      _
    $region5: #{_lambda_.1} parent=1 // pred_fallthru
      _
    // Predicated region
    $region6: #{_lambda_.1} parent=1 // pred_check
      _
    $region7: #{_lambda_.1} parent=1 // pred_check_branch
      %43 = sbr.rel (0) target = $region9
    $region8: #{_lambda_.1} parent=1 // pred_region
      %45 = vsyncadd [#allocation4], 0
      %s46 = sshll.u32 %s1, 4
      %s47 = int_to_ptr.hbm [resolvable:$true] %s46
      %s48 = sshll.u32 [#allocation3], 4
      %s49 = int_to_ptr.vmem [resolvable:$true] %s48
      %54 = dma.hbm_to_vmem [thread:$0]  %s47, 256, %s49, [#allocation4], 128, 128, 8
    $region9: #{_lambda_.1} parent=1 // pred_fallthru
      _
    // Predicated region
    $region10: #{_lambda_.1} parent=1 // pred_check
      _
    $region11: #{_lambda_.1} parent=1 // pred_check_branch
      %56 = sbr.rel (0) target = $region13
    $region12: #{_lambda_.1} parent=1 // pred_region
      _
    $region13: #{_lambda_.1} parent=1 // pred_fallthru
      _
    // Predicated region
    $region14: #{_lambda_.1} parent=1 // pred_check
      _
    $region15: #{_lambda_.1} parent=1 // pred_check_branch
      %58 = sbr.rel (0) target = $region17
    $region16: #{_lambda_.1} parent=1 // pred_region
      _
    $region17: #{_lambda_.1} parent=1 // pred_fallthru
      _
    // Predicated region
    $region18: #{_lambda_.1} parent=1 // pred_check
      _
    $region19: #{_lambda_.1} parent=1 // pred_check_branch
      %60 = sbr.rel (0) target = $region21
    $region20: #{_lambda_.1} parent=1 // pred_region
      _
    $region21: #{_lambda_.1} parent=1 // pred_fallthru
      _
    // Predicated region
    $region22: #{_lambda_.1} parent=1 // pred_check
      _
    $region23: #{_lambda_.1} parent=1 // pred_check_branch
      %62 = sbr.rel (0) target = $region25
    $region24: #{_lambda_.1} parent=1 // pred_region
      %64 = vsyncadd [#allocation7], 0
      %s65 = sshll.u32 %s5, 4
      %s66 = int_to_ptr.hbm [resolvable:$true] %s65
      %s67 = sshll.u32 [#allocation6], 4
      %s68 = int_to_ptr.vmem [resolvable:$true] %s67
      %73 = dma.hbm_to_vmem [thread:$0]  %s66, 512, %s68, [#allocation7], 128, 128, 8
    $region25: #{_lambda_.1} parent=1 // pred_fallthru
      _
    // Predicated region
    $region26: #{_lambda_.1} parent=1 // pred_check
      _
    $region27: #{_lambda_.1} parent=1 // pred_check_branch
      %75 = sbr.rel (0) target = $region29
    $region28: #{_lambda_.1} parent=1 // pred_region
      _
    $region29: #{_lambda_.1} parent=1 // pred_fallthru
      _
    // Predicated region
    $region30: #{_lambda_.1} parent=1 // pred_check
      _
    $region31: #{_lambda_.1} parent=1 // pred_check_branch
      %77 = sbr.rel (0) target = $region33
    $region32: #{_lambda_.1} parent=1 // pred_region
      %79 = vsyncadd [#allocation7], 0
      %s80 = sshll.u32 %s7, 4
      %s81 = int_to_ptr.hbm [resolvable:$true] %s80
      %s82 = sshll.u32 [#allocation8], 4
      %s83 = int_to_ptr.vmem [resolvable:$true] %s82
      %88 = dma.hbm_to_vmem [thread:$0]  %s81, 512, %s83, [#allocation7], 128, 128, 8
    $region33: #{_lambda_.1} parent=1 // pred_fallthru
      _
    // Predicated region
    $region34: #{_lambda_.1} parent=1 // pred_check
      _
    $region35: #{_lambda_.1} parent=1 // pred_check_branch
      %90 = sbr.rel (0) target = $region37
    $region36: #{_lambda_.1} parent=1 // pred_region
      %92 = vsyncadd [#allocation10], 0
      %s93 = sshll.u32 %s8, 4
      %s94 = int_to_ptr.hbm [resolvable:$true] %s93
      %s95 = sshll.u32 [#allocation9], 4
      %s96 = int_to_ptr.vmem [resolvable:$true] %s95
      %101 = dma.hbm_to_vmem [thread:$0]  %s94, 512, %s96, [#allocation10], 128, 128, 8
    $region37: #{_lambda_.1} parent=1 // pred_fallthru
      _
    // Predicated region
    $region38: #{_lambda_.1} parent=1 // pred_check
      _
    $region39: #{_lambda_.1} parent=1 // pred_check_branch
      %103 = sbr.rel (0) target = $region41
    $region40: #{_lambda_.1} parent=1 // pred_region
      _
    $region41: #{_lambda_.1} parent=1 // pred_fallthru
      _
    // Predicated region
    $region42: #{_lambda_.1} parent=1 // pred_check
      _
    $region43: #{_lambda_.1} parent=1 // pred_check_branch
      %105 = sbr.rel (0) target = $region45
    $region44: #{_lambda_.1} parent=1 // pred_region
      %107 = vsyncadd [#allocation10], 0
      %s108 = sshll.u32 %s10, 4
      %s109 = int_to_ptr.hbm [resolvable:$true] %s108
      %s110 = sshll.u32 [#allocation11], 4
      %s111 = int_to_ptr.vmem [resolvable:$true] %s110
      %116 = dma.hbm_to_vmem [thread:$0]  %s109, 512, %s111, [#allocation10], 128, 128, 8
    $region45: #{_lambda_.1} parent=1 // pred_fallthru
      _
    // Predicated region
    $region46: #{_lambda_.1} parent=1 // pred_check
      _
    $region47: #{_lambda_.1} parent=1 // pred_check_branch
      %118 = sbr.rel (0) target = $region49
    $region48: #{_lambda_.1} parent=1 // pred_region
      %120 = vsyncadd [#allocation13], 0
      %s121 = sshll.u32 %s11, 4
      %s122 = int_to_ptr.hbm [resolvable:$true] %s121
      %s123 = sshll.u32 [#allocation12], 4
      %s124 = int_to_ptr.vmem [resolvable:$true] %s123
      %129 = dma.hbm_to_vmem [thread:$0]  %s122, 512, %s124, [#allocation13], 128, 128, 8
    $region49: #{_lambda_.1} parent=1 // pred_fallthru
      _
    // Predicated region
    $region50: #{_lambda_.1} parent=1 // pred_check
      _
    $region51: #{_lambda_.1} parent=1 // pred_check_branch
      %131 = sbr.rel (0) target = $region53
    $region52: #{_lambda_.1} parent=1 // pred_region
      _
    $region53: #{_lambda_.1} parent=1 // pred_fallthru
      _
    // Predicated region
    $region54: #{_lambda_.1} parent=1 // pred_check
      _
    $region55: #{_lambda_.1} parent=1 // pred_check_branch
      %133 = sbr.rel (0) target = $region57
    $region56: #{_lambda_.1} parent=1 // pred_region
      %135 = vsyncadd [#allocation13], 0
      %s136 = sshll.u32 %s13, 4
      %s137 = int_to_ptr.hbm [resolvable:$true] %s136
      %s138 = sshll.u32 [#allocation14], 4
      %s139 = int_to_ptr.vmem [resolvable:$true] %s138
      %144 = dma.hbm_to_vmem [thread:$0]  %s137, 512, %s139, [#allocation13], 128, 128, 8
    $region57: #{_lambda_.1} parent=1 // pred_fallthru
      _
    // Predicated region
    $region58: #{_lambda_.1} parent=1 // pred_check
      _
    $region59: #{_lambda_.1} parent=1 // pred_check_branch
      %146 = sbr.rel (0) target = $region61
    $region60: #{_lambda_.1} parent=1 // pred_region
      %148 = vsyncadd [#allocation16], 0
      %s150 = sshll.u32 %s14, 4
      %s151 = int_to_ptr.hbm [resolvable:$true] %s150
      %s152 = sshll.u32 [#allocation15], 4
      %s153 = int_to_ptr.vmem [resolvable:$true] %s152
      %155 = dma.hbm_to_vmem [thread:$0]  %s151, 16, %s153, [#allocation16]
    $region61: #{_lambda_.1} parent=1 // pred_fallthru
      _
    // Predicated region
    $region62: #{_lambda_.1} parent=1 // pred_check
      _
    $region63: #{_lambda_.1} parent=1 // pred_check_branch
      %157 = sbr.rel (0) target = $region65
    $region64: #{_lambda_.1} parent=1 // pred_region
      %159 = vsyncadd [#allocation16], 0
      %s160 = sshll.u32 %s15, 4
      %s161 = int_to_ptr.hbm [resolvable:$true] %s160
      %s162 = sshll.u32 [#allocation17], 4
      %s163 = int_to_ptr.vmem [resolvable:$true] %s162
      %168 = dma.hbm_to_vmem [thread:$0]  %s161, 512, %s163, [#allocation16], 128, 128, 8
    $region65: #{_lambda_.1} parent=1 // pred_fallthru
      _
    // Predicated region
    $region66: #{_lambda_.1} parent=1 // pred_check
      _
    $region67: #{_lambda_.1} parent=1 // pred_check_branch
      %170 = sbr.rel (0) target = $region69
    $region68: #{_lambda_.1} parent=1 // pred_region
      %172 = vsyncadd [#allocation19], 0
      %s174 = sshll.u32 %s16, 4
      %s175 = int_to_ptr.hbm [resolvable:$true] %s174
      %s176 = sshll.u32 [#allocation18], 4
      %s177 = int_to_ptr.vmem [resolvable:$true] %s176
      %179 = dma.hbm_to_vmem [thread:$0]  %s175, 16, %s177, [#allocation19]
    $region69: #{_lambda_.1} parent=1 // pred_fallthru
      _
    // Predicated region
    $region70: #{_lambda_.1} parent=1 // pred_check
      _
    $region71: #{_lambda_.1} parent=1 // pred_check_branch
      %181 = sbr.rel (0) target = $region73
    $region72: #{_lambda_.1} parent=1 // pred_region
      %183 = vsyncadd [#allocation19], 0
      %s184 = sshll.u32 %s17, 4
      %s185 = int_to_ptr.hbm [resolvable:$true] %s184
      %s186 = sshll.u32 [#allocation20], 4
      %s187 = int_to_ptr.vmem [resolvable:$true] %s186
      %192 = dma.hbm_to_vmem [thread:$0]  %s185, 512, %s187, [#allocation19], 128, 128, 8
    $region73: #{_lambda_.1} parent=1 // pred_fallthru
      _
    // Predicated region
    $region74: #{_lambda_.1} parent=1 // pred_check
      _
    $region75: #{_lambda_.1} parent=1 // pred_check_branch
      %194 = sbr.rel (0) target = $region77
    $region76: #{_lambda_.1} parent=1 // pred_region
      _
    $region77: #{_lambda_.1} parent=1 // pred_fallthru
      _
    // Predicated region
    $region78: #{_lambda_.1} parent=1 // pred_check
      _
    $region79: #{_lambda_.1} parent=1 // pred_check_branch
      %196 = sbr.rel (0) target = $region81
    $region80: #{_lambda_.1} parent=1 // pred_region
      _
    $region81: #{_lambda_.1} parent=1 // pred_fallthru
      _
    // Predicated region
    $region82: #{_lambda_.1} parent=1 // pred_check
      _
    $region83: #{_lambda_.1} parent=1 // pred_check_branch
      %198 = sbr.rel (0) target = $region85
    $region84: #{_lambda_.1} parent=1 // pred_region
      _
    $region85: #{_lambda_.1} parent=1 // pred_fallthru
      _
    // Predicated region
    $region86: #{_lambda_.1} parent=1 // pred_check
      _
    $region87: #{_lambda_.1} parent=1 // pred_check_branch
      %200 = sbr.rel (0) target = $region89
    $region88: #{_lambda_.1} parent=1 // pred_region
      %202 = vsyncadd [#allocation22], 0
      %s203 = sshll.u32 %s21, 4
      %s204 = int_to_ptr.hbm [resolvable:$true] %s203
      %s205 = sshll.u32 [#allocation21], 4
      %s206 = int_to_ptr.vmem [resolvable:$true] %s205
      %211 = dma.hbm_to_vmem [thread:$0]  %s204, 512, %s206, [#allocation22], 128, 128, 8
    $region89: #{_lambda_.1} parent=1 // pred_fallthru
      _
    // Predicated region
    $region90: #{_lambda_.1} parent=1 // pred_check
      _
    $region91: #{_lambda_.1} parent=1 // pred_check_branch
      %213 = sbr.rel (0) target = $region93
    $region92: #{_lambda_.1} parent=1 // pred_region
      _
    $region93: #{_lambda_.1} parent=1 // pred_fallthru
      _
    // Predicated region
    $region94: #{_lambda_.1} parent=1 // pred_check
      _
    $region95: #{_lambda_.1} parent=1 // pred_check_branch
      %215 = sbr.rel (0) target = $region97
    $region96: #{_lambda_.1} parent=1 // pred_region
      _
    $region97: #{_lambda_.1} parent=1 // pred_fallthru
      _
    // Predicated region
    $region98: #{_lambda_.1} parent=1 // pred_check
      _
    $region99: #{_lambda_.1} parent=1 // pred_check_branch
      %217 = sbr.rel (0) target = $region101
    $region100: #{_lambda_.1} parent=1 // pred_region
      _
    $region101: #{_lambda_.1} parent=1 // pred_fallthru
      _
    // Predicated region
    $region102: #{_lambda_.1} parent=1 // pred_check
      _
    $region103: #{_lambda_.1} parent=1 // pred_check_branch
      %219 = sbr.rel (0) target = $region105
    $region104: #{_lambda_.1} parent=1 // pred_region
      _
    $region105: #{_lambda_.1} parent=1 // pred_fallthru
      _
    // Predicated region
    $region106: #{_lambda_.1} parent=1 // pred_check
      _
    $region107: #{_lambda_.1} parent=1 // pred_check_branch
      %221 = sbr.rel (0) target = $region109
    $region108: #{_lambda_.1} parent=1 // pred_region
      _
    $region109: #{_lambda_.1} parent=1 // pred_fallthru
      _
    // Predicated region
    $region110: #{_lambda_.1} parent=1 // pred_check
      _
    $region111: #{_lambda_.1} parent=1 // pred_check_branch
      %223 = sbr.rel (0) target = $region113
    $region112: #{_lambda_.1} parent=1 // pred_region
      %225 = dma.done [#allocation4], 256
    $region113: #{_lambda_.1} parent=1 // pred_fallthru
      _
    // Predicated region
    $region114: #{_lambda_.1} parent=1 // pred_check
      _
    $region115: #{_lambda_.1} parent=1 // pred_check_branch
      %227 = sbr.rel (0) target = $region117
    $region116: #{_lambda_.1} parent=1 // pred_region
      %229 = dma.done [#allocation7], 512
    $region117: #{_lambda_.1} parent=1 // pred_fallthru
      _
    // Predicated region
    $region118: #{_lambda_.1} parent=1 // pred_check
      _
    $region119: #{_lambda_.1} parent=1 // pred_check_branch
      %231 = sbr.rel (0) target = $region121
    $region120: #{_lambda_.1} parent=1 // pred_region
      %233 = dma.done [#allocation7], 512
    $region121: #{_lambda_.1} parent=1 // pred_fallthru
      _
    // Predicated region
    $region122: #{_lambda_.1} parent=1 // pred_check
      _
    $region123: #{_lambda_.1} parent=1 // pred_check_branch
      %235 = sbr.rel (0) target = $region125
    $region124: #{_lambda_.1} parent=1 // pred_region
      %237 = dma.done [#allocation10], 512
    $region125: #{_lambda_.1} parent=1 // pred_fallthru
      _
    // Predicated region
    $region126: #{_lambda_.1} parent=1 // pred_check
      _
    $region127: #{_lambda_.1} parent=1 // pred_check_branch
      %239 = sbr.rel (0) target = $region129
    $region128: #{_lambda_.1} parent=1 // pred_region
      %241 = dma.done [#allocation10], 512
    $region129: #{_lambda_.1} parent=1 // pred_fallthru
      _
    // Predicated region
    $region130: #{_lambda_.1} parent=1 // pred_check
      _
    $region131: #{_lambda_.1} parent=1 // pred_check_branch
      %243 = sbr.rel (0) target = $region133
    $region132: #{_lambda_.1} parent=1 // pred_region
      %245 = dma.done [#allocation13], 512
    $region133: #{_lambda_.1} parent=1 // pred_fallthru
      _
    // Predicated region
    $region134: #{_lambda_.1} parent=1 // pred_check
      _
    $region135: #{_lambda_.1} parent=1 // pred_check_branch
      %247 = sbr.rel (0) target = $region137
    $region136: #{_lambda_.1} parent=1 // pred_region
      %249 = dma.done [#allocation13], 512
    $region137: #{_lambda_.1} parent=1 // pred_fallthru
      _
    // Predicated region
    $region138: #{_lambda_.1} parent=1 // pred_check
      _
    $region139: #{_lambda_.1} parent=1 // pred_check_branch
      %251 = sbr.rel (0) target = $region141
    $region140: #{_lambda_.1} parent=1 // pred_region
      %253 = dma.done [#allocation16], 16
    $region141: #{_lambda_.1} parent=1 // pred_fallthru
      _
    // Predicated region
    $region142: #{_lambda_.1} parent=1 // pred_check
      _
    $region143: #{_lambda_.1} parent=1 // pred_check_branch
      %255 = sbr.rel (0) target = $region145
    $region144: #{_lambda_.1} parent=1 // pred_region
      %257 = dma.done [#allocation16], 512
    $region145: #{_lambda_.1} parent=1 // pred_fallthru
      _
    // Predicated region
    $region146: #{_lambda_.1} parent=1 // pred_check
      _
    $region147: #{_lambda_.1} parent=1 // pred_check_branch
      %259 = sbr.rel (0) target = $region149
    $region148: #{_lambda_.1} parent=1 // pred_region
      %261 = dma.done [#allocation19], 16
    $region149: #{_lambda_.1} parent=1 // pred_fallthru
      _
    // Predicated region
    $region150: #{_lambda_.1} parent=1 // pred_check
      _
    $region151: #{_lambda_.1} parent=1 // pred_check_branch
      %263 = sbr.rel (0) target = $region153
    $region152: #{_lambda_.1} parent=1 // pred_region
      %265 = dma.done [#allocation19], 512
    $region153: #{_lambda_.1} parent=1 // pred_fallthru
      _
    // Predicated region
    $region154: #{_lambda_.1} parent=1 // pred_check
      _
    $region155: #{_lambda_.1} parent=1 // pred_check_branch
      %267 = sbr.rel (0) target = $region157
    $region156: #{_lambda_.1} parent=1 // pred_region
      %269 = dma.done [#allocation22], 512
    $region157: #{_lambda_.1} parent=1 // pred_fallthru
      _
    %v270 = vlaneseq
    %v271 = vand.u32 %v270, 127
    %vm272 = vcmp.ge.s32.totalorder %v271, 64
    %vm273 = vcmp.lt.s32.totalorder %v271, 96
    %vm274 = vmand %vm272, %vm273
    %v275 = vld [vmem:[%s0] sm:$0x3]
    %v276 = vld [vmem:[%s0 + $0x2] sm:$0x3]
    %v277 = vld [vmem:[%s0 + $0x4] sm:$0x3]
    %v278 = vld [vmem:[%s0 + $0x6] sm:$0x3]
    %v279 = vld [vmem:[%s0 + $0x8] sm:$0x3]
    %v280 = vld [vmem:[%s0 + $0xa] sm:$0x3]
    %v281 = vld [vmem:[%s0 + $0xc] sm:$0x3]
    %v282 = vld [vmem:[%s0 + $0xe] sm:$0x3]
    %v283 = vld [vmem:[#allocation3] sm:$0xff]
    %v284 = vld [vmem:[#allocation3 + $0x8] sm:$0xff]
    %v285 = vld [vmem:[%s3] sm:$0x1]
    %v287 = vperm.slane %v285, 0
    %296 = vst [vmem:[#allocation1] ss:$4 sm:$0xff] %v275
    %s297 = scalar_lea.vmem [#allocation1], 1
    %298 = vst [vmem:[%s297] ss:$4 sm:$0xff] %v276
    %s299 = scalar_lea.vmem [#allocation1], 2
    %300 = vst [vmem:[%s299] ss:$4 sm:$0xff] %v277
    %s301 = scalar_lea.vmem [#allocation1], 3
    %302 = vst [vmem:[%s301] ss:$4 sm:$0xff] %v278
    %s303 = scalar_lea.vmem [#allocation1], 32
    %304 = vst [vmem:[%s303] ss:$4 sm:$0xff] %v279
    %s305 = scalar_lea.vmem [#allocation1], 33
    %306 = vst [vmem:[%s305] ss:$4 sm:$0xff] %v280
    %s307 = scalar_lea.vmem [#allocation1], 34
    %308 = vst [vmem:[%s307] ss:$4 sm:$0xff] %v281
    %s309 = scalar_lea.vmem [#allocation1], 35
    %310 = vst [vmem:[%s309] ss:$4 sm:$0xff] %v282
    %v311 = vld.sshfl [vmem:[#allocation1] sm:$0xff pattern:$0x73625140]
    %v312 = vld.sshfl [vmem:[#allocation1 + $0x20] sm:$0xff pattern:$0x73625140]
    %313 = vst [vmem:[#allocation1] ss:$4 sm:$0xff] %v287
    %s314 = scalar_lea.vmem [#allocation1], 1
    %315 = vst [vmem:[%s314] ss:$4 sm:$0xff] %v287
    %s316 = scalar_lea.vmem [#allocation1], 2
    %317 = vst [vmem:[%s316] ss:$4 sm:$0xff] %v287
    %s318 = scalar_lea.vmem [#allocation1], 3
    %319 = vst [vmem:[%s318] ss:$4 sm:$0xff] %v287
    %s320 = scalar_lea.vmem [#allocation1], 32
    %321 = vst [vmem:[%s320] ss:$4 sm:$0xff] %v287
    %s322 = scalar_lea.vmem [#allocation1], 33
    %323 = vst [vmem:[%s322] ss:$4 sm:$0xff] %v287
    %s324 = scalar_lea.vmem [#allocation1], 34
    %325 = vst [vmem:[%s324] ss:$4 sm:$0xff] %v287
    %s326 = scalar_lea.vmem [#allocation1], 35
    %327 = vst [vmem:[%s326] ss:$4 sm:$0xff] %v287
    %v328 = vld.sshfl [vmem:[#allocation1] sm:$0xff pattern:$0x73625140]
    %v329 = vld.sshfl [vmem:[#allocation1 + $0x20] sm:$0xff pattern:$0x73625140]
    %vm332 = vcmask 130048
    %v333 = vsel %vm332, %v311, 0
    %v335 = vsel %vm332, %v312, 0
    %337 = vmatpush.msra.mxu0 0.0
    %338 = vmatpush.msra.mxu0 0.0
    %339 = vmatpush.msra.mxu0 0.0
    %340 = vmatpush.msra.mxu0 0.0
    %341 = vmatpush.msra.mxu0 0.0
    %342 = vmatpush.msra.mxu0 0.0
    %343 = vmatpush.msra.mxu0 0.0
    %344 = vmatpush.msra.mxu0 0.0
    %345 = vmatpush.msra.mxu0 0.0
    %346 = vmatpush.msra.mxu0 0.0
    %347 = vmatpush.msra.mxu0 0.0
    %348 = vmatpush.msra.mxu0 0.0
    %349 = vmatpush.msra.mxu0 0.0
    %350 = vmatpush.msra.mxu0 0.0
    %351 = vmatpush.msra.mxu0 %v284
    %352 = vmatpush.msra.mxu0 %v283
    %353 = vmatmul.f32.gmra.mxu0 %v333
    %v354 = vpop.f32.mrf.mxu0
    %v355 = vadd.f32 %v328, %v354
    %356 = vmatmul.f32.gmra.mxu0 %v335
    %v357 = vpop.f32.mrf.mxu0
    %v358 = vadd.f32 %v329, %v357
    %359 = vdwg.mxu0
    %v362 = vrot.slane %v355, 2
    %v363 = vrot.slane %v355, 4
    %v364 = vrot.slane %v355, 6
    %v365 = vrot.slane %v358, 2
    %v366 = vrot.slane %v358, 4
    %v367 = vrot.slane %v358, 6
    %v374 = vld [vmem:[%s2] sm:$0xff]
    %v375 = vld [vmem:[%s2 + $0x8] sm:$0xff]
    %v376 = vld [vmem:[%s2 + $0x10] sm:$0xff]
    %v377 = vld [vmem:[%s2 + $0x18] sm:$0xff]
    %vm378 = vcmask 261120
    %v380 = vsel %vm378, 0.0, 0
    %382 = vmatpush.msra.mxu0 0.0
    %383 = vmatpush.msra.mxu0 0.0
    %384 = vmatpush.msra.mxu0 0.0
    %385 = vmatpush.msra.mxu0 0.0
    %386 = vmatpush.msra.mxu0 0.0
    %387 = vmatpush.msra.mxu0 0.0
    %388 = vmatpush.msra.mxu0 0.0
    %389 = vmatpush.msra.mxu0 0.0
    %390 = vmatpush.msra.mxu0 0.0
    %391 = vmatpush.msra.mxu0 0.0
    %392 = vmatpush.msra.mxu0 0.0
    %393 = vmatpush.msra.mxu0 0.0
    %394 = vmatpush.msra.mxu0 %v377
    %395 = vmatpush.msra.mxu0 %v376
    %396 = vmatpush.msra.mxu0 %v375
    %397 = vmatpush.msra.mxu0 %v374
    %398 = vmatmul.f32.gmra.mxu0 %v380
    %v399 = vpop.f32.mrf.mxu0
    %v400 = vadd.f32 0.0, %v399
    %401 = vdwg.mxu0
    %v402 = vadd.f32 %v355, %v400
    %v403 = vtanh.pop %v402
    %v404 = vxor.u32 %v402, 2147483648
    %v405 = vmul.f32 %v404, 1.442695
    %v406 = vpow.pop %v405
    %v407 = vadd.f32 %v406, 1.0
    %v408 = vrcp.pop %v407
    %v409 = vmul.f32 %v407, %v408
    %v410 = vsub.f32 1.0, %v409
    %v411 = vmul.f32 %v408, %v410
    %v412 = vadd.f32 %v408, %v411
    %vm413 = vweird.f32 %v407
    %vm414 = vweird.f32 %v408
    %vm415 = vmor %vm413, %vm414
    %v416 = vsel %vm415, %v408, %v412
    %v417 = vand.u32 2147483647, %v407
    %vm418 = vcmp.eq.f32.partialorder %v417, 8.507059e+37
    %v419 = vand.u32 %v407, 2147483648
    %v420 = vor.u32 1.1754944e-38, %v419
    %v421 = vsel %vm418, %v420, %v416
    %v422 = vmul.f32 1.0, %v421
    %v423 = vsel %vm274, %v403, %v422
    %v424 = vmul.f32 %v423, 0.0
    %426 = vrot.lane.b32.xlu0 %v423, 64
    %v427 = vpop.permute.xlu0 %426
    %v429 = vmul.f32 %v423, %v427
    %431 = vrot.lane.b32.xlu0 %v429, 32
    %v432 = vpop.permute.xlu0 %431
    %v434 = vadd.f32 %v424, %v432
    %v435 = vtanh.pop %v434
    %437 = vrot.lane.b32.xlu0 %v435, 64
    %v438 = vpop.permute.xlu0 %437
    %v440 = vmul.f32 %v423, %v438
    %442 = vrot.lane.b32.xlu0 %v440, 32
    %v443 = vpop.permute.xlu0 %442
    %vm445 = vcmask 254976
    %446 = vst.msk [vmem:[#allocation2] sm:$0x3] %vm445, %v443
    %v447 = vsel %vm378, %v443, 0
    %449 = vmatpush.msra.mxu0 0.0
    %450 = vmatpush.msra.mxu0 0.0
    %451 = vmatpush.msra.mxu0 0.0
    %452 = vmatpush.msra.mxu0 0.0
    %453 = vmatpush.msra.mxu0 0.0
    %454 = vmatpush.msra.mxu0 0.0
    %455 = vmatpush.msra.mxu0 0.0
    %456 = vmatpush.msra.mxu0 0.0
    %457 = vmatpush.msra.mxu0 0.0
    %458 = vmatpush.msra.mxu0 0.0
    %459 = vmatpush.msra.mxu0 0.0
    %460 = vmatpush.msra.mxu0 0.0
    %461 = vmatpush.msra.mxu0 %v377
    %462 = vmatpush.msra.mxu0 %v376
    %463 = vmatpush.msra.mxu0 %v375
    %464 = vmatpush.msra.mxu0 %v374
    %465 = vmatmul.f32.gmra.mxu0 %v447
    %v466 = vpop.f32.mrf.mxu0
    %v467 = vadd.f32 0.0, %v466
    %468 = vdwg.mxu0
    %v469 = vadd.f32 %v362, %v467
    %v470 = vtanh.pop %v469
    %v471 = vxor.u32 %v469, 2147483648
    %v472 = vmul.f32 %v471, 1.442695
    %v473 = vpow.pop %v472
    %v474 = vadd.f32 %v473, 1.0
    %v475 = vrcp.pop %v474
    %v476 = vmul.f32 %v474, %v475
    %v477 = vsub.f32 1.0, %v476
    %v478 = vmul.f32 %v475, %v477
    %v479 = vadd.f32 %v475, %v478
    %vm480 = vweird.f32 %v474
    %vm481 = vweird.f32 %v475
    %vm482 = vmor %vm480, %vm481
    %v483 = vsel %vm482, %v475, %v479
    %v484 = vand.u32 2147483647, %v474
    %vm485 = vcmp.eq.f32.partialorder %v484, 8.507059e+37
    %v486 = vand.u32 %v474, 2147483648
    %v487 = vor.u32 1.1754944e-38, %v486
    %v488 = vsel %vm485, %v487, %v483
    %v489 = vmul.f32 1.0, %v488
    %v490 = vsel %vm274, %v470, %v489
    %v491 = vmul.f32 %v490, %v434
    %493 = vrot.lane.b32.xlu0 %v490, 64
    %v494 = vpop.permute.xlu0 %493
    %v496 = vmul.f32 %v490, %v494
    %498 = vrot.lane.b32.xlu0 %v496, 32
    %v499 = vpop.permute.xlu0 %498
    %v501 = vadd.f32 %v491, %v499
    %v502 = vtanh.pop %v501
    %504 = vrot.lane.b32.xlu0 %v502, 64
    %v505 = vpop.permute.xlu0 %504
    %v507 = vmul.f32 %v490, %v505
    %509 = vrot.lane.b32.xlu0 %v507, 32
    %v510 = vpop.permute.xlu0 %509
    %s512 = scalar_lea.vmem [#allocation2], 2
    %513 = vst.msk [vmem:[%s512] sm:$0x3] %vm445, %v510
    %v514 = vsel %vm378, %v510, 0
    %516 = vmatpush.msra.mxu0 0.0
    %517 = vmatpush.msra.mxu0 0.0
    %518 = vmatpush.msra.mxu0 0.0
    %519 = vmatpush.msra.mxu0 0.0
    %520 = vmatpush.msra.mxu0 0.0
    %521 = vmatpush.msra.mxu0 0.0
    %522 = vmatpush.msra.mxu0 0.0
    %523 = vmatpush.msra.mxu0 0.0
    %524 = vmatpush.msra.mxu0 0.0
    %525 = vmatpush.msra.mxu0 0.0
    %526 = vmatpush.msra.mxu0 0.0
    %527 = vmatpush.msra.mxu0 0.0
    %528 = vmatpush.msra.mxu0 %v377
    %529 = vmatpush.msra.mxu0 %v376
    %530 = vmatpush.msra.mxu0 %v375
    %531 = vmatpush.msra.mxu0 %v374
    %532 = vmatmul.f32.gmra.mxu0 %v514
    %v533 = vpop.f32.mrf.mxu0
    %v534 = vadd.f32 0.0, %v533
    %535 = vdwg.mxu0
    %v536 = vadd.f32 %v363, %v534
    %v537 = vtanh.pop %v536
    %v538 = vxor.u32 %v536, 2147483648
    %v539 = vmul.f32 %v538, 1.442695
    %v540 = vpow.pop %v539
    %v541 = vadd.f32 %v540, 1.0
    %v542 = vrcp.pop %v541
    %v543 = vmul.f32 %v541, %v542
    %v544 = vsub.f32 1.0, %v543
    %v545 = vmul.f32 %v542, %v544
    %v546 = vadd.f32 %v542, %v545
    %vm547 = vweird.f32 %v541
    %vm548 = vweird.f32 %v542
    %vm549 = vmor %vm547, %vm548
    %v550 = vsel %vm549, %v542, %v546
    %v551 = vand.u32 2147483647, %v541
    %vm552 = vcmp.eq.f32.partialorder %v551, 8.507059e+37
    %v553 = vand.u32 %v541, 2147483648
    %v554 = vor.u32 1.1754944e-38, %v553
    %v555 = vsel %vm552, %v554, %v550
    %v556 = vmul.f32 1.0, %v555
    %v557 = vsel %vm274, %v537, %v556
    %v558 = vmul.f32 %v557, %v501
    %560 = vrot.lane.b32.xlu0 %v557, 64
    %v561 = vpop.permute.xlu0 %560
    %v563 = vmul.f32 %v557, %v561
    %565 = vrot.lane.b32.xlu0 %v563, 32
    %v566 = vpop.permute.xlu0 %565
    %v568 = vadd.f32 %v558, %v566
    %v569 = vtanh.pop %v568
    %571 = vrot.lane.b32.xlu0 %v569, 64
    %v572 = vpop.permute.xlu0 %571
    %v574 = vmul.f32 %v557, %v572
    %576 = vrot.lane.b32.xlu0 %v574, 32
    %v577 = vpop.permute.xlu0 %576
    %s579 = scalar_lea.vmem [#allocation2], 4
    %580 = vst.msk [vmem:[%s579] sm:$0x3] %vm445, %v577
    %v581 = vsel %vm378, %v577, 0
    %583 = vmatpush.msra.mxu0 0.0
    %584 = vmatpush.msra.mxu0 0.0
    %585 = vmatpush.msra.mxu0 0.0
    %586 = vmatpush.msra.mxu0 0.0
    %587 = vmatpush.msra.mxu0 0.0
    %588 = vmatpush.msra.mxu0 0.0
    %589 = vmatpush.msra.mxu0 0.0
    %590 = vmatpush.msra.mxu0 0.0
    %591 = vmatpush.msra.mxu0 0.0
    %592 = vmatpush.msra.mxu0 0.0
    %593 = vmatpush.msra.mxu0 0.0
    %594 = vmatpush.msra.mxu0 0.0
    %595 = vmatpush.msra.mxu0 %v377
    %596 = vmatpush.msra.mxu0 %v376
    %597 = vmatpush.msra.mxu0 %v375
    %598 = vmatpush.msra.mxu0 %v374
    %599 = vmatmul.f32.gmra.mxu0 %v581
    %v600 = vpop.f32.mrf.mxu0
    %v601 = vadd.f32 0.0, %v600
    %602 = vdwg.mxu0
    %v603 = vadd.f32 %v364, %v601
    %v604 = vtanh.pop %v603
    %v605 = vxor.u32 %v603, 2147483648
    %v606 = vmul.f32 %v605, 1.442695
    %v607 = vpow.pop %v606
    %v608 = vadd.f32 %v607, 1.0
    %v609 = vrcp.pop %v608
    %v610 = vmul.f32 %v608, %v609
    %v611 = vsub.f32 1.0, %v610
    %v612 = vmul.f32 %v609, %v611
    %v613 = vadd.f32 %v609, %v612
    %vm614 = vweird.f32 %v608
    %vm615 = vweird.f32 %v609
    %vm616 = vmor %vm614, %vm615
    %v617 = vsel %vm616, %v609, %v613
    %v618 = vand.u32 2147483647, %v608
    %vm619 = vcmp.eq.f32.partialorder %v618, 8.507059e+37
    %v620 = vand.u32 %v608, 2147483648
    %v621 = vor.u32 1.1754944e-38, %v620
    %v622 = vsel %vm619, %v621, %v617
    %v623 = vmul.f32 1.0, %v622
    %v624 = vsel %vm274, %v604, %v623
    %v625 = vmul.f32 %v624, %v568
    %627 = vrot.lane.b32.xlu0 %v624, 64
    %v628 = vpop.permute.xlu0 %627
    %v630 = vmul.f32 %v624, %v628
    %632 = vrot.lane.b32.xlu0 %v630, 32
    %v633 = vpop.permute.xlu0 %632
    %v635 = vadd.f32 %v625, %v633
    %v636 = vtanh.pop %v635
    %638 = vrot.lane.b32.xlu0 %v636, 64
    %v639 = vpop.permute.xlu0 %638
    %v641 = vmul.f32 %v624, %v639
    %643 = vrot.lane.b32.xlu0 %v641, 32
    %v644 = vpop.permute.xlu0 %643
    %s646 = scalar_lea.vmem [#allocation2], 6
    %647 = vst.msk [vmem:[%s646] sm:$0x3] %vm445, %v644
    %v648 = vsel %vm378, %v644, 0
    %650 = vmatpush.msra.mxu0 0.0
    %651 = vmatpush.msra.mxu0 0.0
    %652 = vmatpush.msra.mxu0 0.0
    %653 = vmatpush.msra.mxu0 0.0
    %654 = vmatpush.msra.mxu0 0.0
    %655 = vmatpush.msra.mxu0 0.0
    %656 = vmatpush.msra.mxu0 0.0
    %657 = vmatpush.msra.mxu0 0.0
    %658 = vmatpush.msra.mxu0 0.0
    %659 = vmatpush.msra.mxu0 0.0
    %660 = vmatpush.msra.mxu0 0.0
    %661 = vmatpush.msra.mxu0 0.0
    %662 = vmatpush.msra.mxu0 %v377
    %663 = vmatpush.msra.mxu0 %v376
    %664 = vmatpush.msra.mxu0 %v375
    %665 = vmatpush.msra.mxu0 %v374
    %666 = vmatmul.f32.gmra.mxu0 %v648
    %v667 = vpop.f32.mrf.mxu0
    %v668 = vadd.f32 0.0, %v667
    %669 = vdwg.mxu0
    %v670 = vadd.f32 %v358, %v668
    %v671 = vtanh.pop %v670
    %v672 = vxor.u32 %v670, 2147483648
    %v673 = vmul.f32 %v672, 1.442695
    %v674 = vpow.pop %v673
    %v675 = vadd.f32 %v674, 1.0
    %v676 = vrcp.pop %v675
    %v677 = vmul.f32 %v675, %v676
    %v678 = vsub.f32 1.0, %v677
    %v679 = vmul.f32 %v676, %v678
    %v680 = vadd.f32 %v676, %v679
    %vm681 = vweird.f32 %v675
    %vm682 = vweird.f32 %v676
    %vm683 = vmor %vm681, %vm682
    %v684 = vsel %vm683, %v676, %v680
    %v685 = vand.u32 2147483647, %v675
    %vm686 = vcmp.eq.f32.partialorder %v685, 8.507059e+37
    %v687 = vand.u32 %v675, 2147483648
    %v688 = vor.u32 1.1754944e-38, %v687
    %v689 = vsel %vm686, %v688, %v684
    %v690 = vmul.f32 1.0, %v689
    %v691 = vsel %vm274, %v671, %v690
    %v692 = vmul.f32 %v691, %v635
    %694 = vrot.lane.b32.xlu0 %v691, 64
    %v695 = vpop.permute.xlu0 %694
    %v697 = vmul.f32 %v691, %v695
    %699 = vrot.lane.b32.xlu0 %v697, 32
    %v700 = vpop.permute.xlu0 %699
    %v702 = vadd.f32 %v692, %v700
    %v703 = vtanh.pop %v702
    %705 = vrot.lane.b32.xlu0 %v703, 64
    %v706 = vpop.permute.xlu0 %705
    %v708 = vmul.f32 %v691, %v706
    %710 = vrot.lane.b32.xlu0 %v708, 32
    %v711 = vpop.permute.xlu0 %710
    %s713 = scalar_lea.vmem [#allocation2], 8
    %714 = vst.msk [vmem:[%s713] sm:$0x3] %vm445, %v711
    %v715 = vsel %vm378, %v711, 0
    %717 = vmatpush.msra.mxu0 0.0
    %718 = vmatpush.msra.mxu0 0.0
    %719 = vmatpush.msra.mxu0 0.0
    %720 = vmatpush.msra.mxu0 0.0
    %721 = vmatpush.msra.mxu0 0.0
    %722 = vmatpush.msra.mxu0 0.0
    %723 = vmatpush.msra.mxu0 0.0
    %724 = vmatpush.msra.mxu0 0.0
    %725 = vmatpush.msra.mxu0 0.0
    %726 = vmatpush.msra.mxu0 0.0
    %727 = vmatpush.msra.mxu0 0.0
    %728 = vmatpush.msra.mxu0 0.0
    %729 = vmatpush.msra.mxu0 %v377
    %730 = vmatpush.msra.mxu0 %v376
    %731 = vmatpush.msra.mxu0 %v375
    %732 = vmatpush.msra.mxu0 %v374
    %733 = vmatmul.f32.gmra.mxu0 %v715
    %v734 = vpop.f32.mrf.mxu0
    %v735 = vadd.f32 0.0, %v734
    %736 = vdwg.mxu0
    %v737 = vadd.f32 %v365, %v735
    %v738 = vtanh.pop %v737
    %v739 = vxor.u32 %v737, 2147483648
    %v740 = vmul.f32 %v739, 1.442695
    %v741 = vpow.pop %v740
    %v742 = vadd.f32 %v741, 1.0
    %v743 = vrcp.pop %v742
    %v744 = vmul.f32 %v742, %v743
    %v745 = vsub.f32 1.0, %v744
    %v746 = vmul.f32 %v743, %v745
    %v747 = vadd.f32 %v743, %v746
    %vm748 = vweird.f32 %v742
    %vm749 = vweird.f32 %v743
    %vm750 = vmor %vm748, %vm749
    %v751 = vsel %vm750, %v743, %v747
    %v752 = vand.u32 2147483647, %v742
    %vm753 = vcmp.eq.f32.partialorder %v752, 8.507059e+37
    %v754 = vand.u32 %v742, 2147483648
    %v755 = vor.u32 1.1754944e-38, %v754
    %v756 = vsel %vm753, %v755, %v751
    %v757 = vmul.f32 1.0, %v756
    %v758 = vsel %vm274, %v738, %v757
    %v759 = vmul.f32 %v758, %v702
    %761 = vrot.lane.b32.xlu0 %v758, 64
    %v762 = vpop.permute.xlu0 %761
    %v764 = vmul.f32 %v758, %v762
    %766 = vrot.lane.b32.xlu0 %v764, 32
    %v767 = vpop.permute.xlu0 %766
    %v769 = vadd.f32 %v759, %v767
    %v770 = vtanh.pop %v769
    %772 = vrot.lane.b32.xlu0 %v770, 64
    %v773 = vpop.permute.xlu0 %772
    %v775 = vmul.f32 %v758, %v773
    %777 = vrot.lane.b32.xlu0 %v775, 32
    %v778 = vpop.permute.xlu0 %777
    %s780 = scalar_lea.vmem [#allocation2], 10
    %781 = vst.msk [vmem:[%s780] sm:$0x3] %vm445, %v778
    %v782 = vsel %vm378, %v778, 0
    %784 = vmatpush.msra.mxu0 0.0
    %785 = vmatpush.msra.mxu0 0.0
    %786 = vmatpush.msra.mxu0 0.0
    %787 = vmatpush.msra.mxu0 0.0
    %788 = vmatpush.msra.mxu0 0.0
    %789 = vmatpush.msra.mxu0 0.0
    %790 = vmatpush.msra.mxu0 0.0
    %791 = vmatpush.msra.mxu0 0.0
    %792 = vmatpush.msra.mxu0 0.0
    %793 = vmatpush.msra.mxu0 0.0
    %794 = vmatpush.msra.mxu0 0.0
    %795 = vmatpush.msra.mxu0 0.0
    %796 = vmatpush.msra.mxu0 %v377
    %797 = vmatpush.msra.mxu0 %v376
    %798 = vmatpush.msra.mxu0 %v375
    %799 = vmatpush.msra.mxu0 %v374
    %800 = vmatmul.f32.gmra.mxu0 %v782
    %v801 = vpop.f32.mrf.mxu0
    %v802 = vadd.f32 0.0, %v801
    %803 = vdwg.mxu0
    %v804 = vadd.f32 %v366, %v802
    %v805 = vtanh.pop %v804
    %v806 = vxor.u32 %v804, 2147483648
    %v807 = vmul.f32 %v806, 1.442695
    %v808 = vpow.pop %v807
    %v809 = vadd.f32 %v808, 1.0
    %v810 = vrcp.pop %v809
    %v811 = vmul.f32 %v809, %v810
    %v812 = vsub.f32 1.0, %v811
    %v813 = vmul.f32 %v810, %v812
    %v814 = vadd.f32 %v810, %v813
    %vm815 = vweird.f32 %v809
    %vm816 = vweird.f32 %v810
    %vm817 = vmor %vm815, %vm816
    %v818 = vsel %vm817, %v810, %v814
    %v819 = vand.u32 2147483647, %v809
    %vm820 = vcmp.eq.f32.partialorder %v819, 8.507059e+37
    %v821 = vand.u32 %v809, 2147483648
    %v822 = vor.u32 1.1754944e-38, %v821
    %v823 = vsel %vm820, %v822, %v818
    %v824 = vmul.f32 1.0, %v823
    %v825 = vsel %vm274, %v805, %v824
    %v826 = vmul.f32 %v825, %v769
    %828 = vrot.lane.b32.xlu0 %v825, 64
    %v829 = vpop.permute.xlu0 %828
    %v831 = vmul.f32 %v825, %v829
    %833 = vrot.lane.b32.xlu0 %v831, 32
    %v834 = vpop.permute.xlu0 %833
    %v836 = vadd.f32 %v826, %v834
    %v837 = vtanh.pop %v836
    %839 = vrot.lane.b32.xlu0 %v837, 64
    %v840 = vpop.permute.xlu0 %839
    %v842 = vmul.f32 %v825, %v840
    %844 = vrot.lane.b32.xlu0 %v842, 32
    %v845 = vpop.permute.xlu0 %844
    %s847 = scalar_lea.vmem [#allocation2], 12
    %848 = vst.msk [vmem:[%s847] sm:$0x3] %vm445, %v845
    %v849 = vsel %vm378, %v845, 0
    %851 = vmatpush.msra.mxu0 0.0
    %852 = vmatpush.msra.mxu0 0.0
    %853 = vmatpush.msra.mxu0 0.0
    %854 = vmatpush.msra.mxu0 0.0
    %855 = vmatpush.msra.mxu0 0.0
    %856 = vmatpush.msra.mxu0 0.0
    %857 = vmatpush.msra.mxu0 0.0
    %858 = vmatpush.msra.mxu0 0.0
    %859 = vmatpush.msra.mxu0 0.0
    %860 = vmatpush.msra.mxu0 0.0
    %861 = vmatpush.msra.mxu0 0.0
    %862 = vmatpush.msra.mxu0 0.0
    %863 = vmatpush.msra.mxu0 %v377
    %864 = vmatpush.msra.mxu0 %v376
    %865 = vmatpush.msra.mxu0 %v375
    %866 = vmatpush.msra.mxu0 %v374
    %867 = vmatmul.f32.gmra.mxu0 %v849
    %v868 = vpop.f32.mrf.mxu0
    %v869 = vadd.f32 0.0, %v868
    %870 = vdwg.mxu0
    %v871 = vadd.f32 %v367, %v869
    %v872 = vtanh.pop %v871
    %v873 = vxor.u32 %v871, 2147483648
    %v874 = vmul.f32 %v873, 1.442695
    %v875 = vpow.pop %v874
    %v876 = vadd.f32 %v875, 1.0
    %v877 = vrcp.pop %v876
    %v878 = vmul.f32 %v876, %v877
    %v879 = vsub.f32 1.0, %v878
    %v880 = vmul.f32 %v877, %v879
    %v881 = vadd.f32 %v877, %v880
    %vm882 = vweird.f32 %v876
    %vm883 = vweird.f32 %v877
    %vm884 = vmor %vm882, %vm883
    %v885 = vsel %vm884, %v877, %v881
    %v886 = vand.u32 2147483647, %v876
    %vm887 = vcmp.eq.f32.partialorder %v886, 8.507059e+37
    %v888 = vand.u32 %v876, 2147483648
    %v889 = vor.u32 1.1754944e-38, %v888
    %v890 = vsel %vm887, %v889, %v885
    %v891 = vmul.f32 1.0, %v890
    %v892 = vsel %vm274, %v872, %v891
    %v893 = vmul.f32 %v892, %v836
    %895 = vrot.lane.b32.xlu0 %v892, 64
    %v896 = vpop.permute.xlu0 %895
    %v898 = vmul.f32 %v892, %v896
    %900 = vrot.lane.b32.xlu0 %v898, 32
    %v901 = vpop.permute.xlu0 %900
    %v903 = vadd.f32 %v893, %v901
    %v904 = vtanh.pop %v903
    %906 = vrot.lane.b32.xlu0 %v904, 64
    %v907 = vpop.permute.xlu0 %906
    %v909 = vmul.f32 %v892, %v907
    %911 = vrot.lane.b32.xlu0 %v909, 32
    %v912 = vpop.permute.xlu0 %911
    %s914 = scalar_lea.vmem [#allocation2], 14
    %915 = vst.msk [vmem:[%s914] sm:$0x3] %vm445, %v912
    %v916 = vld [vmem:[#allocation2] sm:$0x3]
    %v917 = vld [vmem:[#allocation2 + $0x2] sm:$0x3]
    %v918 = vld [vmem:[#allocation2 + $0x4] sm:$0x3]
    %v919 = vld [vmem:[#allocation2 + $0x6] sm:$0x3]
    %v920 = vld [vmem:[#allocation2 + $0x8] sm:$0x3]
    %v921 = vld [vmem:[#allocation2 + $0xa] sm:$0x3]
    %v922 = vld [vmem:[#allocation2 + $0xc] sm:$0x3]
    %v923 = vld [vmem:[#allocation2 + $0xe] sm:$0x3]
    %v924 = vld [vmem:[%s4] sm:$0xff]
    %v925 = vld [vmem:[%s4 + $0x8] sm:$0xff]
    %v926 = vld [vmem:[%s4 + $0x10] sm:$0xff]
    %v927 = vld [vmem:[%s4 + $0x18] sm:$0xff]
    %v928 = vld [vmem:[%s6] sm:$0x1]
    %v930 = vperm.slane %v928, 0
    %939 = vst [vmem:[#allocation1] ss:$4 sm:$0xff] %v916
    %s940 = scalar_lea.vmem [#allocation1], 1
    %941 = vst [vmem:[%s940] ss:$4 sm:$0xff] %v917
    %s942 = scalar_lea.vmem [#allocation1], 2
    %943 = vst [vmem:[%s942] ss:$4 sm:$0xff] %v918
    %s944 = scalar_lea.vmem [#allocation1], 3
    %945 = vst [vmem:[%s944] ss:$4 sm:$0xff] %v919
    %s946 = scalar_lea.vmem [#allocation1], 32
    %947 = vst [vmem:[%s946] ss:$4 sm:$0xff] %v920
    %s948 = scalar_lea.vmem [#allocation1], 33
    %949 = vst [vmem:[%s948] ss:$4 sm:$0xff] %v921
    %s950 = scalar_lea.vmem [#allocation1], 34
    %951 = vst [vmem:[%s950] ss:$4 sm:$0xff] %v922
    %s952 = scalar_lea.vmem [#allocation1], 35
    %953 = vst [vmem:[%s952] ss:$4 sm:$0xff] %v923
    %v954 = vld.sshfl [vmem:[#allocation1] sm:$0xff pattern:$0x73625140]
    %v955 = vld.sshfl [vmem:[#allocation1 + $0x20] sm:$0xff pattern:$0x73625140]
    %956 = vst [vmem:[#allocation1] ss:$4 sm:$0xff] %v930
    %s957 = scalar_lea.vmem [#allocation1], 1
    %958 = vst [vmem:[%s957] ss:$4 sm:$0xff] %v930
    %s959 = scalar_lea.vmem [#allocation1], 2
    %960 = vst [vmem:[%s959] ss:$4 sm:$0xff] %v930
    %s961 = scalar_lea.vmem [#allocation1], 3
    %962 = vst [vmem:[%s961] ss:$4 sm:$0xff] %v930
    %s963 = scalar_lea.vmem [#allocation1], 32
    %964 = vst [vmem:[%s963] ss:$4 sm:$0xff] %v930
    %s965 = scalar_lea.vmem [#allocation1], 33
    %966 = vst [vmem:[%s965] ss:$4 sm:$0xff] %v930
    %s967 = scalar_lea.vmem [#allocation1], 34
    %968 = vst [vmem:[%s967] ss:$4 sm:$0xff] %v930
    %s969 = scalar_lea.vmem [#allocation1], 35
    %970 = vst [vmem:[%s969] ss:$4 sm:$0xff] %v930
    %v971 = vld.sshfl [vmem:[#allocation1] sm:$0xff pattern:$0x73625140]
    %v972 = vld.sshfl [vmem:[#allocation1 + $0x20] sm:$0xff pattern:$0x73625140]
    %v975 = vsel %vm378, %v954, 0
    %v977 = vsel %vm378, %v955, 0
    %979 = vmatpush.msra.mxu0 0.0
    %980 = vmatpush.msra.mxu0 0.0
    %981 = vmatpush.msra.mxu0 0.0
    %982 = vmatpush.msra.mxu0 0.0
    %983 = vmatpush.msra.mxu0 0.0
    %984 = vmatpush.msra.mxu0 0.0
    %985 = vmatpush.msra.mxu0 0.0
    %986 = vmatpush.msra.mxu0 0.0
    %987 = vmatpush.msra.mxu0 0.0
    %988 = vmatpush.msra.mxu0 0.0
    %989 = vmatpush.msra.mxu0 0.0
    %990 = vmatpush.msra.mxu0 0.0
    %991 = vmatpush.msra.mxu0 %v927
    %992 = vmatpush.msra.mxu0 %v926
    %993 = vmatpush.msra.mxu0 %v925
    %994 = vmatpush.msra.mxu0 %v924
    %995 = vmatmul.f32.gmra.mxu0 %v975
    %v996 = vpop.f32.mrf.mxu0
    %v997 = vadd.f32 %v971, %v996
    %998 = vmatmul.f32.gmra.mxu0 %v977
    %v999 = vpop.f32.mrf.mxu0
    %v1000 = vadd.f32 %v972, %v999
    %1001 = vdwg.mxu0
    %v1004 = vrot.slane %v997, 2
    %v1005 = vrot.slane %v997, 4
    %v1006 = vrot.slane %v997, 6
    %v1007 = vrot.slane %v1000, 2
    %v1008 = vrot.slane %v1000, 4
    %v1009 = vrot.slane %v1000, 6
    %v1016 = vld [vmem:[#allocation6] sm:$0xff]
    %v1017 = vld [vmem:[#allocation6 + $0x8] sm:$0xff]
    %v1018 = vld [vmem:[#allocation6 + $0x10] sm:$0xff]
    %v1019 = vld [vmem:[#allocation6 + $0x18] sm:$0xff]
    %1020 = vmatpush.msra.mxu0 0.0
    %1021 = vmatpush.msra.mxu0 0.0
    %1022 = vmatpush.msra.mxu0 0.0
    %1023 = vmatpush.msra.mxu0 0.0
    %1024 = vmatpush.msra.mxu0 0.0
    %1025 = vmatpush.msra.mxu0 0.0
    %1026 = vmatpush.msra.mxu0 0.0
    %1027 = vmatpush.msra.mxu0 0.0
    %1028 = vmatpush.msra.mxu0 0.0
    %1029 = vmatpush.msra.mxu0 0.0
    %1030 = vmatpush.msra.mxu0 0.0
    %1031 = vmatpush.msra.mxu0 0.0
    %1032 = vmatpush.msra.mxu0 %v1019
    %1033 = vmatpush.msra.mxu0 %v1018
    %1034 = vmatpush.msra.mxu0 %v1017
    %1035 = vmatpush.msra.mxu0 %v1016
    %1036 = vmatmul.f32.gmra.mxu0 %v380
    %v1037 = vpop.f32.mrf.mxu0
    %v1038 = vadd.f32 0.0, %v1037
    %1039 = vdwg.mxu0
    %v1040 = vadd.f32 %v997, %v1038
    %v1041 = vtanh.pop %v1040
    %v1042 = vxor.u32 %v1040, 2147483648
    %v1043 = vmul.f32 %v1042, 1.442695
    %v1044 = vpow.pop %v1043
    %v1045 = vadd.f32 %v1044, 1.0
    %v1046 = vrcp.pop %v1045
    %v1047 = vmul.f32 %v1045, %v1046
    %v1048 = vsub.f32 1.0, %v1047
    %v1049 = vmul.f32 %v1046, %v1048
    %v1050 = vadd.f32 %v1046, %v1049
    %vm1051 = vweird.f32 %v1045
    %vm1052 = vweird.f32 %v1046
    %vm1053 = vmor %vm1051, %vm1052
    %v1054 = vsel %vm1053, %v1046, %v1050
    %v1055 = vand.u32 2147483647, %v1045
    %vm1056 = vcmp.eq.f32.partialorder %v1055, 8.507059e+37
    %v1057 = vand.u32 %v1045, 2147483648
    %v1058 = vor.u32 1.1754944e-38, %v1057
    %v1059 = vsel %vm1056, %v1058, %v1054
    %v1060 = vmul.f32 1.0, %v1059
    %v1061 = vsel %vm274, %v1041, %v1060
    %v1062 = vmul.f32 %v1061, 0.0
    %1064 = vrot.lane.b32.xlu0 %v1061, 64
    %v1065 = vpop.permute.xlu0 %1064
    %v1067 = vmul.f32 %v1061, %v1065
    %1069 = vrot.lane.b32.xlu0 %v1067, 32
    %v1070 = vpop.permute.xlu0 %1069
    %v1072 = vadd.f32 %v1062, %v1070
    %v1073 = vtanh.pop %v1072
    %1075 = vrot.lane.b32.xlu0 %v1073, 64
    %v1076 = vpop.permute.xlu0 %1075
    %v1078 = vmul.f32 %v1061, %v1076
    %1080 = vrot.lane.b32.xlu0 %v1078, 32
    %v1081 = vpop.permute.xlu0 %1080
    %1083 = vst.msk [vmem:[#allocation2] sm:$0x3] %vm445, %v1081
    %v1084 = vsel %vm378, %v1081, 0
    %1086 = vmatpush.msra.mxu0 0.0
    %1087 = vmatpush.msra.mxu0 0.0
    %1088 = vmatpush.msra.mxu0 0.0
    %1089 = vmatpush.msra.mxu0 0.0
    %1090 = vmatpush.msra.mxu0 0.0
    %1091 = vmatpush.msra.mxu0 0.0
    %1092 = vmatpush.msra.mxu0 0.0
    %1093 = vmatpush.msra.mxu0 0.0
    %1094 = vmatpush.msra.mxu0 0.0
    %1095 = vmatpush.msra.mxu0 0.0
    %1096 = vmatpush.msra.mxu0 0.0
    %1097 = vmatpush.msra.mxu0 0.0
    %1098 = vmatpush.msra.mxu0 %v1019
    %1099 = vmatpush.msra.mxu0 %v1018
    %1100 = vmatpush.msra.mxu0 %v1017
    %1101 = vmatpush.msra.mxu0 %v1016
    %1102 = vmatmul.f32.gmra.mxu0 %v1084
    %v1103 = vpop.f32.mrf.mxu0
    %v1104 = vadd.f32 0.0, %v1103
    %1105 = vdwg.mxu0
    %v1106 = vadd.f32 %v1004, %v1104
    %v1107 = vtanh.pop %v1106
    %v1108 = vxor.u32 %v1106, 2147483648
    %v1109 = vmul.f32 %v1108, 1.442695
    %v1110 = vpow.pop %v1109
    %v1111 = vadd.f32 %v1110, 1.0
    %v1112 = vrcp.pop %v1111
    %v1113 = vmul.f32 %v1111, %v1112
    %v1114 = vsub.f32 1.0, %v1113
    %v1115 = vmul.f32 %v1112, %v1114
    %v1116 = vadd.f32 %v1112, %v1115
    %vm1117 = vweird.f32 %v1111
    %vm1118 = vweird.f32 %v1112
    %vm1119 = vmor %vm1117, %vm1118
    %v1120 = vsel %vm1119, %v1112, %v1116
    %v1121 = vand.u32 2147483647, %v1111
    %vm1122 = vcmp.eq.f32.partialorder %v1121, 8.507059e+37
    %v1123 = vand.u32 %v1111, 2147483648
    %v1124 = vor.u32 1.1754944e-38, %v1123
    %v1125 = vsel %vm1122, %v1124, %v1120
    %v1126 = vmul.f32 1.0, %v1125
    %v1127 = vsel %vm274, %v1107, %v1126
    %v1128 = vmul.f32 %v1127, %v1072
    %1130 = vrot.lane.b32.xlu0 %v1127, 64
    %v1131 = vpop.permute.xlu0 %1130
    %v1133 = vmul.f32 %v1127, %v1131
    %1135 = vrot.lane.b32.xlu0 %v1133, 32
    %v1136 = vpop.permute.xlu0 %1135
    %v1138 = vadd.f32 %v1128, %v1136
    %v1139 = vtanh.pop %v1138
    %1141 = vrot.lane.b32.xlu0 %v1139, 64
    %v1142 = vpop.permute.xlu0 %1141
    %v1144 = vmul.f32 %v1127, %v1142
    %1146 = vrot.lane.b32.xlu0 %v1144, 32
    %v1147 = vpop.permute.xlu0 %1146
    %1149 = vst.msk [vmem:[%s512] sm:$0x3] %vm445, %v1147
    %v1150 = vsel %vm378, %v1147, 0
    %1152 = vmatpush.msra.mxu0 0.0
    %1153 = vmatpush.msra.mxu0 0.0
    %1154 = vmatpush.msra.mxu0 0.0
    %1155 = vmatpush.msra.mxu0 0.0
    %1156 = vmatpush.msra.mxu0 0.0
    %1157 = vmatpush.msra.mxu0 0.0
    %1158 = vmatpush.msra.mxu0 0.0
    %1159 = vmatpush.msra.mxu0 0.0
    %1160 = vmatpush.msra.mxu0 0.0
    %1161 = vmatpush.msra.mxu0 0.0
    %1162 = vmatpush.msra.mxu0 0.0
    %1163 = vmatpush.msra.mxu0 0.0
    %1164 = vmatpush.msra.mxu0 %v1019
    %1165 = vmatpush.msra.mxu0 %v1018
    %1166 = vmatpush.msra.mxu0 %v1017
    %1167 = vmatpush.msra.mxu0 %v1016
    %1168 = vmatmul.f32.gmra.mxu0 %v1150
    %v1169 = vpop.f32.mrf.mxu0
    %v1170 = vadd.f32 0.0, %v1169
    %1171 = vdwg.mxu0
    %v1172 = vadd.f32 %v1005, %v1170
    %v1173 = vtanh.pop %v1172
    %v1174 = vxor.u32 %v1172, 2147483648
    %v1175 = vmul.f32 %v1174, 1.442695
    %v1176 = vpow.pop %v1175
    %v1177 = vadd.f32 %v1176, 1.0
    %v1178 = vrcp.pop %v1177
    %v1179 = vmul.f32 %v1177, %v1178
    %v1180 = vsub.f32 1.0, %v1179
    %v1181 = vmul.f32 %v1178, %v1180
    %v1182 = vadd.f32 %v1178, %v1181
    %vm1183 = vweird.f32 %v1177
    %vm1184 = vweird.f32 %v1178
    %vm1185 = vmor %vm1183, %vm1184
    %v1186 = vsel %vm1185, %v1178, %v1182
    %v1187 = vand.u32 2147483647, %v1177
    %vm1188 = vcmp.eq.f32.partialorder %v1187, 8.507059e+37
    %v1189 = vand.u32 %v1177, 2147483648
    %v1190 = vor.u32 1.1754944e-38, %v1189
    %v1191 = vsel %vm1188, %v1190, %v1186
    %v1192 = vmul.f32 1.0, %v1191
    %v1193 = vsel %vm274, %v1173, %v1192
    %v1194 = vmul.f32 %v1193, %v1138
    %1196 = vrot.lane.b32.xlu0 %v1193, 64
    %v1197 = vpop.permute.xlu0 %1196
    %v1199 = vmul.f32 %v1193, %v1197
    %1201 = vrot.lane.b32.xlu0 %v1199, 32
    %v1202 = vpop.permute.xlu0 %1201
    %v1204 = vadd.f32 %v1194, %v1202
    %v1205 = vtanh.pop %v1204
    %1207 = vrot.lane.b32.xlu0 %v1205, 64
    %v1208 = vpop.permute.xlu0 %1207
    %v1210 = vmul.f32 %v1193, %v1208
    %1212 = vrot.lane.b32.xlu0 %v1210, 32
    %v1213 = vpop.permute.xlu0 %1212
    %1215 = vst.msk [vmem:[%s579] sm:$0x3] %vm445, %v1213
    %v1216 = vsel %vm378, %v1213, 0
    %1218 = vmatpush.msra.mxu0 0.0
    %1219 = vmatpush.msra.mxu0 0.0
    %1220 = vmatpush.msra.mxu0 0.0
    %1221 = vmatpush.msra.mxu0 0.0
    %1222 = vmatpush.msra.mxu0 0.0
    %1223 = vmatpush.msra.mxu0 0.0
    %1224 = vmatpush.msra.mxu0 0.0
    %1225 = vmatpush.msra.mxu0 0.0
    %1226 = vmatpush.msra.mxu0 0.0
    %1227 = vmatpush.msra.mxu0 0.0
    %1228 = vmatpush.msra.mxu0 0.0
    %1229 = vmatpush.msra.mxu0 0.0
    %1230 = vmatpush.msra.mxu0 %v1019
    %1231 = vmatpush.msra.mxu0 %v1018
    %1232 = vmatpush.msra.mxu0 %v1017
    %1233 = vmatpush.msra.mxu0 %v1016
    %1234 = vmatmul.f32.gmra.mxu0 %v1216
    %v1235 = vpop.f32.mrf.mxu0
    %v1236 = vadd.f32 0.0, %v1235
    %1237 = vdwg.mxu0
    %v1238 = vadd.f32 %v1006, %v1236
    %v1239 = vtanh.pop %v1238
    %v1240 = vxor.u32 %v1238, 2147483648
    %v1241 = vmul.f32 %v1240, 1.442695
    %v1242 = vpow.pop %v1241
    %v1243 = vadd.f32 %v1242, 1.0
    %v1244 = vrcp.pop %v1243
    %v1245 = vmul.f32 %v1243, %v1244
    %v1246 = vsub.f32 1.0, %v1245
    %v1247 = vmul.f32 %v1244, %v1246
    %v1248 = vadd.f32 %v1244, %v1247
    %vm1249 = vweird.f32 %v1243
    %vm1250 = vweird.f32 %v1244
    %vm1251 = vmor %vm1249, %vm1250
    %v1252 = vsel %vm1251, %v1244, %v1248
    %v1253 = vand.u32 2147483647, %v1243
    %vm1254 = vcmp.eq.f32.partialorder %v1253, 8.507059e+37
    %v1255 = vand.u32 %v1243, 2147483648
    %v1256 = vor.u32 1.1754944e-38, %v1255
    %v1257 = vsel %vm1254, %v1256, %v1252
    %v1258 = vmul.f32 1.0, %v1257
    %v1259 = vsel %vm274, %v1239, %v1258
    %v1260 = vmul.f32 %v1259, %v1204
    %1262 = vrot.lane.b32.xlu0 %v1259, 64
    %v1263 = vpop.permute.xlu0 %1262
    %v1265 = vmul.f32 %v1259, %v1263
    %1267 = vrot.lane.b32.xlu0 %v1265, 32
    %v1268 = vpop.permute.xlu0 %1267
    %v1270 = vadd.f32 %v1260, %v1268
    %v1271 = vtanh.pop %v1270
    %1273 = vrot.lane.b32.xlu0 %v1271, 64
    %v1274 = vpop.permute.xlu0 %1273
    %v1276 = vmul.f32 %v1259, %v1274
    %1278 = vrot.lane.b32.xlu0 %v1276, 32
    %v1279 = vpop.permute.xlu0 %1278
    %1281 = vst.msk [vmem:[%s646] sm:$0x3] %vm445, %v1279
    %v1282 = vsel %vm378, %v1279, 0
    %1284 = vmatpush.msra.mxu0 0.0
    %1285 = vmatpush.msra.mxu0 0.0
    %1286 = vmatpush.msra.mxu0 0.0
    %1287 = vmatpush.msra.mxu0 0.0
    %1288 = vmatpush.msra.mxu0 0.0
    %1289 = vmatpush.msra.mxu0 0.0
    %1290 = vmatpush.msra.mxu0 0.0
    %1291 = vmatpush.msra.mxu0 0.0
    %1292 = vmatpush.msra.mxu0 0.0
    %1293 = vmatpush.msra.mxu0 0.0
    %1294 = vmatpush.msra.mxu0 0.0
    %1295 = vmatpush.msra.mxu0 0.0
    %1296 = vmatpush.msra.mxu0 %v1019
    %1297 = vmatpush.msra.mxu0 %v1018
    %1298 = vmatpush.msra.mxu0 %v1017
    %1299 = vmatpush.msra.mxu0 %v1016
    %1300 = vmatmul.f32.gmra.mxu0 %v1282
    %v1301 = vpop.f32.mrf.mxu0
    %v1302 = vadd.f32 0.0, %v1301
    %1303 = vdwg.mxu0
    %v1304 = vadd.f32 %v1000, %v1302
    %v1305 = vtanh.pop %v1304
    %v1306 = vxor.u32 %v1304, 2147483648
    %v1307 = vmul.f32 %v1306, 1.442695
    %v1308 = vpow.pop %v1307
    %v1309 = vadd.f32 %v1308, 1.0
    %v1310 = vrcp.pop %v1309
    %v1311 = vmul.f32 %v1309, %v1310
    %v1312 = vsub.f32 1.0, %v1311
    %v1313 = vmul.f32 %v1310, %v1312
    %v1314 = vadd.f32 %v1310, %v1313
    %vm1315 = vweird.f32 %v1309
    %vm1316 = vweird.f32 %v1310
    %vm1317 = vmor %vm1315, %vm1316
    %v1318 = vsel %vm1317, %v1310, %v1314
    %v1319 = vand.u32 2147483647, %v1309
    %vm1320 = vcmp.eq.f32.partialorder %v1319, 8.507059e+37
    %v1321 = vand.u32 %v1309, 2147483648
    %v1322 = vor.u32 1.1754944e-38, %v1321
    %v1323 = vsel %vm1320, %v1322, %v1318
    %v1324 = vmul.f32 1.0, %v1323
    %v1325 = vsel %vm274, %v1305, %v1324
    %v1326 = vmul.f32 %v1325, %v1270
    %1328 = vrot.lane.b32.xlu0 %v1325, 64
    %v1329 = vpop.permute.xlu0 %1328
    %v1331 = vmul.f32 %v1325, %v1329
    %1333 = vrot.lane.b32.xlu0 %v1331, 32
    %v1334 = vpop.permute.xlu0 %1333
    %v1336 = vadd.f32 %v1326, %v1334
    %v1337 = vtanh.pop %v1336
    %1339 = vrot.lane.b32.xlu0 %v1337, 64
    %v1340 = vpop.permute.xlu0 %1339
    %v1342 = vmul.f32 %v1325, %v1340
    %1344 = vrot.lane.b32.xlu0 %v1342, 32
    %v1345 = vpop.permute.xlu0 %1344
    %1347 = vst.msk [vmem:[%s713] sm:$0x3] %vm445, %v1345
    %v1348 = vsel %vm378, %v1345, 0
    %1350 = vmatpush.msra.mxu0 0.0
    %1351 = vmatpush.msra.mxu0 0.0
    %1352 = vmatpush.msra.mxu0 0.0
    %1353 = vmatpush.msra.mxu0 0.0
    %1354 = vmatpush.msra.mxu0 0.0
    %1355 = vmatpush.msra.mxu0 0.0
    %1356 = vmatpush.msra.mxu0 0.0
    %1357 = vmatpush.msra.mxu0 0.0
    %1358 = vmatpush.msra.mxu0 0.0
    %1359 = vmatpush.msra.mxu0 0.0
    %1360 = vmatpush.msra.mxu0 0.0
    %1361 = vmatpush.msra.mxu0 0.0
    %1362 = vmatpush.msra.mxu0 %v1019
    %1363 = vmatpush.msra.mxu0 %v1018
    %1364 = vmatpush.msra.mxu0 %v1017
    %1365 = vmatpush.msra.mxu0 %v1016
    %1366 = vmatmul.f32.gmra.mxu0 %v1348
    %v1367 = vpop.f32.mrf.mxu0
    %v1368 = vadd.f32 0.0, %v1367
    %1369 = vdwg.mxu0
    %v1370 = vadd.f32 %v1007, %v1368
    %v1371 = vtanh.pop %v1370
    %v1372 = vxor.u32 %v1370, 2147483648
    %v1373 = vmul.f32 %v1372, 1.442695
    %v1374 = vpow.pop %v1373
    %v1375 = vadd.f32 %v1374, 1.0
    %v1376 = vrcp.pop %v1375
    %v1377 = vmul.f32 %v1375, %v1376
    %v1378 = vsub.f32 1.0, %v1377
    %v1379 = vmul.f32 %v1376, %v1378
    %v1380 = vadd.f32 %v1376, %v1379
    %vm1381 = vweird.f32 %v1375
    %vm1382 = vweird.f32 %v1376
    %vm1383 = vmor %vm1381, %vm1382
    %v1384 = vsel %vm1383, %v1376, %v1380
    %v1385 = vand.u32 2147483647, %v1375
    %vm1386 = vcmp.eq.f32.partialorder %v1385, 8.507059e+37
    %v1387 = vand.u32 %v1375, 2147483648
    %v1388 = vor.u32 1.1754944e-38, %v1387
    %v1389 = vsel %vm1386, %v1388, %v1384
    %v1390 = vmul.f32 1.0, %v1389
    %v1391 = vsel %vm274, %v1371, %v1390
    %v1392 = vmul.f32 %v1391, %v1336
    %1394 = vrot.lane.b32.xlu0 %v1391, 64
    %v1395 = vpop.permute.xlu0 %1394
    %v1397 = vmul.f32 %v1391, %v1395
    %1399 = vrot.lane.b32.xlu0 %v1397, 32
    %v1400 = vpop.permute.xlu0 %1399
    %v1402 = vadd.f32 %v1392, %v1400
    %v1403 = vtanh.pop %v1402
    %1405 = vrot.lane.b32.xlu0 %v1403, 64
    %v1406 = vpop.permute.xlu0 %1405
    %v1408 = vmul.f32 %v1391, %v1406
    %1410 = vrot.lane.b32.xlu0 %v1408, 32
    %v1411 = vpop.permute.xlu0 %1410
    %1413 = vst.msk [vmem:[%s780] sm:$0x3] %vm445, %v1411
    %v1414 = vsel %vm378, %v1411, 0
    %1416 = vmatpush.msra.mxu0 0.0
    %1417 = vmatpush.msra.mxu0 0.0
    %1418 = vmatpush.msra.mxu0 0.0
    %1419 = vmatpush.msra.mxu0 0.0
    %1420 = vmatpush.msra.mxu0 0.0
    %1421 = vmatpush.msra.mxu0 0.0
    %1422 = vmatpush.msra.mxu0 0.0
    %1423 = vmatpush.msra.mxu0 0.0
    %1424 = vmatpush.msra.mxu0 0.0
    %1425 = vmatpush.msra.mxu0 0.0
    %1426 = vmatpush.msra.mxu0 0.0
    %1427 = vmatpush.msra.mxu0 0.0
    %1428 = vmatpush.msra.mxu0 %v1019
    %1429 = vmatpush.msra.mxu0 %v1018
    %1430 = vmatpush.msra.mxu0 %v1017
    %1431 = vmatpush.msra.mxu0 %v1016
    %1432 = vmatmul.f32.gmra.mxu0 %v1414
    %v1433 = vpop.f32.mrf.mxu0
    %v1434 = vadd.f32 0.0, %v1433
    %1435 = vdwg.mxu0
    %v1436 = vadd.f32 %v1008, %v1434
    %v1437 = vtanh.pop %v1436
    %v1438 = vxor.u32 %v1436, 2147483648
    %v1439 = vmul.f32 %v1438, 1.442695
    %v1440 = vpow.pop %v1439
    %v1441 = vadd.f32 %v1440, 1.0
    %v1442 = vrcp.pop %v1441
    %v1443 = vmul.f32 %v1441, %v1442
    %v1444 = vsub.f32 1.0, %v1443
    %v1445 = vmul.f32 %v1442, %v1444
    %v1446 = vadd.f32 %v1442, %v1445
    %vm1447 = vweird.f32 %v1441
    %vm1448 = vweird.f32 %v1442
    %vm1449 = vmor %vm1447, %vm1448
    %v1450 = vsel %vm1449, %v1442, %v1446
    %v1451 = vand.u32 2147483647, %v1441
    %vm1452 = vcmp.eq.f32.partialorder %v1451, 8.507059e+37
    %v1453 = vand.u32 %v1441, 2147483648
    %v1454 = vor.u32 1.1754944e-38, %v1453
    %v1455 = vsel %vm1452, %v1454, %v1450
    %v1456 = vmul.f32 1.0, %v1455
    %v1457 = vsel %vm274, %v1437, %v1456
    %v1458 = vmul.f32 %v1457, %v1402
    %1460 = vrot.lane.b32.xlu0 %v1457, 64
    %v1461 = vpop.permute.xlu0 %1460
    %v1463 = vmul.f32 %v1457, %v1461
    %1465 = vrot.lane.b32.xlu0 %v1463, 32
    %v1466 = vpop.permute.xlu0 %1465
    %v1468 = vadd.f32 %v1458, %v1466
    %v1469 = vtanh.pop %v1468
    %1471 = vrot.lane.b32.xlu0 %v1469, 64
    %v1472 = vpop.permute.xlu0 %1471
    %v1474 = vmul.f32 %v1457, %v1472
    %1476 = vrot.lane.b32.xlu0 %v1474, 32
    %v1477 = vpop.permute.xlu0 %1476
    %1479 = vst.msk [vmem:[%s847] sm:$0x3] %vm445, %v1477
    %v1480 = vsel %vm378, %v1477, 0
    %1482 = vmatpush.msra.mxu0 0.0
    %1483 = vmatpush.msra.mxu0 0.0
    %1484 = vmatpush.msra.mxu0 0.0
    %1485 = vmatpush.msra.mxu0 0.0
    %1486 = vmatpush.msra.mxu0 0.0
    %1487 = vmatpush.msra.mxu0 0.0
    %1488 = vmatpush.msra.mxu0 0.0
    %1489 = vmatpush.msra.mxu0 0.0
    %1490 = vmatpush.msra.mxu0 0.0
    %1491 = vmatpush.msra.mxu0 0.0
    %1492 = vmatpush.msra.mxu0 0.0
    %1493 = vmatpush.msra.mxu0 0.0
    %1494 = vmatpush.msra.mxu0 %v1019
    %1495 = vmatpush.msra.mxu0 %v1018
    %1496 = vmatpush.msra.mxu0 %v1017
    %1497 = vmatpush.msra.mxu0 %v1016
    %1498 = vmatmul.f32.gmra.mxu0 %v1480
    %v1499 = vpop.f32.mrf.mxu0
    %v1500 = vadd.f32 0.0, %v1499
    %1501 = vdwg.mxu0
    %v1502 = vadd.f32 %v1009, %v1500
    %v1503 = vtanh.pop %v1502
    %v1504 = vxor.u32 %v1502, 2147483648
    %v1505 = vmul.f32 %v1504, 1.442695
    %v1506 = vpow.pop %v1505
    %v1507 = vadd.f32 %v1506, 1.0
    %v1508 = vrcp.pop %v1507
    %v1509 = vmul.f32 %v1507, %v1508
    %v1510 = vsub.f32 1.0, %v1509
    %v1511 = vmul.f32 %v1508, %v1510
    %v1512 = vadd.f32 %v1508, %v1511
    %vm1513 = vweird.f32 %v1507
    %vm1514 = vweird.f32 %v1508
    %vm1515 = vmor %vm1513, %vm1514
    %v1516 = vsel %vm1515, %v1508, %v1512
    %v1517 = vand.u32 2147483647, %v1507
    %vm1518 = vcmp.eq.f32.partialorder %v1517, 8.507059e+37
    %v1519 = vand.u32 %v1507, 2147483648
    %v1520 = vor.u32 1.1754944e-38, %v1519
    %v1521 = vsel %vm1518, %v1520, %v1516
    %v1522 = vmul.f32 1.0, %v1521
    %v1523 = vsel %vm274, %v1503, %v1522
    %v1524 = vmul.f32 %v1523, %v1468
    %1526 = vrot.lane.b32.xlu0 %v1523, 64
    %v1527 = vpop.permute.xlu0 %1526
    %v1529 = vmul.f32 %v1523, %v1527
    %1531 = vrot.lane.b32.xlu0 %v1529, 32
    %v1532 = vpop.permute.xlu0 %1531
    %v1534 = vadd.f32 %v1524, %v1532
    %v1535 = vtanh.pop %v1534
    %1537 = vrot.lane.b32.xlu0 %v1535, 64
    %v1538 = vpop.permute.xlu0 %1537
    %v1540 = vmul.f32 %v1523, %v1538
    %1542 = vrot.lane.b32.xlu0 %v1540, 32
    %v1543 = vpop.permute.xlu0 %1542
    %1545 = vst.msk [vmem:[%s914] sm:$0x3] %vm445, %v1543
    %v1546 = vld [vmem:[#allocation2] sm:$0x3]
    %v1547 = vld [vmem:[#allocation2 + $0x2] sm:$0x3]
    %v1548 = vld [vmem:[#allocation2 + $0x4] sm:$0x3]
    %v1549 = vld [vmem:[#allocation2 + $0x6] sm:$0x3]
    %v1550 = vld [vmem:[#allocation2 + $0x8] sm:$0x3]
    %v1551 = vld [vmem:[#allocation2 + $0xa] sm:$0x3]
    %v1552 = vld [vmem:[#allocation2 + $0xc] sm:$0x3]
    %v1553 = vld [vmem:[#allocation2 + $0xe] sm:$0x3]
    %v1554 = vld [vmem:[#allocation14] sm:$0xff]
    %v1555 = vld [vmem:[#allocation14 + $0x8] sm:$0xff]
    %v1556 = vld [vmem:[#allocation14 + $0x10] sm:$0xff]
    %v1557 = vld [vmem:[#allocation14 + $0x18] sm:$0xff]
    %v1558 = vld [vmem:[#allocation15] sm:$0x1]
    %v1560 = vperm.slane %v1558, 0
    %1569 = vst [vmem:[#allocation1] ss:$4 sm:$0xff] %v1546
    %s1570 = scalar_lea.vmem [#allocation1], 1
    %1571 = vst [vmem:[%s1570] ss:$4 sm:$0xff] %v1547
    %s1572 = scalar_lea.vmem [#allocation1], 2
    %1573 = vst [vmem:[%s1572] ss:$4 sm:$0xff] %v1548
    %s1574 = scalar_lea.vmem [#allocation1], 3
    %1575 = vst [vmem:[%s1574] ss:$4 sm:$0xff] %v1549
    %s1576 = scalar_lea.vmem [#allocation1], 32
    %1577 = vst [vmem:[%s1576] ss:$4 sm:$0xff] %v1550
    %s1578 = scalar_lea.vmem [#allocation1], 33
    %1579 = vst [vmem:[%s1578] ss:$4 sm:$0xff] %v1551
    %s1580 = scalar_lea.vmem [#allocation1], 34
    %1581 = vst [vmem:[%s1580] ss:$4 sm:$0xff] %v1552
    %s1582 = scalar_lea.vmem [#allocation1], 35
    %1583 = vst [vmem:[%s1582] ss:$4 sm:$0xff] %v1553
    %v1584 = vld.sshfl [vmem:[#allocation1] sm:$0xff pattern:$0x73625140]
    %v1585 = vld.sshfl [vmem:[#allocation1 + $0x20] sm:$0xff pattern:$0x73625140]
    %1586 = vst [vmem:[#allocation1] ss:$4 sm:$0xff] %v1560
    %s1587 = scalar_lea.vmem [#allocation1], 1
    %1588 = vst [vmem:[%s1587] ss:$4 sm:$0xff] %v1560
    %s1589 = scalar_lea.vmem [#allocation1], 2
    %1590 = vst [vmem:[%s1589] ss:$4 sm:$0xff] %v1560
    %s1591 = scalar_lea.vmem [#allocation1], 3
    %1592 = vst [vmem:[%s1591] ss:$4 sm:$0xff] %v1560
    %s1593 = scalar_lea.vmem [#allocation1], 32
    %1594 = vst [vmem:[%s1593] ss:$4 sm:$0xff] %v1560
    %s1595 = scalar_lea.vmem [#allocation1], 33
    %1596 = vst [vmem:[%s1595] ss:$4 sm:$0xff] %v1560
    %s1597 = scalar_lea.vmem [#allocation1], 34
    %1598 = vst [vmem:[%s1597] ss:$4 sm:$0xff] %v1560
    %s1599 = scalar_lea.vmem [#allocation1], 35
    %1600 = vst [vmem:[%s1599] ss:$4 sm:$0xff] %v1560
    %v1601 = vld.sshfl [vmem:[#allocation1] sm:$0xff pattern:$0x73625140]
    %v1602 = vld.sshfl [vmem:[#allocation1 + $0x20] sm:$0xff pattern:$0x73625140]
    %v1605 = vsel %vm378, %v1584, 0
    %v1607 = vsel %vm378, %v1585, 0
    %1609 = vmatpush.msra.mxu0 0.0
    %1610 = vmatpush.msra.mxu0 0.0
    %1611 = vmatpush.msra.mxu0 0.0
    %1612 = vmatpush.msra.mxu0 0.0
    %1613 = vmatpush.msra.mxu0 0.0
    %1614 = vmatpush.msra.mxu0 0.0
    %1615 = vmatpush.msra.mxu0 0.0
    %1616 = vmatpush.msra.mxu0 0.0
    %1617 = vmatpush.msra.mxu0 0.0
    %1618 = vmatpush.msra.mxu0 0.0
    %1619 = vmatpush.msra.mxu0 0.0
    %1620 = vmatpush.msra.mxu0 0.0
    %1621 = vmatpush.msra.mxu0 %v1557
    %1622 = vmatpush.msra.mxu0 %v1556
    %1623 = vmatpush.msra.mxu0 %v1555
    %1624 = vmatpush.msra.mxu0 %v1554
    %1625 = vmatmul.f32.gmra.mxu0 %v1605
    %v1626 = vpop.f32.mrf.mxu0
    %v1627 = vadd.f32 %v1601, %v1626
    %1628 = vmatmul.f32.gmra.mxu0 %v1607
    %v1629 = vpop.f32.mrf.mxu0
    %v1630 = vadd.f32 %v1602, %v1629
    %1631 = vdwg.mxu0
    %v1634 = vrot.slane %v1627, 2
    %v1635 = vrot.slane %v1627, 4
    %v1636 = vrot.slane %v1627, 6
    %v1637 = vrot.slane %v1630, 2
    %v1638 = vrot.slane %v1630, 4
    %v1639 = vrot.slane %v1630, 6
    %v1640 = vld [vmem:[#allocation17] sm:$0xff]
    %v1641 = vld [vmem:[#allocation17 + $0x8] sm:$0xff]
    %v1642 = vld [vmem:[#allocation17 + $0x10] sm:$0xff]
    %v1643 = vld [vmem:[#allocation17 + $0x18] sm:$0xff]
    %v1644 = vld [vmem:[#allocation18] sm:$0x1]
    %v1645 = vperm.slane %v1627, 0
    %v1646 = vperm.slane %v1634, 0
    %v1647 = vperm.slane %v1635, 0
    %v1648 = vperm.slane %v1636, 0
    %v1649 = vperm.slane %v1630, 0
    %v1650 = vperm.slane %v1637, 0
    %v1651 = vperm.slane %v1638, 0
    %v1652 = vperm.slane %v1639, 0
    %vm1653 = vcmask 1041409
    %v1654 = vsel %vm1653, %v1646, %v1645
    %vm1655 = vcmask 1042434
    %v1656 = vsel %vm1655, %v1647, %v1654
    %vm1657 = vcmask 1043459
    %v1658 = vsel %vm1657, %v1648, %v1656
    %vm1659 = vcmask 1044484
    %v1660 = vsel %vm1659, %v1649, %v1658
    %vm1661 = vcmask 1045509
    %v1662 = vsel %vm1661, %v1650, %v1660
    %vm1663 = vcmask 1046534
    %v1664 = vsel %vm1663, %v1651, %v1662
    %vm1665 = vcmask 1047559
    %v1666 = vsel %vm1665, %v1652, %v1664
    %1667 = vrot.lane.b32.xlu0 %v1666, 96
    %v1668 = vpop.permute.xlu0 %1667
    %v1669 = vsel %vm378, %v1666, 0
    %v1671 = vsel %vm378, %v1668, 0
    %1673 = vmatpush.xpose.msra.mxu0 0.0
    %1674 = vmatpush.xpose.msra.mxu0 0.0
    %1675 = vmatpush.xpose.msra.mxu0 0.0
    %1676 = vmatpush.xpose.msra.mxu0 0.0
    %1677 = vmatpush.xpose.msra.mxu0 0.0
    %1678 = vmatpush.xpose.msra.mxu0 0.0
    %1679 = vmatpush.xpose.msra.mxu0 0.0
    %1680 = vmatpush.xpose.msra.mxu0 0.0
    %1681 = vmatpush.xpose.msra.mxu0 0.0
    %1682 = vmatpush.xpose.msra.mxu0 0.0
    %1683 = vmatpush.xpose.msra.mxu0 0.0
    %1684 = vmatpush.xpose.msra.mxu0 0.0
    %1685 = vmatpush.xpose.msra.mxu0 0.0
    %1686 = vmatpush.xpose.msra.mxu0 0.0
    %1687 = vmatpush.xpose.msra.mxu0 0.0
    %1688 = vmatpush.xpose.msra.mxu0 %v1671
    %1689 = vmatmul.f32.gmra.mxu0 %v1669
    %v1690 = vpop.f32.mrf.mxu0
    %v1691 = vadd.f32 0.0, %v1690
    %1692 = vdwg.mxu0
    %v1693 = vmul.f32 %v1691, 0.17677669
    %vm1694 = vcmask 64512
    %v1695 = vsel %vm1694, %v1693, -inf
    %1696 = vmax.xlane.f32.xlu0 %v1695
    %v1697 = vpop.xlane.xlu0 %1696
    %v1698 = vsub.f32 %v1693, %v1697
    %v1699 = vmul.f32 %v1698, 1.442695
    %v1700 = vpow.pop %v1699
    %v1701 = vsel %vm1694, %v1700, 0.0
    %1702 = vadd.xlane.f32.xlu0 %v1701
    %v1703 = vpop.xlane.xlu0 %1702
    %v1704 = vrcp.pop %v1703
    %v1705 = vmul.f32 %v1700, %v1704
    %1706 = vrot.lane.b32.xlu0 %v1666, 64
    %v1707 = vpop.permute.xlu0 %1706
    %v1710 = vsel %vm1694, %v1705, 0
    %1712 = vmatpush.msra.mxu0 0.0
    %1713 = vmatpush.msra.mxu0 0.0
    %1714 = vmatpush.msra.mxu0 0.0
    %1715 = vmatpush.msra.mxu0 0.0
    %1716 = vmatpush.msra.mxu0 0.0
    %1717 = vmatpush.msra.mxu0 0.0
    %1718 = vmatpush.msra.mxu0 0.0
    %1719 = vmatpush.msra.mxu0 0.0
    %1720 = vmatpush.msra.mxu0 0.0
    %1721 = vmatpush.msra.mxu0 0.0
    %1722 = vmatpush.msra.mxu0 0.0
    %1723 = vmatpush.msra.mxu0 0.0
    %1724 = vmatpush.msra.mxu0 0.0
    %1725 = vmatpush.msra.mxu0 0.0
    %1726 = vmatpush.msra.mxu0 0.0
    %1727 = vmatpush.msra.mxu0 %v1707
    %1728 = vmatmul.f32.gmra.mxu0 %v1710
    %v1729 = vpop.f32.mrf.mxu0
    %v1730 = vadd.f32 0.0, %v1729
    %1731 = vdwg.mxu0
    %v1733 = vperm.slane %v1644, 0
    %v1736 = vsel %vm378, %v1730, 0
    %1738 = vmatpush.msra.mxu0 0.0
    %1739 = vmatpush.msra.mxu0 0.0
    %1740 = vmatpush.msra.mxu0 0.0
    %1741 = vmatpush.msra.mxu0 0.0
    %1742 = vmatpush.msra.mxu0 0.0
    %1743 = vmatpush.msra.mxu0 0.0
    %1744 = vmatpush.msra.mxu0 0.0
    %1745 = vmatpush.msra.mxu0 0.0
    %1746 = vmatpush.msra.mxu0 0.0
    %1747 = vmatpush.msra.mxu0 0.0
    %1748 = vmatpush.msra.mxu0 0.0
    %1749 = vmatpush.msra.mxu0 0.0
    %1750 = vmatpush.msra.mxu0 %v1643
    %1751 = vmatpush.msra.mxu0 %v1642
    %1752 = vmatpush.msra.mxu0 %v1641
    %1753 = vmatpush.msra.mxu0 %v1640
    %1754 = vmatmul.f32.gmra.mxu0 %v1736
    %v1755 = vpop.f32.mrf.mxu0
    %v1756 = vadd.f32 %v1733, %v1755
    %1757 = vdwg.mxu0
    %v1759 = vrot.slane %v1756, 1
    %v1760 = vrot.slane %v1756, 2
    %v1761 = vrot.slane %v1756, 3
    %v1762 = vrot.slane %v1756, 4
    %v1763 = vrot.slane %v1756, 5
    %v1764 = vrot.slane %v1756, 6
    %v1765 = vrot.slane %v1756, 7
    %vm1773 = vcmask 253952
    %1774 = vst.msk [vmem:[#allocation2] sm:$0x1] %vm1773, %v1756
    %1775 = vst.msk [vmem:[#allocation2 + $0x2] sm:$0x1] %vm1773, %v1759
    %1776 = vst.msk [vmem:[#allocation2 + $0x4] sm:$0x1] %vm1773, %v1760
    %1777 = vst.msk [vmem:[#allocation2 + $0x6] sm:$0x1] %vm1773, %v1761
    %1778 = vst.msk [vmem:[#allocation2 + $0x8] sm:$0x1] %vm1773, %v1762
    %1779 = vst.msk [vmem:[#allocation2 + $0xa] sm:$0x1] %vm1773, %v1763
    %1780 = vst.msk [vmem:[#allocation2 + $0xc] sm:$0x1] %vm1773, %v1764
    %1781 = vst.msk [vmem:[#allocation2 + $0xe] sm:$0x1] %vm1773, %v1765
    %v1782 = vperm.slane %v1627, 1
    %v1783 = vperm.slane %v1634, 1
    %v1784 = vperm.slane %v1635, 1
    %v1785 = vperm.slane %v1636, 1
    %v1786 = vperm.slane %v1630, 1
    %v1787 = vperm.slane %v1637, 1
    %v1788 = vperm.slane %v1638, 1
    %v1789 = vperm.slane %v1639, 1
    %v1790 = vsel %vm1653, %v1783, %v1782
    %v1791 = vsel %vm1655, %v1784, %v1790
    %v1792 = vsel %vm1657, %v1785, %v1791
    %v1793 = vsel %vm1659, %v1786, %v1792
    %v1794 = vsel %vm1661, %v1787, %v1793
    %v1795 = vsel %vm1663, %v1788, %v1794
    %v1796 = vsel %vm1665, %v1789, %v1795
    %1797 = vrot.lane.b32.xlu0 %v1796, 96
    %v1798 = vpop.permute.xlu0 %1797
    %v1799 = vsel %vm378, %v1796, 0
    %v1801 = vsel %vm378, %v1798, 0
    %1803 = vmatpush.xpose.msra.mxu0 0.0
    %1804 = vmatpush.xpose.msra.mxu0 0.0
    %1805 = vmatpush.xpose.msra.mxu0 0.0
    %1806 = vmatpush.xpose.msra.mxu0 0.0
    %1807 = vmatpush.xpose.msra.mxu0 0.0
    %1808 = vmatpush.xpose.msra.mxu0 0.0
    %1809 = vmatpush.xpose.msra.mxu0 0.0
    %1810 = vmatpush.xpose.msra.mxu0 0.0
    %1811 = vmatpush.xpose.msra.mxu0 0.0
    %1812 = vmatpush.xpose.msra.mxu0 0.0
    %1813 = vmatpush.xpose.msra.mxu0 0.0
    %1814 = vmatpush.xpose.msra.mxu0 0.0
    %1815 = vmatpush.xpose.msra.mxu0 0.0
    %1816 = vmatpush.xpose.msra.mxu0 0.0
    %1817 = vmatpush.xpose.msra.mxu0 0.0
    %1818 = vmatpush.xpose.msra.mxu0 %v1801
    %1819 = vmatmul.f32.gmra.mxu0 %v1799
    %v1820 = vpop.f32.mrf.mxu0
    %v1821 = vadd.f32 0.0, %v1820
    %1822 = vdwg.mxu0
    %v1823 = vmul.f32 %v1821, 0.17677669
    %v1824 = vsel %vm1694, %v1823, -inf
    %1825 = vmax.xlane.f32.xlu0 %v1824
    %v1826 = vpop.xlane.xlu0 %1825
    %v1827 = vsub.f32 %v1823, %v1826
    %v1828 = vmul.f32 %v1827, 1.442695
    %v1829 = vpow.pop %v1828
    %v1830 = vsel %vm1694, %v1829, 0.0
    %1831 = vadd.xlane.f32.xlu0 %v1830
    %v1832 = vpop.xlane.xlu0 %1831
    %v1833 = vrcp.pop %v1832
    %v1834 = vmul.f32 %v1829, %v1833
    %1835 = vrot.lane.b32.xlu0 %v1796, 64
    %v1836 = vpop.permute.xlu0 %1835
    %v1839 = vsel %vm1694, %v1834, 0
    %1841 = vmatpush.msra.mxu0 0.0
    %1842 = vmatpush.msra.mxu0 0.0
    %1843 = vmatpush.msra.mxu0 0.0
    %1844 = vmatpush.msra.mxu0 0.0
    %1845 = vmatpush.msra.mxu0 0.0
    %1846 = vmatpush.msra.mxu0 0.0
    %1847 = vmatpush.msra.mxu0 0.0
    %1848 = vmatpush.msra.mxu0 0.0
    %1849 = vmatpush.msra.mxu0 0.0
    %1850 = vmatpush.msra.mxu0 0.0
    %1851 = vmatpush.msra.mxu0 0.0
    %1852 = vmatpush.msra.mxu0 0.0
    %1853 = vmatpush.msra.mxu0 0.0
    %1854 = vmatpush.msra.mxu0 0.0
    %1855 = vmatpush.msra.mxu0 0.0
    %1856 = vmatpush.msra.mxu0 %v1836
    %1857 = vmatmul.f32.gmra.mxu0 %v1839
    %v1858 = vpop.f32.mrf.mxu0
    %v1859 = vadd.f32 0.0, %v1858
    %1860 = vdwg.mxu0
    %v1862 = vsel %vm378, %v1859, 0
    %1864 = vmatpush.msra.mxu0 0.0
    %1865 = vmatpush.msra.mxu0 0.0
    %1866 = vmatpush.msra.mxu0 0.0
    %1867 = vmatpush.msra.mxu0 0.0
    %1868 = vmatpush.msra.mxu0 0.0
    %1869 = vmatpush.msra.mxu0 0.0
    %1870 = vmatpush.msra.mxu0 0.0
    %1871 = vmatpush.msra.mxu0 0.0
    %1872 = vmatpush.msra.mxu0 0.0
    %1873 = vmatpush.msra.mxu0 0.0
    %1874 = vmatpush.msra.mxu0 0.0
    %1875 = vmatpush.msra.mxu0 0.0
    %1876 = vmatpush.msra.mxu0 %v1643
    %1877 = vmatpush.msra.mxu0 %v1642
    %1878 = vmatpush.msra.mxu0 %v1641
    %1879 = vmatpush.msra.mxu0 %v1640
    %1880 = vmatmul.f32.gmra.mxu0 %v1862
    %v1881 = vpop.f32.mrf.mxu0
    %v1882 = vadd.f32 %v1733, %v1881
    %1883 = vdwg.mxu0
    %v1885 = vrot.slane %v1882, 1
    %v1886 = vrot.slane %v1882, 2
    %v1887 = vrot.slane %v1882, 3
    %v1888 = vrot.slane %v1882, 4
    %v1889 = vrot.slane %v1882, 5
    %v1890 = vrot.slane %v1882, 6
    %v1891 = vrot.slane %v1882, 7
    %1899 = vst.msk [vmem:[#allocation2 + $0x1] sm:$0x1] %vm1773, %v1882
    %1900 = vst.msk [vmem:[#allocation2 + $0x3] sm:$0x1] %vm1773, %v1885
    %1901 = vst.msk [vmem:[#allocation2 + $0x5] sm:$0x1] %vm1773, %v1886
    %1902 = vst.msk [vmem:[#allocation2 + $0x7] sm:$0x1] %vm1773, %v1887
    %1903 = vst.msk [vmem:[#allocation2 + $0x9] sm:$0x1] %vm1773, %v1888
    %1904 = vst.msk [vmem:[#allocation2 + $0xb] sm:$0x1] %vm1773, %v1889
    %1905 = vst.msk [vmem:[#allocation2 + $0xd] sm:$0x1] %vm1773, %v1890
    %1906 = vst.msk [vmem:[#allocation2 + $0xf] sm:$0x1] %vm1773, %v1891
    %v1907 = vld [vmem:[#allocation2] sm:$0x3]
    %v1908 = vld [vmem:[#allocation2 + $0x2] sm:$0x3]
    %v1909 = vld [vmem:[#allocation2 + $0x4] sm:$0x3]
    %v1910 = vld [vmem:[#allocation2 + $0x6] sm:$0x3]
    %v1911 = vld [vmem:[#allocation2 + $0x8] sm:$0x3]
    %v1912 = vld [vmem:[#allocation2 + $0xa] sm:$0x3]
    %v1913 = vld [vmem:[#allocation2 + $0xc] sm:$0x3]
    %v1914 = vld [vmem:[#allocation2 + $0xe] sm:$0x3]
    %v1915 = vld [vmem:[#allocation8] sm:$0xff]
    %v1916 = vld [vmem:[#allocation8 + $0x8] sm:$0xff]
    %v1917 = vld [vmem:[#allocation8 + $0x10] sm:$0xff]
    %v1918 = vld [vmem:[#allocation8 + $0x18] sm:$0xff]
    %v1919 = vld [vmem:[%s9] sm:$0x1]
    %v1921 = vperm.slane %v1919, 0
    %1930 = vst [vmem:[#allocation1] ss:$4 sm:$0xff] %v1907
    %s1931 = scalar_lea.vmem [#allocation1], 1
    %1932 = vst [vmem:[%s1931] ss:$4 sm:$0xff] %v1908
    %s1933 = scalar_lea.vmem [#allocation1], 2
    %1934 = vst [vmem:[%s1933] ss:$4 sm:$0xff] %v1909
    %s1935 = scalar_lea.vmem [#allocation1], 3
    %1936 = vst [vmem:[%s1935] ss:$4 sm:$0xff] %v1910
    %s1937 = scalar_lea.vmem [#allocation1], 32
    %1938 = vst [vmem:[%s1937] ss:$4 sm:$0xff] %v1911
    %s1939 = scalar_lea.vmem [#allocation1], 33
    %1940 = vst [vmem:[%s1939] ss:$4 sm:$0xff] %v1912
    %s1941 = scalar_lea.vmem [#allocation1], 34
    %1942 = vst [vmem:[%s1941] ss:$4 sm:$0xff] %v1913
    %s1943 = scalar_lea.vmem [#allocation1], 35
    %1944 = vst [vmem:[%s1943] ss:$4 sm:$0xff] %v1914
    %v1945 = vld.sshfl [vmem:[#allocation1] sm:$0xff pattern:$0x73625140]
    %v1946 = vld.sshfl [vmem:[#allocation1 + $0x20] sm:$0xff pattern:$0x73625140]
    %1947 = vst [vmem:[#allocation1] ss:$4 sm:$0xff] %v1921
    %s1948 = scalar_lea.vmem [#allocation1], 1
    %1949 = vst [vmem:[%s1948] ss:$4 sm:$0xff] %v1921
    %s1950 = scalar_lea.vmem [#allocation1], 2
    %1951 = vst [vmem:[%s1950] ss:$4 sm:$0xff] %v1921
    %s1952 = scalar_lea.vmem [#allocation1], 3
    %1953 = vst [vmem:[%s1952] ss:$4 sm:$0xff] %v1921
    %s1954 = scalar_lea.vmem [#allocation1], 32
    %1955 = vst [vmem:[%s1954] ss:$4 sm:$0xff] %v1921
    %s1956 = scalar_lea.vmem [#allocation1], 33
    %1957 = vst [vmem:[%s1956] ss:$4 sm:$0xff] %v1921
    %s1958 = scalar_lea.vmem [#allocation1], 34
    %1959 = vst [vmem:[%s1958] ss:$4 sm:$0xff] %v1921
    %s1960 = scalar_lea.vmem [#allocation1], 35
    %1961 = vst [vmem:[%s1960] ss:$4 sm:$0xff] %v1921
    %v1962 = vld.sshfl [vmem:[#allocation1] sm:$0xff pattern:$0x73625140]
    %v1963 = vld.sshfl [vmem:[#allocation1 + $0x20] sm:$0xff pattern:$0x73625140]
    %v1966 = vsel %vm378, %v1945, 0
    %v1968 = vsel %vm378, %v1946, 0
    %1970 = vmatpush.msra.mxu0 0.0
    %1971 = vmatpush.msra.mxu0 0.0
    %1972 = vmatpush.msra.mxu0 0.0
    %1973 = vmatpush.msra.mxu0 0.0
    %1974 = vmatpush.msra.mxu0 0.0
    %1975 = vmatpush.msra.mxu0 0.0
    %1976 = vmatpush.msra.mxu0 0.0
    %1977 = vmatpush.msra.mxu0 0.0
    %1978 = vmatpush.msra.mxu0 0.0
    %1979 = vmatpush.msra.mxu0 0.0
    %1980 = vmatpush.msra.mxu0 0.0
    %1981 = vmatpush.msra.mxu0 0.0
    %1982 = vmatpush.msra.mxu0 %v1918
    %1983 = vmatpush.msra.mxu0 %v1917
    %1984 = vmatpush.msra.mxu0 %v1916
    %1985 = vmatpush.msra.mxu0 %v1915
    %1986 = vmatmul.f32.gmra.mxu0 %v1966
    %v1987 = vpop.f32.mrf.mxu0
    %v1988 = vadd.f32 %v1962, %v1987
    %1989 = vmatmul.f32.gmra.mxu0 %v1968
    %v1990 = vpop.f32.mrf.mxu0
    %v1991 = vadd.f32 %v1963, %v1990
    %1992 = vdwg.mxu0
    %v1995 = vrot.slane %v1988, 2
    %v1996 = vrot.slane %v1988, 4
    %v1997 = vrot.slane %v1988, 6
    %v1998 = vrot.slane %v1991, 2
    %v1999 = vrot.slane %v1991, 4
    %v2000 = vrot.slane %v1991, 6
    %v2007 = vld [vmem:[#allocation9] sm:$0xff]
    %v2008 = vld [vmem:[#allocation9 + $0x8] sm:$0xff]
    %v2009 = vld [vmem:[#allocation9 + $0x10] sm:$0xff]
    %v2010 = vld [vmem:[#allocation9 + $0x18] sm:$0xff]
    %v2011 = vsel %vm378, %v912, 0
    %2013 = vmatpush.msra.mxu0 0.0
    %2014 = vmatpush.msra.mxu0 0.0
    %2015 = vmatpush.msra.mxu0 0.0
    %2016 = vmatpush.msra.mxu0 0.0
    %2017 = vmatpush.msra.mxu0 0.0
    %2018 = vmatpush.msra.mxu0 0.0
    %2019 = vmatpush.msra.mxu0 0.0
    %2020 = vmatpush.msra.mxu0 0.0
    %2021 = vmatpush.msra.mxu0 0.0
    %2022 = vmatpush.msra.mxu0 0.0
    %2023 = vmatpush.msra.mxu0 0.0
    %2024 = vmatpush.msra.mxu0 0.0
    %2025 = vmatpush.msra.mxu0 %v2010
    %2026 = vmatpush.msra.mxu0 %v2009
    %2027 = vmatpush.msra.mxu0 %v2008
    %2028 = vmatpush.msra.mxu0 %v2007
    %2029 = vmatmul.f32.gmra.mxu0 %v2011
    %v2030 = vpop.f32.mrf.mxu0
    %v2031 = vadd.f32 0.0, %v2030
    %2032 = vdwg.mxu0
    %v2033 = vadd.f32 %v1988, %v2031
    %v2034 = vtanh.pop %v2033
    %v2035 = vxor.u32 %v2033, 2147483648
    %v2036 = vmul.f32 %v2035, 1.442695
    %v2037 = vpow.pop %v2036
    %v2038 = vadd.f32 %v2037, 1.0
    %v2039 = vrcp.pop %v2038
    %v2040 = vmul.f32 %v2038, %v2039
    %v2041 = vsub.f32 1.0, %v2040
    %v2042 = vmul.f32 %v2039, %v2041
    %v2043 = vadd.f32 %v2039, %v2042
    %vm2044 = vweird.f32 %v2038
    %vm2045 = vweird.f32 %v2039
    %vm2046 = vmor %vm2044, %vm2045
    %v2047 = vsel %vm2046, %v2039, %v2043
    %v2048 = vand.u32 2147483647, %v2038
    %vm2049 = vcmp.eq.f32.partialorder %v2048, 8.507059e+37
    %v2050 = vand.u32 %v2038, 2147483648
    %v2051 = vor.u32 1.1754944e-38, %v2050
    %v2052 = vsel %vm2049, %v2051, %v2047
    %v2053 = vmul.f32 1.0, %v2052
    %v2054 = vsel %vm274, %v2034, %v2053
    %v2055 = vmul.f32 %v2054, %v903
    %2057 = vrot.lane.b32.xlu0 %v2054, 64
    %v2058 = vpop.permute.xlu0 %2057
    %v2060 = vmul.f32 %v2054, %v2058
    %2062 = vrot.lane.b32.xlu0 %v2060, 32
    %v2063 = vpop.permute.xlu0 %2062
    %v2065 = vadd.f32 %v2055, %v2063
    %v2066 = vtanh.pop %v2065
    %2068 = vrot.lane.b32.xlu0 %v2066, 64
    %v2069 = vpop.permute.xlu0 %2068
    %v2071 = vmul.f32 %v2054, %v2069
    %2073 = vrot.lane.b32.xlu0 %v2071, 32
    %v2074 = vpop.permute.xlu0 %2073
    %2076 = vst.msk [vmem:[#allocation2] sm:$0x3] %vm445, %v2074
    %v2077 = vsel %vm378, %v2074, 0
    %2079 = vmatpush.msra.mxu0 0.0
    %2080 = vmatpush.msra.mxu0 0.0
    %2081 = vmatpush.msra.mxu0 0.0
    %2082 = vmatpush.msra.mxu0 0.0
    %2083 = vmatpush.msra.mxu0 0.0
    %2084 = vmatpush.msra.mxu0 0.0
    %2085 = vmatpush.msra.mxu0 0.0
    %2086 = vmatpush.msra.mxu0 0.0
    %2087 = vmatpush.msra.mxu0 0.0
    %2088 = vmatpush.msra.mxu0 0.0
    %2089 = vmatpush.msra.mxu0 0.0
    %2090 = vmatpush.msra.mxu0 0.0
    %2091 = vmatpush.msra.mxu0 %v2010
    %2092 = vmatpush.msra.mxu0 %v2009
    %2093 = vmatpush.msra.mxu0 %v2008
    %2094 = vmatpush.msra.mxu0 %v2007
    %2095 = vmatmul.f32.gmra.mxu0 %v2077
    %v2096 = vpop.f32.mrf.mxu0
    %v2097 = vadd.f32 0.0, %v2096
    %2098 = vdwg.mxu0
    %v2099 = vadd.f32 %v1995, %v2097
    %v2100 = vtanh.pop %v2099
    %v2101 = vxor.u32 %v2099, 2147483648
    %v2102 = vmul.f32 %v2101, 1.442695
    %v2103 = vpow.pop %v2102
    %v2104 = vadd.f32 %v2103, 1.0
    %v2105 = vrcp.pop %v2104
    %v2106 = vmul.f32 %v2104, %v2105
    %v2107 = vsub.f32 1.0, %v2106
    %v2108 = vmul.f32 %v2105, %v2107
    %v2109 = vadd.f32 %v2105, %v2108
    %vm2110 = vweird.f32 %v2104
    %vm2111 = vweird.f32 %v2105
    %vm2112 = vmor %vm2110, %vm2111
    %v2113 = vsel %vm2112, %v2105, %v2109
    %v2114 = vand.u32 2147483647, %v2104
    %vm2115 = vcmp.eq.f32.partialorder %v2114, 8.507059e+37
    %v2116 = vand.u32 %v2104, 2147483648
    %v2117 = vor.u32 1.1754944e-38, %v2116
    %v2118 = vsel %vm2115, %v2117, %v2113
    %v2119 = vmul.f32 1.0, %v2118
    %v2120 = vsel %vm274, %v2100, %v2119
    %v2121 = vmul.f32 %v2120, %v2065
    %2123 = vrot.lane.b32.xlu0 %v2120, 64
    %v2124 = vpop.permute.xlu0 %2123
    %v2126 = vmul.f32 %v2120, %v2124
    %2128 = vrot.lane.b32.xlu0 %v2126, 32
    %v2129 = vpop.permute.xlu0 %2128
    %v2131 = vadd.f32 %v2121, %v2129
    %v2132 = vtanh.pop %v2131
    %2134 = vrot.lane.b32.xlu0 %v2132, 64
    %v2135 = vpop.permute.xlu0 %2134
    %v2137 = vmul.f32 %v2120, %v2135
    %2139 = vrot.lane.b32.xlu0 %v2137, 32
    %v2140 = vpop.permute.xlu0 %2139
    %2142 = vst.msk [vmem:[%s512] sm:$0x3] %vm445, %v2140
    %v2143 = vsel %vm378, %v2140, 0
    %2145 = vmatpush.msra.mxu0 0.0
    %2146 = vmatpush.msra.mxu0 0.0
    %2147 = vmatpush.msra.mxu0 0.0
    %2148 = vmatpush.msra.mxu0 0.0
    %2149 = vmatpush.msra.mxu0 0.0
    %2150 = vmatpush.msra.mxu0 0.0
    %2151 = vmatpush.msra.mxu0 0.0
    %2152 = vmatpush.msra.mxu0 0.0
    %2153 = vmatpush.msra.mxu0 0.0
    %2154 = vmatpush.msra.mxu0 0.0
    %2155 = vmatpush.msra.mxu0 0.0
    %2156 = vmatpush.msra.mxu0 0.0
    %2157 = vmatpush.msra.mxu0 %v2010
    %2158 = vmatpush.msra.mxu0 %v2009
    %2159 = vmatpush.msra.mxu0 %v2008
    %2160 = vmatpush.msra.mxu0 %v2007
    %2161 = vmatmul.f32.gmra.mxu0 %v2143
    %v2162 = vpop.f32.mrf.mxu0
    %v2163 = vadd.f32 0.0, %v2162
    %2164 = vdwg.mxu0
    %v2165 = vadd.f32 %v1996, %v2163
    %v2166 = vtanh.pop %v2165
    %v2167 = vxor.u32 %v2165, 2147483648
    %v2168 = vmul.f32 %v2167, 1.442695
    %v2169 = vpow.pop %v2168
    %v2170 = vadd.f32 %v2169, 1.0
    %v2171 = vrcp.pop %v2170
    %v2172 = vmul.f32 %v2170, %v2171
    %v2173 = vsub.f32 1.0, %v2172
    %v2174 = vmul.f32 %v2171, %v2173
    %v2175 = vadd.f32 %v2171, %v2174
    %vm2176 = vweird.f32 %v2170
    %vm2177 = vweird.f32 %v2171
    %vm2178 = vmor %vm2176, %vm2177
    %v2179 = vsel %vm2178, %v2171, %v2175
    %v2180 = vand.u32 2147483647, %v2170
    %vm2181 = vcmp.eq.f32.partialorder %v2180, 8.507059e+37
    %v2182 = vand.u32 %v2170, 2147483648
    %v2183 = vor.u32 1.1754944e-38, %v2182
    %v2184 = vsel %vm2181, %v2183, %v2179
    %v2185 = vmul.f32 1.0, %v2184
    %v2186 = vsel %vm274, %v2166, %v2185
    %v2187 = vmul.f32 %v2186, %v2131
    %2189 = vrot.lane.b32.xlu0 %v2186, 64
    %v2190 = vpop.permute.xlu0 %2189
    %v2192 = vmul.f32 %v2186, %v2190
    %2194 = vrot.lane.b32.xlu0 %v2192, 32
    %v2195 = vpop.permute.xlu0 %2194
    %v2197 = vadd.f32 %v2187, %v2195
    %v2198 = vtanh.pop %v2197
    %2200 = vrot.lane.b32.xlu0 %v2198, 64
    %v2201 = vpop.permute.xlu0 %2200
    %v2203 = vmul.f32 %v2186, %v2201
    %2205 = vrot.lane.b32.xlu0 %v2203, 32
    %v2206 = vpop.permute.xlu0 %2205
    %2208 = vst.msk [vmem:[%s579] sm:$0x3] %vm445, %v2206
    %v2209 = vsel %vm378, %v2206, 0
    %2211 = vmatpush.msra.mxu0 0.0
    %2212 = vmatpush.msra.mxu0 0.0
    %2213 = vmatpush.msra.mxu0 0.0
    %2214 = vmatpush.msra.mxu0 0.0
    %2215 = vmatpush.msra.mxu0 0.0
    %2216 = vmatpush.msra.mxu0 0.0
    %2217 = vmatpush.msra.mxu0 0.0
    %2218 = vmatpush.msra.mxu0 0.0
    %2219 = vmatpush.msra.mxu0 0.0
    %2220 = vmatpush.msra.mxu0 0.0
    %2221 = vmatpush.msra.mxu0 0.0
    %2222 = vmatpush.msra.mxu0 0.0
    %2223 = vmatpush.msra.mxu0 %v2010
    %2224 = vmatpush.msra.mxu0 %v2009
    %2225 = vmatpush.msra.mxu0 %v2008
    %2226 = vmatpush.msra.mxu0 %v2007
    %2227 = vmatmul.f32.gmra.mxu0 %v2209
    %v2228 = vpop.f32.mrf.mxu0
    %v2229 = vadd.f32 0.0, %v2228
    %2230 = vdwg.mxu0
    %v2231 = vadd.f32 %v1997, %v2229
    %v2232 = vtanh.pop %v2231
    %v2233 = vxor.u32 %v2231, 2147483648
    %v2234 = vmul.f32 %v2233, 1.442695
    %v2235 = vpow.pop %v2234
    %v2236 = vadd.f32 %v2235, 1.0
    %v2237 = vrcp.pop %v2236
    %v2238 = vmul.f32 %v2236, %v2237
    %v2239 = vsub.f32 1.0, %v2238
    %v2240 = vmul.f32 %v2237, %v2239
    %v2241 = vadd.f32 %v2237, %v2240
    %vm2242 = vweird.f32 %v2236
    %vm2243 = vweird.f32 %v2237
    %vm2244 = vmor %vm2242, %vm2243
    %v2245 = vsel %vm2244, %v2237, %v2241
    %v2246 = vand.u32 2147483647, %v2236
    %vm2247 = vcmp.eq.f32.partialorder %v2246, 8.507059e+37
    %v2248 = vand.u32 %v2236, 2147483648
    %v2249 = vor.u32 1.1754944e-38, %v2248
    %v2250 = vsel %vm2247, %v2249, %v2245
    %v2251 = vmul.f32 1.0, %v2250
    %v2252 = vsel %vm274, %v2232, %v2251
    %v2253 = vmul.f32 %v2252, %v2197
    %2255 = vrot.lane.b32.xlu0 %v2252, 64
    %v2256 = vpop.permute.xlu0 %2255
    %v2258 = vmul.f32 %v2252, %v2256
    %2260 = vrot.lane.b32.xlu0 %v2258, 32
    %v2261 = vpop.permute.xlu0 %2260
    %v2263 = vadd.f32 %v2253, %v2261
    %v2264 = vtanh.pop %v2263
    %2266 = vrot.lane.b32.xlu0 %v2264, 64
    %v2267 = vpop.permute.xlu0 %2266
    %v2269 = vmul.f32 %v2252, %v2267
    %2271 = vrot.lane.b32.xlu0 %v2269, 32
    %v2272 = vpop.permute.xlu0 %2271
    %2274 = vst.msk [vmem:[%s646] sm:$0x3] %vm445, %v2272
    %v2275 = vsel %vm378, %v2272, 0
    %2277 = vmatpush.msra.mxu0 0.0
    %2278 = vmatpush.msra.mxu0 0.0
    %2279 = vmatpush.msra.mxu0 0.0
    %2280 = vmatpush.msra.mxu0 0.0
    %2281 = vmatpush.msra.mxu0 0.0
    %2282 = vmatpush.msra.mxu0 0.0
    %2283 = vmatpush.msra.mxu0 0.0
    %2284 = vmatpush.msra.mxu0 0.0
    %2285 = vmatpush.msra.mxu0 0.0
    %2286 = vmatpush.msra.mxu0 0.0
    %2287 = vmatpush.msra.mxu0 0.0
    %2288 = vmatpush.msra.mxu0 0.0
    %2289 = vmatpush.msra.mxu0 %v2010
    %2290 = vmatpush.msra.mxu0 %v2009
    %2291 = vmatpush.msra.mxu0 %v2008
    %2292 = vmatpush.msra.mxu0 %v2007
    %2293 = vmatmul.f32.gmra.mxu0 %v2275
    %v2294 = vpop.f32.mrf.mxu0
    %v2295 = vadd.f32 0.0, %v2294
    %2296 = vdwg.mxu0
    %v2297 = vadd.f32 %v1991, %v2295
    %v2298 = vtanh.pop %v2297
    %v2299 = vxor.u32 %v2297, 2147483648
    %v2300 = vmul.f32 %v2299, 1.442695
    %v2301 = vpow.pop %v2300
    %v2302 = vadd.f32 %v2301, 1.0
    %v2303 = vrcp.pop %v2302
    %v2304 = vmul.f32 %v2302, %v2303
    %v2305 = vsub.f32 1.0, %v2304
    %v2306 = vmul.f32 %v2303, %v2305
    %v2307 = vadd.f32 %v2303, %v2306
    %vm2308 = vweird.f32 %v2302
    %vm2309 = vweird.f32 %v2303
    %vm2310 = vmor %vm2308, %vm2309
    %v2311 = vsel %vm2310, %v2303, %v2307
    %v2312 = vand.u32 2147483647, %v2302
    %vm2313 = vcmp.eq.f32.partialorder %v2312, 8.507059e+37
    %v2314 = vand.u32 %v2302, 2147483648
    %v2315 = vor.u32 1.1754944e-38, %v2314
    %v2316 = vsel %vm2313, %v2315, %v2311
    %v2317 = vmul.f32 1.0, %v2316
    %v2318 = vsel %vm274, %v2298, %v2317
    %v2319 = vmul.f32 %v2318, %v2263
    %2321 = vrot.lane.b32.xlu0 %v2318, 64
    %v2322 = vpop.permute.xlu0 %2321
    %v2324 = vmul.f32 %v2318, %v2322
    %2326 = vrot.lane.b32.xlu0 %v2324, 32
    %v2327 = vpop.permute.xlu0 %2326
    %v2329 = vadd.f32 %v2319, %v2327
    %v2330 = vtanh.pop %v2329
    %2332 = vrot.lane.b32.xlu0 %v2330, 64
    %v2333 = vpop.permute.xlu0 %2332
    %v2335 = vmul.f32 %v2318, %v2333
    %2337 = vrot.lane.b32.xlu0 %v2335, 32
    %v2338 = vpop.permute.xlu0 %2337
    %2340 = vst.msk [vmem:[%s713] sm:$0x3] %vm445, %v2338
    %v2341 = vsel %vm378, %v2338, 0
    %2343 = vmatpush.msra.mxu0 0.0
    %2344 = vmatpush.msra.mxu0 0.0
    %2345 = vmatpush.msra.mxu0 0.0
    %2346 = vmatpush.msra.mxu0 0.0
    %2347 = vmatpush.msra.mxu0 0.0
    %2348 = vmatpush.msra.mxu0 0.0
    %2349 = vmatpush.msra.mxu0 0.0
    %2350 = vmatpush.msra.mxu0 0.0
    %2351 = vmatpush.msra.mxu0 0.0
    %2352 = vmatpush.msra.mxu0 0.0
    %2353 = vmatpush.msra.mxu0 0.0
    %2354 = vmatpush.msra.mxu0 0.0
    %2355 = vmatpush.msra.mxu0 %v2010
    %2356 = vmatpush.msra.mxu0 %v2009
    %2357 = vmatpush.msra.mxu0 %v2008
    %2358 = vmatpush.msra.mxu0 %v2007
    %2359 = vmatmul.f32.gmra.mxu0 %v2341
    %v2360 = vpop.f32.mrf.mxu0
    %v2361 = vadd.f32 0.0, %v2360
    %2362 = vdwg.mxu0
    %v2363 = vadd.f32 %v1998, %v2361
    %v2364 = vtanh.pop %v2363
    %v2365 = vxor.u32 %v2363, 2147483648
    %v2366 = vmul.f32 %v2365, 1.442695
    %v2367 = vpow.pop %v2366
    %v2368 = vadd.f32 %v2367, 1.0
    %v2369 = vrcp.pop %v2368
    %v2370 = vmul.f32 %v2368, %v2369
    %v2371 = vsub.f32 1.0, %v2370
    %v2372 = vmul.f32 %v2369, %v2371
    %v2373 = vadd.f32 %v2369, %v2372
    %vm2374 = vweird.f32 %v2368
    %vm2375 = vweird.f32 %v2369
    %vm2376 = vmor %vm2374, %vm2375
    %v2377 = vsel %vm2376, %v2369, %v2373
    %v2378 = vand.u32 2147483647, %v2368
    %vm2379 = vcmp.eq.f32.partialorder %v2378, 8.507059e+37
    %v2380 = vand.u32 %v2368, 2147483648
    %v2381 = vor.u32 1.1754944e-38, %v2380
    %v2382 = vsel %vm2379, %v2381, %v2377
    %v2383 = vmul.f32 1.0, %v2382
    %v2384 = vsel %vm274, %v2364, %v2383
    %v2385 = vmul.f32 %v2384, %v2329
    %2387 = vrot.lane.b32.xlu0 %v2384, 64
    %v2388 = vpop.permute.xlu0 %2387
    %v2390 = vmul.f32 %v2384, %v2388
    %2392 = vrot.lane.b32.xlu0 %v2390, 32
    %v2393 = vpop.permute.xlu0 %2392
    %v2395 = vadd.f32 %v2385, %v2393
    %v2396 = vtanh.pop %v2395
    %2398 = vrot.lane.b32.xlu0 %v2396, 64
    %v2399 = vpop.permute.xlu0 %2398
    %v2401 = vmul.f32 %v2384, %v2399
    %2403 = vrot.lane.b32.xlu0 %v2401, 32
    %v2404 = vpop.permute.xlu0 %2403
    %2406 = vst.msk [vmem:[%s780] sm:$0x3] %vm445, %v2404
    %v2407 = vsel %vm378, %v2404, 0
    %2409 = vmatpush.msra.mxu0 0.0
    %2410 = vmatpush.msra.mxu0 0.0
    %2411 = vmatpush.msra.mxu0 0.0
    %2412 = vmatpush.msra.mxu0 0.0
    %2413 = vmatpush.msra.mxu0 0.0
    %2414 = vmatpush.msra.mxu0 0.0
    %2415 = vmatpush.msra.mxu0 0.0
    %2416 = vmatpush.msra.mxu0 0.0
    %2417 = vmatpush.msra.mxu0 0.0
    %2418 = vmatpush.msra.mxu0 0.0
    %2419 = vmatpush.msra.mxu0 0.0
    %2420 = vmatpush.msra.mxu0 0.0
    %2421 = vmatpush.msra.mxu0 %v2010
    %2422 = vmatpush.msra.mxu0 %v2009
    %2423 = vmatpush.msra.mxu0 %v2008
    %2424 = vmatpush.msra.mxu0 %v2007
    %2425 = vmatmul.f32.gmra.mxu0 %v2407
    %v2426 = vpop.f32.mrf.mxu0
    %v2427 = vadd.f32 0.0, %v2426
    %2428 = vdwg.mxu0
    %v2429 = vadd.f32 %v1999, %v2427
    %v2430 = vtanh.pop %v2429
    %v2431 = vxor.u32 %v2429, 2147483648
    %v2432 = vmul.f32 %v2431, 1.442695
    %v2433 = vpow.pop %v2432
    %v2434 = vadd.f32 %v2433, 1.0
    %v2435 = vrcp.pop %v2434
    %v2436 = vmul.f32 %v2434, %v2435
    %v2437 = vsub.f32 1.0, %v2436
    %v2438 = vmul.f32 %v2435, %v2437
    %v2439 = vadd.f32 %v2435, %v2438
    %vm2440 = vweird.f32 %v2434
    %vm2441 = vweird.f32 %v2435
    %vm2442 = vmor %vm2440, %vm2441
    %v2443 = vsel %vm2442, %v2435, %v2439
    %v2444 = vand.u32 2147483647, %v2434
    %vm2445 = vcmp.eq.f32.partialorder %v2444, 8.507059e+37
    %v2446 = vand.u32 %v2434, 2147483648
    %v2447 = vor.u32 1.1754944e-38, %v2446
    %v2448 = vsel %vm2445, %v2447, %v2443
    %v2449 = vmul.f32 1.0, %v2448
    %v2450 = vsel %vm274, %v2430, %v2449
    %v2451 = vmul.f32 %v2450, %v2395
    %2453 = vrot.lane.b32.xlu0 %v2450, 64
    %v2454 = vpop.permute.xlu0 %2453
    %v2456 = vmul.f32 %v2450, %v2454
    %2458 = vrot.lane.b32.xlu0 %v2456, 32
    %v2459 = vpop.permute.xlu0 %2458
    %v2461 = vadd.f32 %v2451, %v2459
    %v2462 = vtanh.pop %v2461
    %2464 = vrot.lane.b32.xlu0 %v2462, 64
    %v2465 = vpop.permute.xlu0 %2464
    %v2467 = vmul.f32 %v2450, %v2465
    %2469 = vrot.lane.b32.xlu0 %v2467, 32
    %v2470 = vpop.permute.xlu0 %2469
    %2472 = vst.msk [vmem:[%s847] sm:$0x3] %vm445, %v2470
    %v2473 = vsel %vm378, %v2470, 0
    %2475 = vmatpush.msra.mxu0 0.0
    %2476 = vmatpush.msra.mxu0 0.0
    %2477 = vmatpush.msra.mxu0 0.0
    %2478 = vmatpush.msra.mxu0 0.0
    %2479 = vmatpush.msra.mxu0 0.0
    %2480 = vmatpush.msra.mxu0 0.0
    %2481 = vmatpush.msra.mxu0 0.0
    %2482 = vmatpush.msra.mxu0 0.0
    %2483 = vmatpush.msra.mxu0 0.0
    %2484 = vmatpush.msra.mxu0 0.0
    %2485 = vmatpush.msra.mxu0 0.0
    %2486 = vmatpush.msra.mxu0 0.0
    %2487 = vmatpush.msra.mxu0 %v2010
    %2488 = vmatpush.msra.mxu0 %v2009
    %2489 = vmatpush.msra.mxu0 %v2008
    %2490 = vmatpush.msra.mxu0 %v2007
    %2491 = vmatmul.f32.gmra.mxu0 %v2473
    %v2492 = vpop.f32.mrf.mxu0
    %v2493 = vadd.f32 0.0, %v2492
    %2494 = vdwg.mxu0
    %v2495 = vadd.f32 %v2000, %v2493
    %v2496 = vtanh.pop %v2495
    %v2497 = vxor.u32 %v2495, 2147483648
    %v2498 = vmul.f32 %v2497, 1.442695
    %v2499 = vpow.pop %v2498
    %v2500 = vadd.f32 %v2499, 1.0
    %v2501 = vrcp.pop %v2500
    %v2502 = vmul.f32 %v2500, %v2501
    %v2503 = vsub.f32 1.0, %v2502
    %v2504 = vmul.f32 %v2501, %v2503
    %v2505 = vadd.f32 %v2501, %v2504
    %vm2506 = vweird.f32 %v2500
    %vm2507 = vweird.f32 %v2501
    %vm2508 = vmor %vm2506, %vm2507
    %v2509 = vsel %vm2508, %v2501, %v2505
    %v2510 = vand.u32 2147483647, %v2500
    %vm2511 = vcmp.eq.f32.partialorder %v2510, 8.507059e+37
    %v2512 = vand.u32 %v2500, 2147483648
    %v2513 = vor.u32 1.1754944e-38, %v2512
    %v2514 = vsel %vm2511, %v2513, %v2509
    %v2515 = vmul.f32 1.0, %v2514
    %v2516 = vsel %vm274, %v2496, %v2515
    %v2517 = vmul.f32 %v2516, %v2461
    %2519 = vrot.lane.b32.xlu0 %v2516, 64
    %v2520 = vpop.permute.xlu0 %2519
    %v2522 = vmul.f32 %v2516, %v2520
    %2524 = vrot.lane.b32.xlu0 %v2522, 32
    %v2525 = vpop.permute.xlu0 %2524
    %v2527 = vadd.f32 %v2517, %v2525
    %v2528 = vtanh.pop %v2527
    %2530 = vrot.lane.b32.xlu0 %v2528, 64
    %v2531 = vpop.permute.xlu0 %2530
    %v2533 = vmul.f32 %v2516, %v2531
    %2535 = vrot.lane.b32.xlu0 %v2533, 32
    %v2536 = vpop.permute.xlu0 %2535
    %2538 = vst.msk [vmem:[%s914] sm:$0x3] %vm445, %v2536
    %v2539 = vld [vmem:[#allocation2] sm:$0x3]
    %v2540 = vld [vmem:[#allocation2 + $0x2] sm:$0x3]
    %v2541 = vld [vmem:[#allocation2 + $0x4] sm:$0x3]
    %v2542 = vld [vmem:[#allocation2 + $0x6] sm:$0x3]
    %v2543 = vld [vmem:[#allocation2 + $0x8] sm:$0x3]
    %v2544 = vld [vmem:[#allocation2 + $0xa] sm:$0x3]
    %v2545 = vld [vmem:[#allocation2 + $0xc] sm:$0x3]
    %v2546 = vld [vmem:[#allocation2 + $0xe] sm:$0x3]
    %v2547 = vld [vmem:[#allocation11] sm:$0xff]
    %v2548 = vld [vmem:[#allocation11 + $0x8] sm:$0xff]
    %v2549 = vld [vmem:[#allocation11 + $0x10] sm:$0xff]
    %v2550 = vld [vmem:[#allocation11 + $0x18] sm:$0xff]
    %v2551 = vld [vmem:[%s12] sm:$0x1]
    %v2553 = vperm.slane %v2551, 0
    %2562 = vst [vmem:[#allocation1] ss:$4 sm:$0xff] %v2539
    %s2563 = scalar_lea.vmem [#allocation1], 1
    %2564 = vst [vmem:[%s2563] ss:$4 sm:$0xff] %v2540
    %s2565 = scalar_lea.vmem [#allocation1], 2
    %2566 = vst [vmem:[%s2565] ss:$4 sm:$0xff] %v2541
    %s2567 = scalar_lea.vmem [#allocation1], 3
    %2568 = vst [vmem:[%s2567] ss:$4 sm:$0xff] %v2542
    %s2569 = scalar_lea.vmem [#allocation1], 32
    %2570 = vst [vmem:[%s2569] ss:$4 sm:$0xff] %v2543
    %s2571 = scalar_lea.vmem [#allocation1], 33
    %2572 = vst [vmem:[%s2571] ss:$4 sm:$0xff] %v2544
    %s2573 = scalar_lea.vmem [#allocation1], 34
    %2574 = vst [vmem:[%s2573] ss:$4 sm:$0xff] %v2545
    %s2575 = scalar_lea.vmem [#allocation1], 35
    %2576 = vst [vmem:[%s2575] ss:$4 sm:$0xff] %v2546
    %v2577 = vld.sshfl [vmem:[#allocation1] sm:$0xff pattern:$0x73625140]
    %v2578 = vld.sshfl [vmem:[#allocation1 + $0x20] sm:$0xff pattern:$0x73625140]
    %2579 = vst [vmem:[#allocation1] ss:$4 sm:$0xff] %v2553
    %s2580 = scalar_lea.vmem [#allocation1], 1
    %2581 = vst [vmem:[%s2580] ss:$4 sm:$0xff] %v2553
    %s2582 = scalar_lea.vmem [#allocation1], 2
    %2583 = vst [vmem:[%s2582] ss:$4 sm:$0xff] %v2553
    %s2584 = scalar_lea.vmem [#allocation1], 3
    %2585 = vst [vmem:[%s2584] ss:$4 sm:$0xff] %v2553
    %s2586 = scalar_lea.vmem [#allocation1], 32
    %2587 = vst [vmem:[%s2586] ss:$4 sm:$0xff] %v2553
    %s2588 = scalar_lea.vmem [#allocation1], 33
    %2589 = vst [vmem:[%s2588] ss:$4 sm:$0xff] %v2553
    %s2590 = scalar_lea.vmem [#allocation1], 34
    %2591 = vst [vmem:[%s2590] ss:$4 sm:$0xff] %v2553
    %s2592 = scalar_lea.vmem [#allocation1], 35
    %2593 = vst [vmem:[%s2592] ss:$4 sm:$0xff] %v2553
    %v2594 = vld.sshfl [vmem:[#allocation1] sm:$0xff pattern:$0x73625140]
    %v2595 = vld.sshfl [vmem:[#allocation1 + $0x20] sm:$0xff pattern:$0x73625140]
    %v2598 = vsel %vm378, %v2577, 0
    %v2600 = vsel %vm378, %v2578, 0
    %2602 = vmatpush.msra.mxu0 0.0
    %2603 = vmatpush.msra.mxu0 0.0
    %2604 = vmatpush.msra.mxu0 0.0
    %2605 = vmatpush.msra.mxu0 0.0
    %2606 = vmatpush.msra.mxu0 0.0
    %2607 = vmatpush.msra.mxu0 0.0
    %2608 = vmatpush.msra.mxu0 0.0
    %2609 = vmatpush.msra.mxu0 0.0
    %2610 = vmatpush.msra.mxu0 0.0
    %2611 = vmatpush.msra.mxu0 0.0
    %2612 = vmatpush.msra.mxu0 0.0
    %2613 = vmatpush.msra.mxu0 0.0
    %2614 = vmatpush.msra.mxu0 %v2550
    %2615 = vmatpush.msra.mxu0 %v2549
    %2616 = vmatpush.msra.mxu0 %v2548
    %2617 = vmatpush.msra.mxu0 %v2547
    %2618 = vmatmul.f32.gmra.mxu0 %v2598
    %v2619 = vpop.f32.mrf.mxu0
    %v2620 = vadd.f32 %v2594, %v2619
    %2621 = vmatmul.f32.gmra.mxu0 %v2600
    %v2622 = vpop.f32.mrf.mxu0
    %v2623 = vadd.f32 %v2595, %v2622
    %2624 = vdwg.mxu0
    %v2627 = vrot.slane %v2620, 2
    %v2628 = vrot.slane %v2620, 4
    %v2629 = vrot.slane %v2620, 6
    %v2630 = vrot.slane %v2623, 2
    %v2631 = vrot.slane %v2623, 4
    %v2632 = vrot.slane %v2623, 6
    %v2639 = vld [vmem:[#allocation12] sm:$0xff]
    %v2640 = vld [vmem:[#allocation12 + $0x8] sm:$0xff]
    %v2641 = vld [vmem:[#allocation12 + $0x10] sm:$0xff]
    %v2642 = vld [vmem:[#allocation12 + $0x18] sm:$0xff]
    %v2643 = vsel %vm378, %v1543, 0
    %2645 = vmatpush.msra.mxu0 0.0
    %2646 = vmatpush.msra.mxu0 0.0
    %2647 = vmatpush.msra.mxu0 0.0
    %2648 = vmatpush.msra.mxu0 0.0
    %2649 = vmatpush.msra.mxu0 0.0
    %2650 = vmatpush.msra.mxu0 0.0
    %2651 = vmatpush.msra.mxu0 0.0
    %2652 = vmatpush.msra.mxu0 0.0
    %2653 = vmatpush.msra.mxu0 0.0
    %2654 = vmatpush.msra.mxu0 0.0
    %2655 = vmatpush.msra.mxu0 0.0
    %2656 = vmatpush.msra.mxu0 0.0
    %2657 = vmatpush.msra.mxu0 %v2642
    %2658 = vmatpush.msra.mxu0 %v2641
    %2659 = vmatpush.msra.mxu0 %v2640
    %2660 = vmatpush.msra.mxu0 %v2639
    %2661 = vmatmul.f32.gmra.mxu0 %v2643
    %v2662 = vpop.f32.mrf.mxu0
    %v2663 = vadd.f32 0.0, %v2662
    %2664 = vdwg.mxu0
    %v2665 = vadd.f32 %v2620, %v2663
    %v2666 = vtanh.pop %v2665
    %v2667 = vxor.u32 %v2665, 2147483648
    %v2668 = vmul.f32 %v2667, 1.442695
    %v2669 = vpow.pop %v2668
    %v2670 = vadd.f32 %v2669, 1.0
    %v2671 = vrcp.pop %v2670
    %v2672 = vmul.f32 %v2670, %v2671
    %v2673 = vsub.f32 1.0, %v2672
    %v2674 = vmul.f32 %v2671, %v2673
    %v2675 = vadd.f32 %v2671, %v2674
    %vm2676 = vweird.f32 %v2670
    %vm2677 = vweird.f32 %v2671
    %vm2678 = vmor %vm2676, %vm2677
    %v2679 = vsel %vm2678, %v2671, %v2675
    %v2680 = vand.u32 2147483647, %v2670
    %vm2681 = vcmp.eq.f32.partialorder %v2680, 8.507059e+37
    %v2682 = vand.u32 %v2670, 2147483648
    %v2683 = vor.u32 1.1754944e-38, %v2682
    %v2684 = vsel %vm2681, %v2683, %v2679
    %v2685 = vmul.f32 1.0, %v2684
    %v2686 = vsel %vm274, %v2666, %v2685
    %v2687 = vmul.f32 %v2686, %v1534
    %2689 = vrot.lane.b32.xlu0 %v2686, 64
    %v2690 = vpop.permute.xlu0 %2689
    %v2692 = vmul.f32 %v2686, %v2690
    %2694 = vrot.lane.b32.xlu0 %v2692, 32
    %v2695 = vpop.permute.xlu0 %2694
    %v2697 = vadd.f32 %v2687, %v2695
    %v2698 = vtanh.pop %v2697
    %2700 = vrot.lane.b32.xlu0 %v2698, 64
    %v2701 = vpop.permute.xlu0 %2700
    %v2703 = vmul.f32 %v2686, %v2701
    %2705 = vrot.lane.b32.xlu0 %v2703, 32
    %v2706 = vpop.permute.xlu0 %2705
    %v2707 = vsel %vm378, %v2706, 0
    %2709 = vmatpush.msra.mxu0 0.0
    %2710 = vmatpush.msra.mxu0 0.0
    %2711 = vmatpush.msra.mxu0 0.0
    %2712 = vmatpush.msra.mxu0 0.0
    %2713 = vmatpush.msra.mxu0 0.0
    %2714 = vmatpush.msra.mxu0 0.0
    %2715 = vmatpush.msra.mxu0 0.0
    %2716 = vmatpush.msra.mxu0 0.0
    %2717 = vmatpush.msra.mxu0 0.0
    %2718 = vmatpush.msra.mxu0 0.0
    %2719 = vmatpush.msra.mxu0 0.0
    %2720 = vmatpush.msra.mxu0 0.0
    %2721 = vmatpush.msra.mxu0 %v2642
    %2722 = vmatpush.msra.mxu0 %v2641
    %2723 = vmatpush.msra.mxu0 %v2640
    %2724 = vmatpush.msra.mxu0 %v2639
    %2725 = vmatmul.f32.gmra.mxu0 %v2707
    %v2726 = vpop.f32.mrf.mxu0
    %v2727 = vadd.f32 0.0, %v2726
    %2728 = vdwg.mxu0
    %v2729 = vadd.f32 %v2627, %v2727
    %v2730 = vtanh.pop %v2729
    %v2731 = vxor.u32 %v2729, 2147483648
    %v2732 = vmul.f32 %v2731, 1.442695
    %v2733 = vpow.pop %v2732
    %v2734 = vadd.f32 %v2733, 1.0
    %v2735 = vrcp.pop %v2734
    %v2736 = vmul.f32 %v2734, %v2735
    %v2737 = vsub.f32 1.0, %v2736
    %v2738 = vmul.f32 %v2735, %v2737
    %v2739 = vadd.f32 %v2735, %v2738
    %vm2740 = vweird.f32 %v2734
    %vm2741 = vweird.f32 %v2735
    %vm2742 = vmor %vm2740, %vm2741
    %v2743 = vsel %vm2742, %v2735, %v2739
    %v2744 = vand.u32 2147483647, %v2734
    %vm2745 = vcmp.eq.f32.partialorder %v2744, 8.507059e+37
    %v2746 = vand.u32 %v2734, 2147483648
    %v2747 = vor.u32 1.1754944e-38, %v2746
    %v2748 = vsel %vm2745, %v2747, %v2743
    %v2749 = vmul.f32 1.0, %v2748
    %v2750 = vsel %vm274, %v2730, %v2749
    %v2751 = vmul.f32 %v2750, %v2697
    %2753 = vrot.lane.b32.xlu0 %v2750, 64
    %v2754 = vpop.permute.xlu0 %2753
    %v2756 = vmul.f32 %v2750, %v2754
    %2758 = vrot.lane.b32.xlu0 %v2756, 32
    %v2759 = vpop.permute.xlu0 %2758
    %v2761 = vadd.f32 %v2751, %v2759
    %v2762 = vtanh.pop %v2761
    %2764 = vrot.lane.b32.xlu0 %v2762, 64
    %v2765 = vpop.permute.xlu0 %2764
    %v2767 = vmul.f32 %v2750, %v2765
    %2769 = vrot.lane.b32.xlu0 %v2767, 32
    %v2770 = vpop.permute.xlu0 %2769
    %v2771 = vsel %vm378, %v2770, 0
    %2773 = vmatpush.msra.mxu0 0.0
    %2774 = vmatpush.msra.mxu0 0.0
    %2775 = vmatpush.msra.mxu0 0.0
    %2776 = vmatpush.msra.mxu0 0.0
    %2777 = vmatpush.msra.mxu0 0.0
    %2778 = vmatpush.msra.mxu0 0.0
    %2779 = vmatpush.msra.mxu0 0.0
    %2780 = vmatpush.msra.mxu0 0.0
    %2781 = vmatpush.msra.mxu0 0.0
    %2782 = vmatpush.msra.mxu0 0.0
    %2783 = vmatpush.msra.mxu0 0.0
    %2784 = vmatpush.msra.mxu0 0.0
    %2785 = vmatpush.msra.mxu0 %v2642
    %2786 = vmatpush.msra.mxu0 %v2641
    %2787 = vmatpush.msra.mxu0 %v2640
    %2788 = vmatpush.msra.mxu0 %v2639
    %2789 = vmatmul.f32.gmra.mxu0 %v2771
    %v2790 = vpop.f32.mrf.mxu0
    %v2791 = vadd.f32 0.0, %v2790
    %2792 = vdwg.mxu0
    %v2793 = vadd.f32 %v2628, %v2791
    %v2794 = vtanh.pop %v2793
    %v2795 = vxor.u32 %v2793, 2147483648
    %v2796 = vmul.f32 %v2795, 1.442695
    %v2797 = vpow.pop %v2796
    %v2798 = vadd.f32 %v2797, 1.0
    %v2799 = vrcp.pop %v2798
    %v2800 = vmul.f32 %v2798, %v2799
    %v2801 = vsub.f32 1.0, %v2800
    %v2802 = vmul.f32 %v2799, %v2801
    %v2803 = vadd.f32 %v2799, %v2802
    %vm2804 = vweird.f32 %v2798
    %vm2805 = vweird.f32 %v2799
    %vm2806 = vmor %vm2804, %vm2805
    %v2807 = vsel %vm2806, %v2799, %v2803
    %v2808 = vand.u32 2147483647, %v2798
    %vm2809 = vcmp.eq.f32.partialorder %v2808, 8.507059e+37
    %v2810 = vand.u32 %v2798, 2147483648
    %v2811 = vor.u32 1.1754944e-38, %v2810
    %v2812 = vsel %vm2809, %v2811, %v2807
    %v2813 = vmul.f32 1.0, %v2812
    %v2814 = vsel %vm274, %v2794, %v2813
    %v2815 = vmul.f32 %v2814, %v2761
    %2817 = vrot.lane.b32.xlu0 %v2814, 64
    %v2818 = vpop.permute.xlu0 %2817
    %v2820 = vmul.f32 %v2814, %v2818
    %2822 = vrot.lane.b32.xlu0 %v2820, 32
    %v2823 = vpop.permute.xlu0 %2822
    %v2825 = vadd.f32 %v2815, %v2823
    %v2826 = vtanh.pop %v2825
    %2828 = vrot.lane.b32.xlu0 %v2826, 64
    %v2829 = vpop.permute.xlu0 %2828
    %v2831 = vmul.f32 %v2814, %v2829
    %2833 = vrot.lane.b32.xlu0 %v2831, 32
    %v2834 = vpop.permute.xlu0 %2833
    %v2835 = vsel %vm378, %v2834, 0
    %2837 = vmatpush.msra.mxu0 0.0
    %2838 = vmatpush.msra.mxu0 0.0
    %2839 = vmatpush.msra.mxu0 0.0
    %2840 = vmatpush.msra.mxu0 0.0
    %2841 = vmatpush.msra.mxu0 0.0
    %2842 = vmatpush.msra.mxu0 0.0
    %2843 = vmatpush.msra.mxu0 0.0
    %2844 = vmatpush.msra.mxu0 0.0
    %2845 = vmatpush.msra.mxu0 0.0
    %2846 = vmatpush.msra.mxu0 0.0
    %2847 = vmatpush.msra.mxu0 0.0
    %2848 = vmatpush.msra.mxu0 0.0
    %2849 = vmatpush.msra.mxu0 %v2642
    %2850 = vmatpush.msra.mxu0 %v2641
    %2851 = vmatpush.msra.mxu0 %v2640
    %2852 = vmatpush.msra.mxu0 %v2639
    %2853 = vmatmul.f32.gmra.mxu0 %v2835
    %v2854 = vpop.f32.mrf.mxu0
    %v2855 = vadd.f32 0.0, %v2854
    %2856 = vdwg.mxu0
    %v2857 = vadd.f32 %v2629, %v2855
    %v2858 = vtanh.pop %v2857
    %v2859 = vxor.u32 %v2857, 2147483648
    %v2860 = vmul.f32 %v2859, 1.442695
    %v2861 = vpow.pop %v2860
    %v2862 = vadd.f32 %v2861, 1.0
    %v2863 = vrcp.pop %v2862
    %v2864 = vmul.f32 %v2862, %v2863
    %v2865 = vsub.f32 1.0, %v2864
    %v2866 = vmul.f32 %v2863, %v2865
    %v2867 = vadd.f32 %v2863, %v2866
    %vm2868 = vweird.f32 %v2862
    %vm2869 = vweird.f32 %v2863
    %vm2870 = vmor %vm2868, %vm2869
    %v2871 = vsel %vm2870, %v2863, %v2867
    %v2872 = vand.u32 2147483647, %v2862
    %vm2873 = vcmp.eq.f32.partialorder %v2872, 8.507059e+37
    %v2874 = vand.u32 %v2862, 2147483648
    %v2875 = vor.u32 1.1754944e-38, %v2874
    %v2876 = vsel %vm2873, %v2875, %v2871
    %v2877 = vmul.f32 1.0, %v2876
    %v2878 = vsel %vm274, %v2858, %v2877
    %v2879 = vmul.f32 %v2878, %v2825
    %2881 = vrot.lane.b32.xlu0 %v2878, 64
    %v2882 = vpop.permute.xlu0 %2881
    %v2884 = vmul.f32 %v2878, %v2882
    %2886 = vrot.lane.b32.xlu0 %v2884, 32
    %v2887 = vpop.permute.xlu0 %2886
    %v2889 = vadd.f32 %v2879, %v2887
    %v2890 = vtanh.pop %v2889
    %2892 = vrot.lane.b32.xlu0 %v2890, 64
    %v2893 = vpop.permute.xlu0 %2892
    %v2895 = vmul.f32 %v2878, %v2893
    %2897 = vrot.lane.b32.xlu0 %v2895, 32
    %v2898 = vpop.permute.xlu0 %2897
    %v2899 = vsel %vm378, %v2898, 0
    %2901 = vmatpush.msra.mxu0 0.0
    %2902 = vmatpush.msra.mxu0 0.0
    %2903 = vmatpush.msra.mxu0 0.0
    %2904 = vmatpush.msra.mxu0 0.0
    %2905 = vmatpush.msra.mxu0 0.0
    %2906 = vmatpush.msra.mxu0 0.0
    %2907 = vmatpush.msra.mxu0 0.0
    %2908 = vmatpush.msra.mxu0 0.0
    %2909 = vmatpush.msra.mxu0 0.0
    %2910 = vmatpush.msra.mxu0 0.0
    %2911 = vmatpush.msra.mxu0 0.0
    %2912 = vmatpush.msra.mxu0 0.0
    %2913 = vmatpush.msra.mxu0 %v2642
    %2914 = vmatpush.msra.mxu0 %v2641
    %2915 = vmatpush.msra.mxu0 %v2640
    %2916 = vmatpush.msra.mxu0 %v2639
    %2917 = vmatmul.f32.gmra.mxu0 %v2899
    %v2918 = vpop.f32.mrf.mxu0
    %v2919 = vadd.f32 0.0, %v2918
    %2920 = vdwg.mxu0
    %v2921 = vadd.f32 %v2623, %v2919
    %v2922 = vtanh.pop %v2921
    %v2923 = vxor.u32 %v2921, 2147483648
    %v2924 = vmul.f32 %v2923, 1.442695
    %v2925 = vpow.pop %v2924
    %v2926 = vadd.f32 %v2925, 1.0
    %v2927 = vrcp.pop %v2926
    %v2928 = vmul.f32 %v2926, %v2927
    %v2929 = vsub.f32 1.0, %v2928
    %v2930 = vmul.f32 %v2927, %v2929
    %v2931 = vadd.f32 %v2927, %v2930
    %vm2932 = vweird.f32 %v2926
    %vm2933 = vweird.f32 %v2927
    %vm2934 = vmor %vm2932, %vm2933
    %v2935 = vsel %vm2934, %v2927, %v2931
    %v2936 = vand.u32 2147483647, %v2926
    %vm2937 = vcmp.eq.f32.partialorder %v2936, 8.507059e+37
    %v2938 = vand.u32 %v2926, 2147483648
    %v2939 = vor.u32 1.1754944e-38, %v2938
    %v2940 = vsel %vm2937, %v2939, %v2935
    %v2941 = vmul.f32 1.0, %v2940
    %v2942 = vsel %vm274, %v2922, %v2941
    %v2943 = vmul.f32 %v2942, %v2889
    %2945 = vrot.lane.b32.xlu0 %v2942, 64
    %v2946 = vpop.permute.xlu0 %2945
    %v2948 = vmul.f32 %v2942, %v2946
    %2950 = vrot.lane.b32.xlu0 %v2948, 32
    %v2951 = vpop.permute.xlu0 %2950
    %v2953 = vadd.f32 %v2943, %v2951
    %v2954 = vtanh.pop %v2953
    %2956 = vrot.lane.b32.xlu0 %v2954, 64
    %v2957 = vpop.permute.xlu0 %2956
    %v2959 = vmul.f32 %v2942, %v2957
    %2961 = vrot.lane.b32.xlu0 %v2959, 32
    %v2962 = vpop.permute.xlu0 %2961
    %v2963 = vsel %vm378, %v2962, 0
    %2965 = vmatpush.msra.mxu0 0.0
    %2966 = vmatpush.msra.mxu0 0.0
    %2967 = vmatpush.msra.mxu0 0.0
    %2968 = vmatpush.msra.mxu0 0.0
    %2969 = vmatpush.msra.mxu0 0.0
    %2970 = vmatpush.msra.mxu0 0.0
    %2971 = vmatpush.msra.mxu0 0.0
    %2972 = vmatpush.msra.mxu0 0.0
    %2973 = vmatpush.msra.mxu0 0.0
    %2974 = vmatpush.msra.mxu0 0.0
    %2975 = vmatpush.msra.mxu0 0.0
    %2976 = vmatpush.msra.mxu0 0.0
    %2977 = vmatpush.msra.mxu0 %v2642
    %2978 = vmatpush.msra.mxu0 %v2641
    %2979 = vmatpush.msra.mxu0 %v2640
    %2980 = vmatpush.msra.mxu0 %v2639
    %2981 = vmatmul.f32.gmra.mxu0 %v2963
    %v2982 = vpop.f32.mrf.mxu0
    %v2983 = vadd.f32 0.0, %v2982
    %2984 = vdwg.mxu0
    %v2985 = vadd.f32 %v2630, %v2983
    %v2986 = vtanh.pop %v2985
    %v2987 = vxor.u32 %v2985, 2147483648
    %v2988 = vmul.f32 %v2987, 1.442695
    %v2989 = vpow.pop %v2988
    %v2990 = vadd.f32 %v2989, 1.0
    %v2991 = vrcp.pop %v2990
    %v2992 = vmul.f32 %v2990, %v2991
    %v2993 = vsub.f32 1.0, %v2992
    %v2994 = vmul.f32 %v2991, %v2993
    %v2995 = vadd.f32 %v2991, %v2994
    %vm2996 = vweird.f32 %v2990
    %vm2997 = vweird.f32 %v2991
    %vm2998 = vmor %vm2996, %vm2997
    %v2999 = vsel %vm2998, %v2991, %v2995
    %v3000 = vand.u32 2147483647, %v2990
    %vm3001 = vcmp.eq.f32.partialorder %v3000, 8.507059e+37
    %v3002 = vand.u32 %v2990, 2147483648
    %v3003 = vor.u32 1.1754944e-38, %v3002
    %v3004 = vsel %vm3001, %v3003, %v2999
    %v3005 = vmul.f32 1.0, %v3004
    %v3006 = vsel %vm274, %v2986, %v3005
    %v3007 = vmul.f32 %v3006, %v2953
    %3009 = vrot.lane.b32.xlu0 %v3006, 64
    %v3010 = vpop.permute.xlu0 %3009
    %v3012 = vmul.f32 %v3006, %v3010
    %3014 = vrot.lane.b32.xlu0 %v3012, 32
    %v3015 = vpop.permute.xlu0 %3014
    %v3017 = vadd.f32 %v3007, %v3015
    %v3018 = vtanh.pop %v3017
    %3020 = vrot.lane.b32.xlu0 %v3018, 64
    %v3021 = vpop.permute.xlu0 %3020
    %v3023 = vmul.f32 %v3006, %v3021
    %3025 = vrot.lane.b32.xlu0 %v3023, 32
    %v3026 = vpop.permute.xlu0 %3025
    %v3027 = vsel %vm378, %v3026, 0
    %3029 = vmatpush.msra.mxu0 0.0
    %3030 = vmatpush.msra.mxu0 0.0
    %3031 = vmatpush.msra.mxu0 0.0
    %3032 = vmatpush.msra.mxu0 0.0
    %3033 = vmatpush.msra.mxu0 0.0
    %3034 = vmatpush.msra.mxu0 0.0
    %3035 = vmatpush.msra.mxu0 0.0
    %3036 = vmatpush.msra.mxu0 0.0
    %3037 = vmatpush.msra.mxu0 0.0
    %3038 = vmatpush.msra.mxu0 0.0
    %3039 = vmatpush.msra.mxu0 0.0
    %3040 = vmatpush.msra.mxu0 0.0
    %3041 = vmatpush.msra.mxu0 %v2642
    %3042 = vmatpush.msra.mxu0 %v2641
    %3043 = vmatpush.msra.mxu0 %v2640
    %3044 = vmatpush.msra.mxu0 %v2639
    %3045 = vmatmul.f32.gmra.mxu0 %v3027
    %v3046 = vpop.f32.mrf.mxu0
    %v3047 = vadd.f32 0.0, %v3046
    %3048 = vdwg.mxu0
    %v3049 = vadd.f32 %v2631, %v3047
    %v3050 = vtanh.pop %v3049
    %v3051 = vxor.u32 %v3049, 2147483648
    %v3052 = vmul.f32 %v3051, 1.442695
    %v3053 = vpow.pop %v3052
    %v3054 = vadd.f32 %v3053, 1.0
    %v3055 = vrcp.pop %v3054
    %v3056 = vmul.f32 %v3054, %v3055
    %v3057 = vsub.f32 1.0, %v3056
    %v3058 = vmul.f32 %v3055, %v3057
    %v3059 = vadd.f32 %v3055, %v3058
    %vm3060 = vweird.f32 %v3054
    %vm3061 = vweird.f32 %v3055
    %vm3062 = vmor %vm3060, %vm3061
    %v3063 = vsel %vm3062, %v3055, %v3059
    %v3064 = vand.u32 2147483647, %v3054
    %vm3065 = vcmp.eq.f32.partialorder %v3064, 8.507059e+37
    %v3066 = vand.u32 %v3054, 2147483648
    %v3067 = vor.u32 1.1754944e-38, %v3066
    %v3068 = vsel %vm3065, %v3067, %v3063
    %v3069 = vmul.f32 1.0, %v3068
    %v3070 = vsel %vm274, %v3050, %v3069
    %v3071 = vmul.f32 %v3070, %v3017
    %3073 = vrot.lane.b32.xlu0 %v3070, 64
    %v3074 = vpop.permute.xlu0 %3073
    %v3076 = vmul.f32 %v3070, %v3074
    %3078 = vrot.lane.b32.xlu0 %v3076, 32
    %v3079 = vpop.permute.xlu0 %3078
    %v3081 = vadd.f32 %v3071, %v3079
    %v3082 = vtanh.pop %v3081
    %3084 = vrot.lane.b32.xlu0 %v3082, 64
    %v3085 = vpop.permute.xlu0 %3084
    %v3087 = vmul.f32 %v3070, %v3085
    %3089 = vrot.lane.b32.xlu0 %v3087, 32
    %v3090 = vpop.permute.xlu0 %3089
    %v3091 = vsel %vm378, %v3090, 0
    %3093 = vmatpush.msra.mxu0 0.0
    %3094 = vmatpush.msra.mxu0 0.0
    %3095 = vmatpush.msra.mxu0 0.0
    %3096 = vmatpush.msra.mxu0 0.0
    %3097 = vmatpush.msra.mxu0 0.0
    %3098 = vmatpush.msra.mxu0 0.0
    %3099 = vmatpush.msra.mxu0 0.0
    %3100 = vmatpush.msra.mxu0 0.0
    %3101 = vmatpush.msra.mxu0 0.0
    %3102 = vmatpush.msra.mxu0 0.0
    %3103 = vmatpush.msra.mxu0 0.0
    %3104 = vmatpush.msra.mxu0 0.0
    %3105 = vmatpush.msra.mxu0 %v2642
    %3106 = vmatpush.msra.mxu0 %v2641
    %3107 = vmatpush.msra.mxu0 %v2640
    %3108 = vmatpush.msra.mxu0 %v2639
    %3109 = vmatmul.f32.gmra.mxu0 %v3091
    %v3110 = vpop.f32.mrf.mxu0
    %v3111 = vadd.f32 0.0, %v3110
    %3112 = vdwg.mxu0
    %v3113 = vadd.f32 %v2632, %v3111
    %v3114 = vtanh.pop %v3113
    %v3115 = vxor.u32 %v3113, 2147483648
    %v3116 = vmul.f32 %v3115, 1.442695
    %v3117 = vpow.pop %v3116
    %v3118 = vadd.f32 %v3117, 1.0
    %v3119 = vrcp.pop %v3118
    %v3120 = vmul.f32 %v3118, %v3119
    %v3121 = vsub.f32 1.0, %v3120
    %v3122 = vmul.f32 %v3119, %v3121
    %v3123 = vadd.f32 %v3119, %v3122
    %vm3124 = vweird.f32 %v3118
    %vm3125 = vweird.f32 %v3119
    %vm3126 = vmor %vm3124, %vm3125
    %v3127 = vsel %vm3126, %v3119, %v3123
    %v3128 = vand.u32 2147483647, %v3118
    %vm3129 = vcmp.eq.f32.partialorder %v3128, 8.507059e+37
    %v3130 = vand.u32 %v3118, 2147483648
    %v3131 = vor.u32 1.1754944e-38, %v3130
    %v3132 = vsel %vm3129, %v3131, %v3127
    %v3133 = vmul.f32 1.0, %v3132
    %v3134 = vsel %vm274, %v3114, %v3133
    %v3135 = vmul.f32 %v3134, %v3081
    %3137 = vrot.lane.b32.xlu0 %v3134, 64
    %v3138 = vpop.permute.xlu0 %3137
    %v3140 = vmul.f32 %v3134, %v3138
    %3142 = vrot.lane.b32.xlu0 %v3140, 32
    %v3143 = vpop.permute.xlu0 %3142
    %v3145 = vadd.f32 %v3135, %v3143
    %v3146 = vtanh.pop %v3145
    %3148 = vrot.lane.b32.xlu0 %v3146, 64
    %v3149 = vpop.permute.xlu0 %3148
    %v3151 = vmul.f32 %v3134, %v3149
    %v3152 = vld [vmem:[#allocation20] sm:$0xff]
    %v3153 = vld [vmem:[#allocation20 + $0x8] sm:$0xff]
    %v3154 = vld [vmem:[#allocation20 + $0x10] sm:$0xff]
    %v3155 = vld [vmem:[#allocation20 + $0x18] sm:$0xff]
    %v3156 = vld [vmem:[%s18] sm:$0x1]
    %v3158 = vperm.slane %v3156, 0
    %3161 = vrot.lane.b32.xlu0 %v3151, 32
    %v3162 = vpop.permute.xlu0 %3161
    %v3163 = vsel %vm378, %v3162, 0
    %3165 = vmatpush.msra.mxu0 0.0
    %3166 = vmatpush.msra.mxu0 0.0
    %3167 = vmatpush.msra.mxu0 0.0
    %3168 = vmatpush.msra.mxu0 0.0
    %3169 = vmatpush.msra.mxu0 0.0
    %3170 = vmatpush.msra.mxu0 0.0
    %3171 = vmatpush.msra.mxu0 0.0
    %3172 = vmatpush.msra.mxu0 0.0
    %3173 = vmatpush.msra.mxu0 0.0
    %3174 = vmatpush.msra.mxu0 0.0
    %3175 = vmatpush.msra.mxu0 0.0
    %3176 = vmatpush.msra.mxu0 0.0
    %3177 = vmatpush.msra.mxu0 %v3155
    %3178 = vmatpush.msra.mxu0 %v3154
    %3179 = vmatpush.msra.mxu0 %v3153
    %3180 = vmatpush.msra.mxu0 %v3152
    %3181 = vmatmul.f32.gmra.mxu0 %v3163
    %v3182 = vpop.f32.mrf.mxu0
    %v3183 = vadd.f32 %v3158, %v3182
    %3184 = vdwg.mxu0
    %v3185 = vld [vmem:[%s19] sm:$0x1]
    %v3187 = vperm.slane %v3185, 0
    %v3189 = vmul.f32 %v3183, %v3187
    %v3190 = vld [vmem:[%s20] sm:$0x1]
    %v3192 = vperm.slane %v3190, 0
    %v3194 = vadd.f32 %v3189, %v3192
    %v3195 = vmax.f32 %v3194, 0.0
    %v3196 = vld [vmem:[#allocation21] sm:$0xff]
    %v3197 = vld [vmem:[#allocation21 + $0x8] sm:$0xff]
    %v3198 = vld [vmem:[#allocation21 + $0x10] sm:$0xff]
    %v3199 = vld [vmem:[#allocation21 + $0x18] sm:$0xff]
    %v3200 = vld [vmem:[%s22] sm:$0x1]
    %v3202 = vperm.slane %v3200, 0
    %v3205 = vsel %vm378, %v3195, 0
    %3207 = vmatpush.msra.mxu0 0.0
    %3208 = vmatpush.msra.mxu0 0.0
    %3209 = vmatpush.msra.mxu0 0.0
    %3210 = vmatpush.msra.mxu0 0.0
    %3211 = vmatpush.msra.mxu0 0.0
    %3212 = vmatpush.msra.mxu0 0.0
    %3213 = vmatpush.msra.mxu0 0.0
    %3214 = vmatpush.msra.mxu0 0.0
    %3215 = vmatpush.msra.mxu0 0.0
    %3216 = vmatpush.msra.mxu0 0.0
    %3217 = vmatpush.msra.mxu0 0.0
    %3218 = vmatpush.msra.mxu0 0.0
    %3219 = vmatpush.msra.mxu0 %v3199
    %3220 = vmatpush.msra.mxu0 %v3198
    %3221 = vmatpush.msra.mxu0 %v3197
    %3222 = vmatpush.msra.mxu0 %v3196
    %3223 = vmatmul.f32.gmra.mxu0 %v3205
    %v3224 = vpop.f32.mrf.mxu0
    %v3225 = vadd.f32 %v3202, %v3224
    %3226 = vdwg.mxu0
    %v3227 = vld [vmem:[%s23] sm:$0x1]
    %v3229 = vperm.slane %v3227, 0
    %v3231 = vmul.f32 %v3225, %v3229
    %v3232 = vld [vmem:[%s24] sm:$0x1]
    %v3234 = vperm.slane %v3232, 0
    %v3236 = vadd.f32 %v3231, %v3234
    %v3237 = vmax.f32 %v3236, 0.0
    %v3238 = vld [vmem:[%s25] sm:$0xff]
    %v3239 = vld [vmem:[%s25 + $0x8] sm:$0xff]
    %v3240 = vld [vmem:[%s25 + $0x10] sm:$0xff]
    %v3241 = vld [vmem:[%s25 + $0x18] sm:$0xff]
    %v3242 = vld [vmem:[%s26] sm:$0x1]
    %v3244 = vperm.slane %v3242, 0
    %v3247 = vsel %vm378, %v3237, 0
    %3249 = vmatpush.msra.mxu0 0.0
    %3250 = vmatpush.msra.mxu0 0.0
    %3251 = vmatpush.msra.mxu0 0.0
    %3252 = vmatpush.msra.mxu0 0.0
    %3253 = vmatpush.msra.mxu0 0.0
    %3254 = vmatpush.msra.mxu0 0.0
    %3255 = vmatpush.msra.mxu0 0.0
    %3256 = vmatpush.msra.mxu0 0.0
    %3257 = vmatpush.msra.mxu0 0.0
    %3258 = vmatpush.msra.mxu0 0.0
    %3259 = vmatpush.msra.mxu0 0.0
    %3260 = vmatpush.msra.mxu0 0.0
    %3261 = vmatpush.msra.mxu0 %v3241
    %3262 = vmatpush.msra.mxu0 %v3240
    %3263 = vmatpush.msra.mxu0 %v3239
    %3264 = vmatpush.msra.mxu0 %v3238
    %3265 = vmatmul.f32.gmra.mxu0 %v3247
    %v3266 = vpop.f32.mrf.mxu0
    %v3267 = vadd.f32 %v3244, %v3266
    %3268 = vdwg.mxu0
    %vm3269 = vcmask 58368
    %3270 = vst.msk [vmem:[#allocation23] sm:$0x3] %vm3269, %v3267
    // Predicated region
    $region158: #{_lambda_.1} parent=1 // pred_check
      _
    $region159: #{_lambda_.1} parent=1 // pred_check_branch
      %3272 = sbr.rel (0) target = $region161
    $region160: #{_lambda_.1} parent=1 // pred_region
      %3274 = vsyncadd [#allocation5], 0
      %s3276 = sshll.u32 [#allocation23], 4
      %s3277 = int_to_ptr.vmem [resolvable:$true] %s3276
      %s3278 = sshll.u32 %s27, 4
      %s3279 = int_to_ptr.hbm [resolvable:$true] %s3278
      %3281 = dma.vmem_to_hbm [thread:$0]  %s3277, 32, %s3279, [#allocation5]
    $region161: #{_lambda_.1} parent=1 // pred_fallthru
      _
    // Predicated region
    $region162: #{_lambda_.1} parent=1 // pred_check
      _
    $region163: #{_lambda_.1} parent=1 // pred_check_branch
      %3283 = sbr.rel (0) target = $region165
    $region164: #{_lambda_.1} parent=1 // pred_region
      %3285 = dma.done [#allocation5], 32
    $region165: #{_lambda_.1} parent=1 // pred_fallthru
      _
    %3286 = vsyncpa [#allocation4], 1
    %3287 = vsyncpa [#allocation7], 1
    %3288 = vsyncpa [#allocation10], 1
    %3289 = vsyncpa [#allocation13], 1
    %3290 = vsyncpa [#allocation16], 1
    %3291 = vsyncpa [#allocation19], 1
    %3292 = vsyncpa [#allocation22], 1
    %3293 = vsyncpa [#allocation5], 1

</llo_original>
